<compile_context>
chip_gen: v5e
topology: v5e:2x2
jax: 0.10.0
libtpu: 0.0.40
codegen_flags: <defaults>
</compile_context>

<pallas_src>
import jax
import jax.numpy as jnp
from jax.experimental import pallas as pl
from jax.experimental.pallas import tpu as pltpu


def _round_up(x: int, m: int) -> int:
    return (x + m - 1) // m * m


def gcn_kernel(a_ref, x_ref, w_ref, o_ref):
    """One (tm, tn) output tile, accumulated over the k (neighbor) axis.

    a_ref : (tm, tk) int8  adjacency tile (0/1)
    x_ref : (tk, tn) bf16  feature tile
    w_ref : (tm, tn) f32   weight tile (resident across k)
    o_ref : (tm, tn) f32   output tile (resident across k; used as accumulator)
    """
    k = pl.program_id(2)

    @pl.when(k == 0)
    def _init():
        o_ref[...] = jnp.zeros_like(o_ref)

    # int8 -> bf16 cast on the VPU (hidden under the A DMA, we are mem-bound),
    # then bf16 MXU matmul with f32 accumulation directly into the resident
    # output block.
    o_ref[...] += jnp.dot(
        a_ref[...].astype(jnp.bfloat16),
        x_ref[...],
        preferred_element_type=jnp.float32,
    )

    # Fused elementwise weight scale only on the last reduction step (VPU, f32).
    @pl.when(k == pl.num_programs(2) - 1)
    def _finalize():
        o_ref[...] = o_ref[...] * w_ref[...]


def _prep(arr, rows, cols, dtype):
    """Pad (with zeros) and cast only when actually needed (avoids an extra
    full HBM pass when the caller already provides aligned / int8 data)."""
    pr, pc = rows - arr.shape[0], cols - arr.shape[1]
    if pr or pc:
        arr = jnp.pad(arr, ((0, pr), (0, pc)))
    if arr.dtype != dtype:
        arr = arr.astype(dtype)
    return arr


def gcn_forward(adj, x, weight, *, tm=512, tn=None, tk=1024,
                vmem_budget_bytes=40 * 1024 * 1024):
    """out = (adj @ x) * weight, computed with a tiled Pallas TPU kernel.

    adj is expected (but not required) to already be int8 0/1; any other dtype
    is converted once in the wrapper.
    """
    N, F = x.shape
    assert adj.shape == (N, N)
    assert weight.shape == (N, F)

    # --- tile selection -----------------------------------------------------
    # Sublane dims aligned to 32 (int8 packs 4/sublane), lane dims to 128.
    f_pad = _round_up(F, 128)
    tn = f_pad if tn is None else min(_round_up(tn, 128), f_pad)
    tk = min(_round_up(tk, 128), _round_up(N, 128))
    tm = min(_round_up(tm, 32), _round_up(N, 32))

    # Keep >= 2 blocks on the parallel i axis so both v7x TensorCores get work.
    if _round_up(N, tm) // tm < 2 and tm > 32:
        tm = _round_up(max(-(-N // 2), 32), 32)

    # Shrink tiles until the double-buffered working set fits the VMEM budget
    # (budget chosen to be safe against v7x's 64 MiB physical VMEM).
    def _fits(tm_, tn_, tk_):
        a_b = 2 * tm_ * tk_ * 1          # int8 A, double-buffered
        x_b = 2 * tk_ * tn_ * 2          # bf16 X, double-buffered
        w_b = 2 * tm_ * tn_ * 4          # f32 W
        o_b = 2 * tm_ * tn_ * 4          # f32 O (resident accumulator)
        return a_b + x_b + w_b + o_b <= vmem_budget_bytes

    while not _fits(tm, tn, tk) and tn > 128:
        tn = _round_up(tn // 2, 128)
    while not _fits(tm, tn, tk) and tk > 128:
        tk = _round_up(tk // 2, 128)
    while not _fits(tm, tn, tk) and tm > 32:
        tm = _round_up(tm // 2, 32)

    n_rows = _round_up(N, tm)        # output rows / A rows
    n_red = _round_up(N, tk)         # reduction (neighbor) dimension
    f_tot = _round_up(f_pad, tn)     # lane-dense output width

    # --- operand prep (no extra pass when already int8 & aligned) ------------
    adj_p = _prep(adj, n_rows, n_red, jnp.int8)
    x_p = _prep(x, n_red, f_tot, jnp.bfloat16)
    w_p = _prep(weight, n_rows, f_tot, jnp.float32)

    grid = (n_rows // tm, f_tot // tn, n_red // tk)
    n_i, n_j, _ = grid

    # Honest advisory cost: A is re-read once per j block, X once per i block.
    cost = pl.CostEstimate(
        flops=2 * n_rows * n_red * f_tot,
        transcendentals=0,
        bytes_accessed=(n_j * n_rows * n_red * 1        # A (int8)
                        + n_i * n_red * f_tot * 2       # X (bf16)
                        + n_rows * f_tot * 4            # W
                        + n_rows * f_tot * 4),          # O
    )

    out = pl.pallas_call(
        gcn_kernel,
        out_shape=jax.ShapeDtypeStruct((n_rows, f_tot), jnp.float32),
        grid_spec=pltpu.PrefetchScalarGridSpec(
            num_scalar_prefetch=0,
            grid=grid,
            in_specs=[
                pl.BlockSpec((tm, tk), lambda i, j, k: (i, k)),   # A tile (int8)
                pl.BlockSpec((tk, tn), lambda i, j, k: (k, j)),   # X tile (bf16)
                pl.BlockSpec((tm, tn), lambda i, j, k: (i, j)),   # W (k-invariant)
            ],
            out_specs=pl.BlockSpec((tm, tn), lambda i, j, k: (i, j)),
        ),
        compiler_params=pltpu.CompilerParams(
            dimension_semantics=("parallel", "parallel", "arbitrary"),
            vmem_limit_bytes=48 * 1024 * 1024,
        ),
        cost_estimate=cost,
    )(adj_p, x_p, w_p)

    return out[:N, :F]


if __name__ == "__main__":
    key = jax.random.PRNGKey(0)
    k_adj, k_x, k_w, k_adj2, k_x2, k_w2 = jax.random.split(key, 6)

    # ---- main case: aligned N, no wrapper pad/cast pass over A --------------
    N, F = 1024, 96   # N == in_feats of the module weight, F == out_feats

    # Graph held in its natural 0/1 form as int8 (sparse-ish + self loops).
    adj = (jax.random.uniform(k_adj, (N, N)) < 0.05).astype(jnp.int8)
    adj = jnp.maximum(adj, jnp.eye(N, dtype=jnp.int8))

    x = jax.random.uniform(k_x, (N, F), dtype=jnp.float32)
    weight = jax.random.uniform(k_w, (N, F), dtype=jnp.float32)

    # Pure-JAX reference with the same bf16 operand rounding / f32 accumulation
    # as the MXU path inside the kernel (adjacency 0/1 is exact in bf16).
    ref = jnp.dot(adj.astype(jnp.bfloat16), x.astype(jnp.bfloat16),
                  preferred_element_type=jnp.float32) * weight

    # Default tiles: grid (2, 1, 1) — single-pass A streaming, two parallel
    # row blocks so both v7x TensorCores are used.
    out = jax.block_until_ready(gcn_forward(adj, x, weight))
    assert out.shape == (N, F)
    assert jnp.allclose(out, ref, atol=1e-3, rtol=1e-3), "mismatch (default tiles)"

    # Smaller tiles: grid (4, 1, 2) — exercises k-axis accumulation directly
    # into the VMEM-resident output block.
    out2 = jax.block_until_ready(gcn_forward(adj, x, weight, tm=256, tk=512))
    assert jnp.allclose(out2, ref, atol=1e-3, rtol=1e-3), "mismatch (small tiles)"

    # ---- unaligned small case: exercises padding in all three dims ----------
    Ns, Fs = 200, 40
    adj_s = (jax.random.uniform(k_adj2, (Ns, Ns)) < 0.1).astype(jnp.int8)
    adj_s = jnp.maximum(adj_s, jnp.eye(Ns, dtype=jnp.int8))
    x_s = jax.random.uniform(k_x2, (Ns, Fs), dtype=jnp.float32)
    w_s = jax.random.uniform(k_w2, (Ns, Fs), dtype=jnp.float32)

    ref_s = jnp.dot(adj_s.astype(jnp.bfloat16), x_s.astype(jnp.bfloat16),
                    preferred_element_type=jnp.float32) * w_s
    out_s = jax.block_until_ready(gcn_forward(adj_s, x_s, w_s))
    assert out_s.shape == (Ns, Fs)
    assert jnp.allclose(out_s, ref_s, atol=1e-3, rtol=1e-3), "mismatch (padded case)"

    print("KERNEL_OK")
</pallas_src>

<mosaic_0001>
module attributes {stable_mosaic.version = 11 : i64} {
  func.func @gcn_kernel(%arg0: i32, %arg1: i32, %arg2: i32, %arg3: memref<512x1024xi8, #tpu.memory_space<vmem>>, %arg4: memref<1024x128xbf16, #tpu.memory_space<vmem>>, %arg5: memref<512x128xf32, #tpu.memory_space<vmem>>, %arg6: memref<512x128xf32, #tpu.memory_space<vmem>>) attributes {dimension_semantics = [#tpu.dimension_semantics<parallel>, #tpu.dimension_semantics<parallel>, #tpu.dimension_semantics<arbitrary>], iteration_bounds = array<i64: 2, 1, 1>, scalar_prefetch = 0 : i64, scratch_operands = 0 : i64, tpu.core_type = #tpu.core_type<tc>, window_params = [{transform_indices = @transform_0, window_bounds = array<i64: 512, 1024>}, {transform_indices = @transform_1, window_bounds = array<i64: 1024, 128>}, {transform_indices = @transform_2, window_bounds = array<i64: 512, 128>}, {transform_indices = @transform_3, window_bounds = array<i64: 512, 128>}]} {
    %c0_i32 = arith.constant 0 : i32
    %0 = arith.cmpi eq, %arg2, %c0_i32 : i32
    %1 = arith.extui %0 : i1 to i32
    %c0_i32_0 = arith.constant 0 : i32
    %2 = arith.cmpi ne, %1, %c0_i32_0 : i32
    scf.if %2 {
      %cst_10 = arith.constant 0.000000e+00 : f32
      %13 = vector.broadcast %cst_10 : f32 to vector<512x128xf32>
      %c0_11 = arith.constant 0 : index
      %c0_12 = arith.constant 0 : index
      %14 = vector.load %arg6[%c0_11, %c0_12] : memref<512x128xf32, #tpu.memory_space<vmem>>, vector<512x128xf32>
      tpu.vector_store %arg6[%c0_11, %c0_12], %13 {strides = array<i32>} : memref<512x128xf32, #tpu.memory_space<vmem>>, vector<512x128xf32>,
    } else {
    }
    %c0 = arith.constant 0 : index
    %c0_1 = arith.constant 0 : index
    %3 = vector.load %arg6[%c0, %c0_1] : memref<512x128xf32, #tpu.memory_space<vmem>>, vector<512x128xf32>
    %c0_2 = arith.constant 0 : index
    %c0_3 = arith.constant 0 : index
    %4 = vector.load %arg3[%c0_2, %c0_3] : memref<512x1024xi8, #tpu.memory_space<vmem>>, vector<512x1024xi8>
    %5 = arith.sitofp %4 : vector<512x1024xi8> to vector<512x1024xbf16>
    %c0_4 = arith.constant 0 : index
    %c0_5 = arith.constant 0 : index
    %6 = vector.load %arg4[%c0_4, %c0_5] : memref<1024x128xbf16, #tpu.memory_space<vmem>>, vector<1024x128xbf16>
    %cst = arith.constant dense<0.000000e+00> : vector<512x128xf32>
    %7 = tpu.matmul %5, %6, %cst {dimension_numbers = #tpu.dot_dimension_numbers<[1], [0], [0], [1], [0, 0, 1, 1], [], []>} : vector<512x1024xbf16>, vector<1024x128xbf16>, vector<512x128xf32> -> vector<512x128xf32>
    %8 = arith.addf %3, %7 : vector<512x128xf32>
    %c0_6 = arith.constant 0 : index
    %c0_7 = arith.constant 0 : index
    %9 = vector.load %arg6[%c0_6, %c0_7] : memref<512x128xf32, #tpu.memory_space<vmem>>, vector<512x128xf32>
    tpu.vector_store %arg6[%c0_6, %c0_7], %8 {strides = array<i32>} : memref<512x128xf32, #tpu.memory_space<vmem>>, vector<512x128xf32>,
    %c0_i32_8 = arith.constant 0 : i32
    %10 = arith.cmpi eq, %arg2, %c0_i32_8 : i32
    %11 = arith.extui %10 : i1 to i32
    %c0_i32_9 = arith.constant 0 : i32
    %12 = arith.cmpi ne, %11, %c0_i32_9 : i32
    scf.if %12 {
      %c0_10 = arith.constant 0 : index
      %c0_11 = arith.constant 0 : index
      %13 = vector.load %arg6[%c0_10, %c0_11] : memref<512x128xf32, #tpu.memory_space<vmem>>, vector<512x128xf32>
      %c0_12 = arith.constant 0 : index
      %c0_13 = arith.constant 0 : index
      %14 = vector.load %arg5[%c0_12, %c0_13] : memref<512x128xf32, #tpu.memory_space<vmem>>, vector<512x128xf32>
      %15 = arith.mulf %13, %14 : vector<512x128xf32>
      %c0_14 = arith.constant 0 : index
      %c0_15 = arith.constant 0 : index
      %16 = vector.load %arg6[%c0_14, %c0_15] : memref<512x128xf32, #tpu.memory_space<vmem>>, vector<512x128xf32>
      tpu.vector_store %arg6[%c0_14, %c0_15], %15 {strides = array<i32>} : memref<512x128xf32, #tpu.memory_space<vmem>>, vector<512x128xf32>,
    } else {
    }
    return
  }
  func.func @transform_0(%arg0: i32, %arg1: i32, %arg2: i32) -> (i32, i32) {
    %c0_i32 = arith.constant 0 : i32
    return %arg0, %arg2 : i32, i32
  }
  func.func @transform_1(%arg0: i32, %arg1: i32, %arg2: i32) -> (i32, i32) {
    %c0_i32 = arith.constant 0 : i32
    return %arg2, %arg1 : i32, i32
  }
  func.func @transform_2(%arg0: i32, %arg1: i32, %arg2: i32) -> (i32, i32) {
    %c0_i32 = arith.constant 0 : i32
    return %arg0, %arg1 : i32, i32
  }
  func.func @transform_3(%arg0: i32, %arg1: i32, %arg2: i32) -> (i32, i32) {
    %c0_i32 = arith.constant 0 : i32
    return %arg0, %arg1 : i32, i32
  }
}

</mosaic_0001>

<llo_original>
// kernel: tpu_custom_call.1
$region0: #{tpu_custom_call.1}
  #allocation0 [shape = 'u32[]', space=smem, size = 0x4, offset = 0x4, fixed_abs, tag = 'smem constant byte address 0x4 - core index']
  #allocation1 [shape = 'u32[72,128]{1,0:T(1,128)}', space=vmem, size = 0x9000, scoped, tag = 'internal scratch']
  %s0 = inlined_call_operand.hbm [shape: s8[1024,1024], index: 0, kind: input, shape index: {}]
  %s1 = inlined_call_operand.hbm [shape: bf16[1024,128], index: 1, kind: input, shape index: {}]
  %s2 = inlined_call_operand.hbm [shape: f32[1024,128], index: 2, kind: input, shape index: {}]
  %s3 = inlined_call_operand.hbm [shape: f32[1024,128], index: 3, kind: output, shape index: {}]
  %s4 = sld [smem:[#allocation0]]
  $region65: #{tpu_custom_call.1} parent=0
    _
  %s6 = ssub.s32 1, %s4
  %s7 = scalar_select 0, %s6, %s4
  $region1: #{tpu_custom_call.1} parent=0
    #allocation2 [shape = 'u8[1048576]{0}', space=vmem, size = 0x100000, scoped, tag = 'input window, operand 0']
    #allocation3 [shape = 's32[2]{0}', space=sflag, size = 0x8, scoped, tag = 'scoped memory for tpu_custom_call.1']
    #allocation4 [shape = 's32[2]{0}', space=sflag, size = 0x8, scoped, tag = 'scoped memory for tpu_custom_call.1']
    #allocation5 [shape = 'u8[262144]{0}', space=vmem, size = 0x40000, scoped, tag = 'input window, operand 1, single buffered']
    #allocation6 [shape = 's32[1]{0}', space=sflag, size = 0x4, scoped, tag = 'scoped memory for tpu_custom_call.1']
    #allocation7 [shape = 'u8[524288]{0}', space=vmem, size = 0x80000, scoped, tag = 'input window, operand 2']
    #allocation8 [shape = 'u8[524288]{0}', space=vmem, size = 0x80000, scoped, tag = 'output window, operand 0']
    %8 = vsyncpa [#allocation3], 0
    %s9 = scalar_lea.sflag [#allocation3], 1
    %10 = vsyncpa %s9, 0
    %11 = vsyncpa [#allocation6], 0
    %12 = vsyncpa [#allocation4], 0
    %s13 = scalar_lea.sflag [#allocation4], 1
    %14 = vsyncpa %s13, 0
    loop: start=0, step=1, limit=4
    $region2: #{tpu_custom_call.1} parent=1 // loop_pre_header
      _
    $region3: #{tpu_custom_call.1} parent=1 // loop_header
      %s16 = sphi 0, %s20
      %p17 = scmp.ge.s32.totalorder %s16, 4
      %s23 = sphi 0, %s42
      %s24 = sphi 0, %s38
      %s25 = sphi 0, %s34
      %s26 = sphi 0, %s23
      %s27 = sphi 0, %s24
      %s28 = sphi 0, %s25
      %s29 = sphi 0, %s26
      %s30 = sphi 0, %s27
      %s31 = sphi 0, %s28
      %s47 = sphi 0, %s49
      %s50 = sphi 0, %s47
      %s51 = sphi 0, %s50
      %s67 = sphi 0, %s51
      %s75 = sphi 0, %s77
      %s78 = sphi 0, %s75
      %s79 = sphi 0, %s78
      %s95 = sphi 0, %s79
      %s103 = sphi 0, %s105
      %s106 = sphi 0, %s103
      %s107 = sphi 0, %s106
      %s123 = sphi 0, %s107
      %s131 = sphi 0, %s133
      %s134 = sphi 0, %s131
      %s135 = sphi 0, %s134
      %s151 = sphi 0, %s135
    $region4: #{tpu_custom_call.1} parent=1 // loop_header_branch
      %19 = sbr.rel (%p17) target = $region8
    $region5: #{tpu_custom_call.1} parent=1 // loop_body
      %s21 = ssub.s32 %s16, 1
      %s22 = ssub.s32 %s16, 2
      %s32 = sadd.s32 1, %s25
      %p33 = scmp.ge.s32.totalorder %s32, 1
      %s34 = scalar_select %p33, 0, %s32
      %s35 = sadd.s32 1, %s24
      %s36 = scalar_select %p33, %s35, %s24
      %p37 = scmp.ge.s32.totalorder %s36, 1
      %s38 = scalar_select %p37, 0, %s36
      %s39 = sadd.s32 1, %s23
      %s40 = scalar_select %p37, %s39, %s23
      %p41 = scmp.ge.s32.totalorder %s40, 2
      %s42 = scalar_select %p41, 0, %s40
      %s43 = ssub.s32 %s23, %s42
      %s44 = ssub.s32 %s25, %s34
      %s45 = sor.u32 %s43, %s44
      %p46 = scmp.eq.s32.totalorder %s45, 0
      %s48 = sadd.s32 %s47, 1
      %s49 = scalar_select %p46, %s47, %s48
      %p52 = pneg %p46
      %p53 = scmp.eq.s32.totalorder %s16, 1
      %p54 = por %p52, %p53
      %p55 = scmp.ne.s32.totalorder %s47, %s50
      %p56 = scmp.eq.s32.totalorder %s16, 0
      %p57 = por %p55, %p56
      %p58 = scmp.ne.s32.totalorder %s47, %s50
      %p59 = scmp.eq.s32.totalorder %s21, 1
      %p60 = por %p58, %p59
      %p61 = scmp.ne.s32.totalorder %s50, %s51
      %p62 = scmp.eq.s32.totalorder %s21, 0
      %p63 = por %p61, %p62
      %p64 = scmp.ne.s32.totalorder %s50, %s51
      %p65 = scmp.eq.s32.totalorder %s22, 1
      %p66 = por %p64, %p65
      %p68 = scmp.ne.s32.totalorder %s51, %s67
      %p69 = scmp.eq.s32.totalorder %s22, 0
      %p70 = por %p68, %p69
      %s71 = ssub.s32 %s25, %s34
      %s72 = ssub.s32 %s24, %s38
      %s73 = sor.u32 %s71, %s72
      %p74 = scmp.eq.s32.totalorder %s73, 0
      %s76 = sadd.s32 %s75, 1
      %s77 = scalar_select %p74, %s75, %s76
      %p80 = pneg %p74
      %p81 = scmp.eq.s32.totalorder %s16, 1
      %p82 = por %p80, %p81
      %p83 = scmp.ne.s32.totalorder %s75, %s78
      %p84 = scmp.eq.s32.totalorder %s16, 0
      %p85 = por %p83, %p84
      %p86 = scmp.ne.s32.totalorder %s75, %s78
      %p87 = scmp.eq.s32.totalorder %s21, 1
      %p88 = por %p86, %p87
      %p89 = scmp.ne.s32.totalorder %s78, %s79
      %p90 = scmp.eq.s32.totalorder %s21, 0
      %p91 = por %p89, %p90
      %p92 = scmp.ne.s32.totalorder %s78, %s79
      %p93 = scmp.eq.s32.totalorder %s22, 1
      %p94 = por %p92, %p93
      %p96 = scmp.ne.s32.totalorder %s79, %s95
      %p97 = scmp.eq.s32.totalorder %s22, 0
      %p98 = por %p96, %p97
      %s99 = ssub.s32 %s23, %s42
      %s100 = ssub.s32 %s24, %s38
      %s101 = sor.u32 %s99, %s100
      %p102 = scmp.eq.s32.totalorder %s101, 0
      %s104 = sadd.s32 %s103, 1
      %s105 = scalar_select %p102, %s103, %s104
      %p108 = pneg %p102
      %p109 = scmp.eq.s32.totalorder %s16, 1
      %p110 = por %p108, %p109
      %p111 = scmp.ne.s32.totalorder %s103, %s106
      %p112 = scmp.eq.s32.totalorder %s16, 0
      %p113 = por %p111, %p112
      %p114 = scmp.ne.s32.totalorder %s103, %s106
      %p115 = scmp.eq.s32.totalorder %s21, 1
      %p116 = por %p114, %p115
      %p117 = scmp.ne.s32.totalorder %s106, %s107
      %p118 = scmp.eq.s32.totalorder %s21, 0
      %p119 = por %p117, %p118
      %p120 = scmp.ne.s32.totalorder %s106, %s107
      %p121 = scmp.eq.s32.totalorder %s22, 1
      %p122 = por %p120, %p121
      %p124 = scmp.ne.s32.totalorder %s107, %s123
      %p125 = scmp.eq.s32.totalorder %s22, 0
      %p126 = por %p124, %p125
      %s127 = ssub.s32 %s23, %s42
      %s128 = ssub.s32 %s24, %s38
      %s129 = sor.u32 %s127, %s128
      %p130 = scmp.eq.s32.totalorder %s129, 0
      %s132 = sadd.s32 %s131, 1
      %s133 = scalar_select %p130, %s131, %s132
      %p136 = pneg %p130
      %p137 = scmp.eq.s32.totalorder %s16, 1
      %p138 = por %p136, %p137
      %p139 = scmp.ne.s32.totalorder %s131, %s134
      %p140 = scmp.eq.s32.totalorder %s16, 0
      %p141 = por %p139, %p140
      %p142 = scmp.ne.s32.totalorder %s131, %s134
      %p143 = scmp.eq.s32.totalorder %s21, 1
      %p144 = por %p142, %p143
      %p145 = scmp.ne.s32.totalorder %s134, %s135
      %p146 = scmp.eq.s32.totalorder %s21, 0
      %p147 = por %p145, %p146
      %p148 = scmp.ne.s32.totalorder %s134, %s135
      %p149 = scmp.eq.s32.totalorder %s22, 1
      %p150 = por %p148, %p149
      %p152 = scmp.ne.s32.totalorder %s135, %s151
      %p153 = scmp.eq.s32.totalorder %s22, 0
      %p154 = por %p152, %p153
      %p155 = scmp.le.s32.totalorder 1, %s16
      %p156 = scmp.lt.s32.totalorder %s16, 3
      %p157 = pnand %p155, %p156
      %p158 = pneg %p157
      // Predicated region
      $region9: #{tpu_custom_call.1} parent=5 // pred_check
        _
      $region10: #{tpu_custom_call.1} parent=5 // pred_check_branch
        %160 = sbr.rel (%p157) target = $region12
      $region11: #{tpu_custom_call.1} parent=5 // pred_region
        %s161 = ssub.s32 %s16, 1
        // Predicated region
        $region13: #{tpu_custom_call.1} parent=11 // pred_check
          %p162 = pneg %p91
        $region14: #{tpu_custom_call.1} parent=11 // pred_check_branch
          %164 = sbr.rel (%p162) target = $region16
        $region15: #{tpu_custom_call.1} parent=11 // pred_region
          %s165 = smul.u32 128, %s28
          %167 = vsyncadd [#allocation6], 0
          %s168 = sadd.s32 %s27, %s165
          %s169 = smul.addr %s168, 4
          %s170 = scalar_lea.hbm %s1, %s169
          %s171 = sshll.u32 %s170, 4
          %s172 = int_to_ptr.hbm [resolvable:$true] %s171
          %s173 = sshll.u32 [#allocation5], 4
          %s174 = int_to_ptr.vmem [resolvable:$true] %s173
          %179 = dma.hbm_to_vmem [thread:$0]  %s172, 8192, %s174, [#allocation6], 64, 64, 4
        $region16: #{tpu_custom_call.1} parent=11 // pred_fallthru
          _
      $region12: #{tpu_custom_call.1} parent=5 // pred_fallthru
        _
      %p180 = scmp.lt.s32.totalorder %s16, 2
      // Predicated region
      $region17: #{tpu_custom_call.1} parent=5 // pred_check
        %p181 = pneg %p180
      $region18: #{tpu_custom_call.1} parent=5 // pred_check_branch
        %183 = sbr.rel (%p181) target = $region20
      $region19: #{tpu_custom_call.1} parent=5 // pred_region
        // Predicated region
        $region21: #{tpu_custom_call.1} parent=19 // pred_check
          %p184 = pneg %p57
        $region22: #{tpu_custom_call.1} parent=19 // pred_check_branch
          %186 = sbr.rel (%p184) target = $region24
        $region23: #{tpu_custom_call.1} parent=19 // pred_region
          %s187 = sand.u32 %s16, 1
          %s188 = scalar_lea.sflag [#allocation3], %s187
          %s189 = sand.u32 %s47, 1
          %s190 = smul.addr %s189, 1024
          %s191 = scalar_lea.vmem [#allocation2], %s190
          %s192 = smul.u32 16, %s23
          %s193 = smul.u32 8, %s25
          %195 = vsyncadd %s188, 0
          %s196 = smul.addr %s192, 8
          %s197 = sadd.s32 %s193, %s196
          %s198 = smul.addr %s197, 8
          %s199 = scalar_lea.hbm %s0, %s198
          %s200 = sshll.u32 %s199, 4
          %s201 = int_to_ptr.hbm [resolvable:$true] %s200
          %s202 = sshll.u32 %s191, 4
          %s203 = int_to_ptr.vmem [resolvable:$true] %s202
          %208 = dma.hbm_to_vmem [thread:$0]  %s201, 16384, %s203, %s188, 1024, 1024, 64
        $region24: #{tpu_custom_call.1} parent=19 // pred_fallthru
          _
        // Predicated region
        $region25: #{tpu_custom_call.1} parent=19 // pred_check
          %p209 = pneg %p113
        $region26: #{tpu_custom_call.1} parent=19 // pred_check_branch
          %211 = sbr.rel (%p209) target = $region28
        $region27: #{tpu_custom_call.1} parent=19 // pred_region
          %s212 = sand.u32 %s16, 1
          %s213 = scalar_lea.sflag [#allocation3], %s212
          %s214 = sand.u32 %s103, 1
          %s215 = smul.addr %s214, 512
          %s216 = scalar_lea.vmem [#allocation7], %s215
          %s217 = smul.u32 64, %s23
          %219 = vsyncadd %s213, 0
          %s220 = sadd.s32 %s24, %s217
          %s221 = smul.addr %s220, 8
          %s222 = scalar_lea.hbm %s2, %s221
          %s223 = sshll.u32 %s222, 4
          %s224 = int_to_ptr.hbm [resolvable:$true] %s223
          %s225 = sshll.u32 %s216, 4
          %s226 = int_to_ptr.vmem [resolvable:$true] %s225
          %231 = dma.hbm_to_vmem [thread:$0]  %s224, 8192, %s226, %s213, 128, 128, 8
        $region28: #{tpu_custom_call.1} parent=19 // pred_fallthru
          _
      $region20: #{tpu_custom_call.1} parent=5 // pred_fallthru
        _
      %p232 = scmp.le.s32.totalorder 1, %s16
      %p233 = scmp.lt.s32.totalorder %s16, 3
      %p234 = pnand %p232, %p233
      %p235 = pneg %p234
      // Predicated region
      $region29: #{tpu_custom_call.1} parent=5 // pred_check
        _
      $region30: #{tpu_custom_call.1} parent=5 // pred_check_branch
        %237 = sbr.rel (%p234) target = $region32
      $region31: #{tpu_custom_call.1} parent=5 // pred_region
        %s238 = ssub.s32 %s16, 1
        %s239 = sand.u32 %s21, 1
        %s240 = scalar_lea.sflag [#allocation3], %s239
        %s241 = sand.u32 %s50, 1
        %s242 = smul.addr %s241, 1024
        %s243 = scalar_lea.vmem [#allocation2], %s242
        // Predicated region
        $region33: #{tpu_custom_call.1} parent=31 // pred_check
          %p244 = pneg %p63
        $region34: #{tpu_custom_call.1} parent=31 // pred_check_branch
          %246 = sbr.rel (%p244) target = $region36
        $region35: #{tpu_custom_call.1} parent=31 // pred_region
          %248 = dma.done %s240, 16384
        $region36: #{tpu_custom_call.1} parent=31 // pred_fallthru
          _
        // Predicated region
        $region37: #{tpu_custom_call.1} parent=31 // pred_check
          %p249 = pneg %p91
        $region38: #{tpu_custom_call.1} parent=31 // pred_check_branch
          %251 = sbr.rel (%p249) target = $region40
        $region39: #{tpu_custom_call.1} parent=31 // pred_region
          %253 = dma.done [#allocation6], 8192
        $region40: #{tpu_custom_call.1} parent=31 // pred_fallthru
          _
        %s254 = sand.u32 %s21, 1
        %s255 = scalar_lea.sflag [#allocation3], %s254
        %s256 = sand.u32 %s106, 1
        %s257 = smul.addr %s256, 512
        %s258 = scalar_lea.vmem [#allocation7], %s257
        // Predicated region
        $region41: #{tpu_custom_call.1} parent=31 // pred_check
          %p259 = pneg %p119
        $region42: #{tpu_custom_call.1} parent=31 // pred_check_branch
          %261 = sbr.rel (%p259) target = $region44
        $region43: #{tpu_custom_call.1} parent=31 // pred_region
          %263 = dma.done %s255, 8192
        $region44: #{tpu_custom_call.1} parent=31 // pred_fallthru
          _
        %s264 = sand.u32 %s21, 1
        %s265 = scalar_lea.sflag [#allocation3], %s264
        %s266 = sand.u32 %s50, 1
        %s267 = smul.addr %s266, 1024
        %s268 = scalar_lea.vmem [#allocation2], %s267
        %p269 = pneg %p63
        %p270 = pneg %p60
        %p271 = pneg %p91
        %p272 = pneg %p88
        %s273 = sand.u32 %s21, 1
        %s274 = scalar_lea.sflag [#allocation3], %s273
        %s275 = sand.u32 %s106, 1
        %s276 = smul.addr %s275, 512
        %s277 = scalar_lea.vmem [#allocation7], %s276
        %p278 = pneg %p119
        %p279 = pneg %p116
        %p280 = pneg %p147
        %p281 = pneg %p144
        %s282 = sand.u32 %s134, 1
        %s283 = scalar_lea.sflag [#allocation4], %s282
        %s284 = sand.u32 %s134, 1
        %s285 = smul.addr %s284, 512
        %s286 = scalar_lea.vmem [#allocation8], %s285
        %s287 = smul.u32 16, %s26
        %s288 = smul.u32 8, %s28
        %s289 = smul.u32 128, %s28
        %s290 = smul.u32 64, %s26
        %s291 = smul.u32 64, %s26
        %p292 = scmp.eq.s32.totalorder %s28, 0
        // Predicated region
        $region45: #{tpu_custom_call.1} parent=31 // pred_check
          %p293 = pneg %p292
        $region46: #{tpu_custom_call.1} parent=31 // pred_check_branch
          %295 = sbr.rel (%p293) target = $region48
        $region47: #{tpu_custom_call.1} parent=31 // pred_region
          %296 = vst [vmem:[%s286] sm:$0xff] 0.0
          %297 = vst [vmem:[%s286 + $0x8] sm:$0xff] 0.0
          %298 = vst [vmem:[%s286 + $0x10] sm:$0xff] 0.0
          %299 = vst [vmem:[%s286 + $0x18] sm:$0xff] 0.0
          %300 = vst [vmem:[%s286 + $0x20] sm:$0xff] 0.0
          %301 = vst [vmem:[%s286 + $0x28] sm:$0xff] 0.0
          %302 = vst [vmem:[%s286 + $0x30] sm:$0xff] 0.0
          %303 = vst [vmem:[%s286 + $0x38] sm:$0xff] 0.0
          %304 = vst [vmem:[%s286 + $0x40] sm:$0xff] 0.0
          %305 = vst [vmem:[%s286 + $0x48] sm:$0xff] 0.0
          %306 = vst [vmem:[%s286 + $0x50] sm:$0xff] 0.0
          %307 = vst [vmem:[%s286 + $0x58] sm:$0xff] 0.0
          %308 = vst [vmem:[%s286 + $0x60] sm:$0xff] 0.0
          %309 = vst [vmem:[%s286 + $0x68] sm:$0xff] 0.0
          %310 = vst [vmem:[%s286 + $0x70] sm:$0xff] 0.0
          %311 = vst [vmem:[%s286 + $0x78] sm:$0xff] 0.0
          %312 = vst [vmem:[%s286 + $0x80] sm:$0xff] 0.0
          %313 = vst [vmem:[%s286 + $0x88] sm:$0xff] 0.0
          %314 = vst [vmem:[%s286 + $0x90] sm:$0xff] 0.0
          %315 = vst [vmem:[%s286 + $0x98] sm:$0xff] 0.0
          %316 = vst [vmem:[%s286 + $0xa0] sm:$0xff] 0.0
          %317 = vst [vmem:[%s286 + $0xa8] sm:$0xff] 0.0
          %318 = vst [vmem:[%s286 + $0xb0] sm:$0xff] 0.0
          %319 = vst [vmem:[%s286 + $0xb8] sm:$0xff] 0.0
          %320 = vst [vmem:[%s286 + $0xc0] sm:$0xff] 0.0
          %321 = vst [vmem:[%s286 + $0xc8] sm:$0xff] 0.0
          %322 = vst [vmem:[%s286 + $0xd0] sm:$0xff] 0.0
          %323 = vst [vmem:[%s286 + $0xd8] sm:$0xff] 0.0
          %324 = vst [vmem:[%s286 + $0xe0] sm:$0xff] 0.0
          %325 = vst [vmem:[%s286 + $0xe8] sm:$0xff] 0.0
          %326 = vst [vmem:[%s286 + $0xf0] sm:$0xff] 0.0
          %327 = vst [vmem:[%s286 + $0xf8] sm:$0xff] 0.0
          %328 = vst [vmem:[%s286 + $0x100] sm:$0xff] 0.0
          %329 = vst [vmem:[%s286 + $0x108] sm:$0xff] 0.0
          %330 = vst [vmem:[%s286 + $0x110] sm:$0xff] 0.0
          %331 = vst [vmem:[%s286 + $0x118] sm:$0xff] 0.0
          %332 = vst [vmem:[%s286 + $0x120] sm:$0xff] 0.0
          %333 = vst [vmem:[%s286 + $0x128] sm:$0xff] 0.0
          %334 = vst [vmem:[%s286 + $0x130] sm:$0xff] 0.0
          %335 = vst [vmem:[%s286 + $0x138] sm:$0xff] 0.0
          %336 = vst [vmem:[%s286 + $0x140] sm:$0xff] 0.0
          %337 = vst [vmem:[%s286 + $0x148] sm:$0xff] 0.0
          %338 = vst [vmem:[%s286 + $0x150] sm:$0xff] 0.0
          %339 = vst [vmem:[%s286 + $0x158] sm:$0xff] 0.0
          %340 = vst [vmem:[%s286 + $0x160] sm:$0xff] 0.0
          %341 = vst [vmem:[%s286 + $0x168] sm:$0xff] 0.0
          %342 = vst [vmem:[%s286 + $0x170] sm:$0xff] 0.0
          %343 = vst [vmem:[%s286 + $0x178] sm:$0xff] 0.0
          %344 = vst [vmem:[%s286 + $0x180] sm:$0xff] 0.0
          %345 = vst [vmem:[%s286 + $0x188] sm:$0xff] 0.0
          %346 = vst [vmem:[%s286 + $0x190] sm:$0xff] 0.0
          %347 = vst [vmem:[%s286 + $0x198] sm:$0xff] 0.0
          %348 = vst [vmem:[%s286 + $0x1a0] sm:$0xff] 0.0
          %349 = vst [vmem:[%s286 + $0x1a8] sm:$0xff] 0.0
          %350 = vst [vmem:[%s286 + $0x1b0] sm:$0xff] 0.0
          %351 = vst [vmem:[%s286 + $0x1b8] sm:$0xff] 0.0
          %352 = vst [vmem:[%s286 + $0x1c0] sm:$0xff] 0.0
          %353 = vst [vmem:[%s286 + $0x1c8] sm:$0xff] 0.0
          %354 = vst [vmem:[%s286 + $0x1d0] sm:$0xff] 0.0
          %355 = vst [vmem:[%s286 + $0x1d8] sm:$0xff] 0.0
          %356 = vst [vmem:[%s286 + $0x1e0] sm:$0xff] 0.0
          %357 = vst [vmem:[%s286 + $0x1e8] sm:$0xff] 0.0
          %358 = vst [vmem:[%s286 + $0x1f0] sm:$0xff] 0.0
          %359 = vst [vmem:[%s286 + $0x1f8] sm:$0xff] 0.0
        $region48: #{tpu_custom_call.1} parent=31 // pred_fallthru
          _
        %v360 = vld [vmem:[%s286] sm:$0xff]
        %v361 = vld [vmem:[%s286 + $0x8] sm:$0xff]
        %v362 = vld [vmem:[%s286 + $0x10] sm:$0xff]
        %v363 = vld [vmem:[%s286 + $0x18] sm:$0xff]
        %v364 = vld [vmem:[%s286 + $0x20] sm:$0xff]
        %v365 = vld [vmem:[%s286 + $0x28] sm:$0xff]
        %v366 = vld [vmem:[%s286 + $0x30] sm:$0xff]
        %v367 = vld [vmem:[%s286 + $0x38] sm:$0xff]
        %v368 = vld [vmem:[%s286 + $0x40] sm:$0xff]
        %v369 = vld [vmem:[%s286 + $0x48] sm:$0xff]
        %v370 = vld [vmem:[%s286 + $0x50] sm:$0xff]
        %v371 = vld [vmem:[%s286 + $0x58] sm:$0xff]
        %v372 = vld [vmem:[%s286 + $0x60] sm:$0xff]
        %v373 = vld [vmem:[%s286 + $0x68] sm:$0xff]
        %v374 = vld [vmem:[%s286 + $0x70] sm:$0xff]
        %v375 = vld [vmem:[%s286 + $0x78] sm:$0xff]
        %v376 = vld [vmem:[%s286 + $0x80] sm:$0xff]
        %v377 = vld [vmem:[%s286 + $0x88] sm:$0xff]
        %v378 = vld [vmem:[%s286 + $0x90] sm:$0xff]
        %v379 = vld [vmem:[%s286 + $0x98] sm:$0xff]
        %v380 = vld [vmem:[%s286 + $0xa0] sm:$0xff]
        %v381 = vld [vmem:[%s286 + $0xa8] sm:$0xff]
        %v382 = vld [vmem:[%s286 + $0xb0] sm:$0xff]
        %v383 = vld [vmem:[%s286 + $0xb8] sm:$0xff]
        %v384 = vld [vmem:[%s286 + $0xc0] sm:$0xff]
        %v385 = vld [vmem:[%s286 + $0xc8] sm:$0xff]
        %v386 = vld [vmem:[%s286 + $0xd0] sm:$0xff]
        %v387 = vld [vmem:[%s286 + $0xd8] sm:$0xff]
        %v388 = vld [vmem:[%s286 + $0xe0] sm:$0xff]
        %v389 = vld [vmem:[%s286 + $0xe8] sm:$0xff]
        %v390 = vld [vmem:[%s286 + $0xf0] sm:$0xff]
        %v391 = vld [vmem:[%s286 + $0xf8] sm:$0xff]
        %v392 = vld [vmem:[%s286 + $0x100] sm:$0xff]
        %v393 = vld [vmem:[%s286 + $0x108] sm:$0xff]
        %v394 = vld [vmem:[%s286 + $0x110] sm:$0xff]
        %v395 = vld [vmem:[%s286 + $0x118] sm:$0xff]
        %v396 = vld [vmem:[%s286 + $0x120] sm:$0xff]
        %v397 = vld [vmem:[%s286 + $0x128] sm:$0xff]
        %v398 = vld [vmem:[%s286 + $0x130] sm:$0xff]
        %v399 = vld [vmem:[%s286 + $0x138] sm:$0xff]
        %v400 = vld [vmem:[%s286 + $0x140] sm:$0xff]
        %v401 = vld [vmem:[%s286 + $0x148] sm:$0xff]
        %v402 = vld [vmem:[%s286 + $0x150] sm:$0xff]
        %v403 = vld [vmem:[%s286 + $0x158] sm:$0xff]
        %v404 = vld [vmem:[%s286 + $0x160] sm:$0xff]
        %v405 = vld [vmem:[%s286 + $0x168] sm:$0xff]
        %v406 = vld [vmem:[%s286 + $0x170] sm:$0xff]
        %v407 = vld [vmem:[%s286 + $0x178] sm:$0xff]
        %v408 = vld [vmem:[%s286 + $0x180] sm:$0xff]
        %v409 = vld [vmem:[%s286 + $0x188] sm:$0xff]
        %v410 = vld [vmem:[%s286 + $0x190] sm:$0xff]
        %v411 = vld [vmem:[%s286 + $0x198] sm:$0xff]
        %v412 = vld [vmem:[%s286 + $0x1a0] sm:$0xff]
        %v413 = vld [vmem:[%s286 + $0x1a8] sm:$0xff]
        %v414 = vld [vmem:[%s286 + $0x1b0] sm:$0xff]
        %v415 = vld [vmem:[%s286 + $0x1b8] sm:$0xff]
        %v416 = vld [vmem:[%s286 + $0x1c0] sm:$0xff]
        %v417 = vld [vmem:[%s286 + $0x1c8] sm:$0xff]
        %v418 = vld [vmem:[%s286 + $0x1d0] sm:$0xff]
        %v419 = vld [vmem:[%s286 + $0x1d8] sm:$0xff]
        %v420 = vld [vmem:[%s286 + $0x1e0] sm:$0xff]
        %v421 = vld [vmem:[%s286 + $0x1e8] sm:$0xff]
        %v422 = vld [vmem:[%s286 + $0x1f0] sm:$0xff]
        %v423 = vld [vmem:[%s286 + $0x1f8] sm:$0xff]
        %v424 = vld [vmem:[%s243] sm:$0xff]
        %v425 = vld [vmem:[%s243 + $0x8] sm:$0xff]
        %v426 = vld [vmem:[%s243 + $0x10] sm:$0xff]
        %v427 = vld [vmem:[%s243 + $0x18] sm:$0xff]
        %v428 = vld [vmem:[%s243 + $0x20] sm:$0xff]
        %v429 = vld [vmem:[%s243 + $0x28] sm:$0xff]
        %v430 = vld [vmem:[%s243 + $0x30] sm:$0xff]
        %v431 = vld [vmem:[%s243 + $0x38] sm:$0xff]
        %v432 = vld [vmem:[%s243 + $0x40] sm:$0xff]
        %v433 = vld [vmem:[%s243 + $0x48] sm:$0xff]
        %v434 = vld [vmem:[%s243 + $0x50] sm:$0xff]
        %v435 = vld [vmem:[%s243 + $0x58] sm:$0xff]
        %v436 = vld [vmem:[%s243 + $0x60] sm:$0xff]
        %v437 = vld [vmem:[%s243 + $0x68] sm:$0xff]
        %v438 = vld [vmem:[%s243 + $0x70] sm:$0xff]
        %v439 = vld [vmem:[%s243 + $0x78] sm:$0xff]
        %v440 = vld [vmem:[%s243 + $0x80] sm:$0xff]
        %v441 = vld [vmem:[%s243 + $0x88] sm:$0xff]
        %v442 = vld [vmem:[%s243 + $0x90] sm:$0xff]
        %v443 = vld [vmem:[%s243 + $0x98] sm:$0xff]
        %v444 = vld [vmem:[%s243 + $0xa0] sm:$0xff]
        %v445 = vld [vmem:[%s243 + $0xa8] sm:$0xff]
        %v446 = vld [vmem:[%s243 + $0xb0] sm:$0xff]
        %v447 = vld [vmem:[%s243 + $0xb8] sm:$0xff]
        %v448 = vld [vmem:[%s243 + $0xc0] sm:$0xff]
        %v449 = vld [vmem:[%s243 + $0xc8] sm:$0xff]
        %v450 = vld [vmem:[%s243 + $0xd0] sm:$0xff]
        %v451 = vld [vmem:[%s243 + $0xd8] sm:$0xff]
        %v452 = vld [vmem:[%s243 + $0xe0] sm:$0xff]
        %v453 = vld [vmem:[%s243 + $0xe8] sm:$0xff]
        %v454 = vld [vmem:[%s243 + $0xf0] sm:$0xff]
        %v455 = vld [vmem:[%s243 + $0xf8] sm:$0xff]
        %v456 = vld [vmem:[%s243 + $0x100] sm:$0xff]
        %v457 = vld [vmem:[%s243 + $0x108] sm:$0xff]
        %v458 = vld [vmem:[%s243 + $0x110] sm:$0xff]
        %v459 = vld [vmem:[%s243 + $0x118] sm:$0xff]
        %v460 = vld [vmem:[%s243 + $0x120] sm:$0xff]
        %v461 = vld [vmem:[%s243 + $0x128] sm:$0xff]
        %v462 = vld [vmem:[%s243 + $0x130] sm:$0xff]
        %v463 = vld [vmem:[%s243 + $0x138] sm:$0xff]
        %v464 = vld [vmem:[%s243 + $0x140] sm:$0xff]
        %v465 = vld [vmem:[%s243 + $0x148] sm:$0xff]
        %v466 = vld [vmem:[%s243 + $0x150] sm:$0xff]
        %v467 = vld [vmem:[%s243 + $0x158] sm:$0xff]
        %v468 = vld [vmem:[%s243 + $0x160] sm:$0xff]
        %v469 = vld [vmem:[%s243 + $0x168] sm:$0xff]
        %v470 = vld [vmem:[%s243 + $0x170] sm:$0xff]
        %v471 = vld [vmem:[%s243 + $0x178] sm:$0xff]
        %v472 = vld [vmem:[%s243 + $0x180] sm:$0xff]
        %v473 = vld [vmem:[%s243 + $0x188] sm:$0xff]
        %v474 = vld [vmem:[%s243 + $0x190] sm:$0xff]
        %v475 = vld [vmem:[%s243 + $0x198] sm:$0xff]
        %v476 = vld [vmem:[%s243 + $0x1a0] sm:$0xff]
        %v477 = vld [vmem:[%s243 + $0x1a8] sm:$0xff]
        %v478 = vld [vmem:[%s243 + $0x1b0] sm:$0xff]
        %v479 = vld [vmem:[%s243 + $0x1b8] sm:$0xff]
        %v480 = vld [vmem:[%s243 + $0x1c0] sm:$0xff]
        %v481 = vld [vmem:[%s243 + $0x1c8] sm:$0xff]
        %v482 = vld [vmem:[%s243 + $0x1d0] sm:$0xff]
        %v483 = vld [vmem:[%s243 + $0x1d8] sm:$0xff]
        %v484 = vld [vmem:[%s243 + $0x1e0] sm:$0xff]
        %v485 = vld [vmem:[%s243 + $0x1e8] sm:$0xff]
        %v486 = vld [vmem:[%s243 + $0x1f0] sm:$0xff]
        %v487 = vld [vmem:[%s243 + $0x1f8] sm:$0xff]
        %v488 = vld [vmem:[%s243 + $0x200] sm:$0xff]
        %v489 = vld [vmem:[%s243 + $0x208] sm:$0xff]
        %v490 = vld [vmem:[%s243 + $0x210] sm:$0xff]
        %v491 = vld [vmem:[%s243 + $0x218] sm:$0xff]
        %v492 = vld [vmem:[%s243 + $0x220] sm:$0xff]
        %v493 = vld [vmem:[%s243 + $0x228] sm:$0xff]
        %v494 = vld [vmem:[%s243 + $0x230] sm:$0xff]
        %v495 = vld [vmem:[%s243 + $0x238] sm:$0xff]
        %v496 = vld [vmem:[%s243 + $0x240] sm:$0xff]
        %v497 = vld [vmem:[%s243 + $0x248] sm:$0xff]
        %v498 = vld [vmem:[%s243 + $0x250] sm:$0xff]
        %v499 = vld [vmem:[%s243 + $0x258] sm:$0xff]
        %v500 = vld [vmem:[%s243 + $0x260] sm:$0xff]
        %v501 = vld [vmem:[%s243 + $0x268] sm:$0xff]
        %v502 = vld [vmem:[%s243 + $0x270] sm:$0xff]
        %v503 = vld [vmem:[%s243 + $0x278] sm:$0xff]
        %v504 = vld [vmem:[%s243 + $0x280] sm:$0xff]
        %v505 = vld [vmem:[%s243 + $0x288] sm:$0xff]
        %v506 = vld [vmem:[%s243 + $0x290] sm:$0xff]
        %v507 = vld [vmem:[%s243 + $0x298] sm:$0xff]
        %v508 = vld [vmem:[%s243 + $0x2a0] sm:$0xff]
        %v509 = vld [vmem:[%s243 + $0x2a8] sm:$0xff]
        %v510 = vld [vmem:[%s243 + $0x2b0] sm:$0xff]
        %v511 = vld [vmem:[%s243 + $0x2b8] sm:$0xff]
        %v512 = vld [vmem:[%s243 + $0x2c0] sm:$0xff]
        %v513 = vld [vmem:[%s243 + $0x2c8] sm:$0xff]
        %v514 = vld [vmem:[%s243 + $0x2d0] sm:$0xff]
        %v515 = vld [vmem:[%s243 + $0x2d8] sm:$0xff]
        %v516 = vld [vmem:[%s243 + $0x2e0] sm:$0xff]
        %v517 = vld [vmem:[%s243 + $0x2e8] sm:$0xff]
        %v518 = vld [vmem:[%s243 + $0x2f0] sm:$0xff]
        %v519 = vld [vmem:[%s243 + $0x2f8] sm:$0xff]
        %v520 = vld [vmem:[%s243 + $0x300] sm:$0xff]
        %v521 = vld [vmem:[%s243 + $0x308] sm:$0xff]
        %v522 = vld [vmem:[%s243 + $0x310] sm:$0xff]
        %v523 = vld [vmem:[%s243 + $0x318] sm:$0xff]
        %v524 = vld [vmem:[%s243 + $0x320] sm:$0xff]
        %v525 = vld [vmem:[%s243 + $0x328] sm:$0xff]
        %v526 = vld [vmem:[%s243 + $0x330] sm:$0xff]
        %v527 = vld [vmem:[%s243 + $0x338] sm:$0xff]
        %v528 = vld [vmem:[%s243 + $0x340] sm:$0xff]
        %v529 = vld [vmem:[%s243 + $0x348] sm:$0xff]
        %v530 = vld [vmem:[%s243 + $0x350] sm:$0xff]
        %v531 = vld [vmem:[%s243 + $0x358] sm:$0xff]
        %v532 = vld [vmem:[%s243 + $0x360] sm:$0xff]
        %v533 = vld [vmem:[%s243 + $0x368] sm:$0xff]
        %v534 = vld [vmem:[%s243 + $0x370] sm:$0xff]
        %v535 = vld [vmem:[%s243 + $0x378] sm:$0xff]
        %v536 = vld [vmem:[%s243 + $0x380] sm:$0xff]
        %v537 = vld [vmem:[%s243 + $0x388] sm:$0xff]
        %v538 = vld [vmem:[%s243 + $0x390] sm:$0xff]
        %v539 = vld [vmem:[%s243 + $0x398] sm:$0xff]
        %v540 = vld [vmem:[%s243 + $0x3a0] sm:$0xff]
        %v541 = vld [vmem:[%s243 + $0x3a8] sm:$0xff]
        %v542 = vld [vmem:[%s243 + $0x3b0] sm:$0xff]
        %v543 = vld [vmem:[%s243 + $0x3b8] sm:$0xff]
        %v544 = vld [vmem:[%s243 + $0x3c0] sm:$0xff]
        %v545 = vld [vmem:[%s243 + $0x3c8] sm:$0xff]
        %v546 = vld [vmem:[%s243 + $0x3d0] sm:$0xff]
        %v547 = vld [vmem:[%s243 + $0x3d8] sm:$0xff]
        %v548 = vld [vmem:[%s243 + $0x3e0] sm:$0xff]
        %v549 = vld [vmem:[%s243 + $0x3e8] sm:$0xff]
        %v550 = vld [vmem:[%s243 + $0x3f0] sm:$0xff]
        %v551 = vld [vmem:[%s243 + $0x3f8] sm:$0xff]
        %v552 = vunpack.c.0.s8 %v424
        %v553 = vunpack.c.0.s8 %v425
        %v554 = vunpack.c.0.s8 %v426
        %v555 = vunpack.c.0.s8 %v427
        %v556 = vunpack.c.0.s8 %v428
        %v557 = vunpack.c.0.s8 %v429
        %v558 = vunpack.c.0.s8 %v430
        %v559 = vunpack.c.0.s8 %v431
        %v560 = vunpack.c.1.s8 %v424
        %v561 = vunpack.c.1.s8 %v425
        %v562 = vunpack.c.1.s8 %v426
        %v563 = vunpack.c.1.s8 %v427
        %v564 = vunpack.c.1.s8 %v428
        %v565 = vunpack.c.1.s8 %v429
        %v566 = vunpack.c.1.s8 %v430
        %v567 = vunpack.c.1.s8 %v431
        %v568 = vunpack.c.2.s8 %v424
        %v569 = vunpack.c.2.s8 %v425
        %v570 = vunpack.c.2.s8 %v426
        %v571 = vunpack.c.2.s8 %v427
        %v572 = vunpack.c.2.s8 %v428
        %v573 = vunpack.c.2.s8 %v429
        %v574 = vunpack.c.2.s8 %v430
        %v575 = vunpack.c.2.s8 %v431
        %v576 = vunpack.c.3.s8 %v424
        %v577 = vunpack.c.3.s8 %v425
        %v578 = vunpack.c.3.s8 %v426
        %v579 = vunpack.c.3.s8 %v427
        %v580 = vunpack.c.3.s8 %v428
        %v581 = vunpack.c.3.s8 %v429
        %v582 = vunpack.c.3.s8 %v430
        %v583 = vunpack.c.3.s8 %v431
        %v584 = vunpack.c.0.s8 %v432
        %v585 = vunpack.c.0.s8 %v433
        %v586 = vunpack.c.0.s8 %v434
        %v587 = vunpack.c.0.s8 %v435
        %v588 = vunpack.c.0.s8 %v436
        %v589 = vunpack.c.0.s8 %v437
        %v590 = vunpack.c.0.s8 %v438
        %v591 = vunpack.c.0.s8 %v439
        %v592 = vunpack.c.1.s8 %v432
        %v593 = vunpack.c.1.s8 %v433
        %v594 = vunpack.c.1.s8 %v434
        %v595 = vunpack.c.1.s8 %v435
        %v596 = vunpack.c.1.s8 %v436
        %v597 = vunpack.c.1.s8 %v437
        %v598 = vunpack.c.1.s8 %v438
        %v599 = vunpack.c.1.s8 %v439
        %v600 = vunpack.c.2.s8 %v432
        %v601 = vunpack.c.2.s8 %v433
        %v602 = vunpack.c.2.s8 %v434
        %v603 = vunpack.c.2.s8 %v435
        %v604 = vunpack.c.2.s8 %v436
        %v605 = vunpack.c.2.s8 %v437
        %v606 = vunpack.c.2.s8 %v438
        %v607 = vunpack.c.2.s8 %v439
        %v608 = vunpack.c.3.s8 %v432
        %v609 = vunpack.c.3.s8 %v433
        %v610 = vunpack.c.3.s8 %v434
        %v611 = vunpack.c.3.s8 %v435
        %v612 = vunpack.c.3.s8 %v436
        %v613 = vunpack.c.3.s8 %v437
        %v614 = vunpack.c.3.s8 %v438
        %v615 = vunpack.c.3.s8 %v439
        %v616 = vunpack.c.0.s8 %v440
        %v617 = vunpack.c.0.s8 %v441
        %v618 = vunpack.c.0.s8 %v442
        %v619 = vunpack.c.0.s8 %v443
        %v620 = vunpack.c.0.s8 %v444
        %v621 = vunpack.c.0.s8 %v445
        %v622 = vunpack.c.0.s8 %v446
        %v623 = vunpack.c.0.s8 %v447
        %v624 = vunpack.c.1.s8 %v440
        %v625 = vunpack.c.1.s8 %v441
        %v626 = vunpack.c.1.s8 %v442
        %v627 = vunpack.c.1.s8 %v443
        %v628 = vunpack.c.1.s8 %v444
        %v629 = vunpack.c.1.s8 %v445
        %v630 = vunpack.c.1.s8 %v446
        %v631 = vunpack.c.1.s8 %v447
        %v632 = vunpack.c.2.s8 %v440
        %v633 = vunpack.c.2.s8 %v441
        %v634 = vunpack.c.2.s8 %v442
        %v635 = vunpack.c.2.s8 %v443
        %v636 = vunpack.c.2.s8 %v444
        %v637 = vunpack.c.2.s8 %v445
        %v638 = vunpack.c.2.s8 %v446
        %v639 = vunpack.c.2.s8 %v447
        %v640 = vunpack.c.3.s8 %v440
        %v641 = vunpack.c.3.s8 %v441
        %v642 = vunpack.c.3.s8 %v442
        %v643 = vunpack.c.3.s8 %v443
        %v644 = vunpack.c.3.s8 %v444
        %v645 = vunpack.c.3.s8 %v445
        %v646 = vunpack.c.3.s8 %v446
        %v647 = vunpack.c.3.s8 %v447
        %v648 = vunpack.c.0.s8 %v448
        %v649 = vunpack.c.0.s8 %v449
        %v650 = vunpack.c.0.s8 %v450
        %v651 = vunpack.c.0.s8 %v451
        %v652 = vunpack.c.0.s8 %v452
        %v653 = vunpack.c.0.s8 %v453
        %v654 = vunpack.c.0.s8 %v454
        %v655 = vunpack.c.0.s8 %v455
        %v656 = vunpack.c.1.s8 %v448
        %v657 = vunpack.c.1.s8 %v449
        %v658 = vunpack.c.1.s8 %v450
        %v659 = vunpack.c.1.s8 %v451
        %v660 = vunpack.c.1.s8 %v452
        %v661 = vunpack.c.1.s8 %v453
        %v662 = vunpack.c.1.s8 %v454
        %v663 = vunpack.c.1.s8 %v455
        %v664 = vunpack.c.2.s8 %v448
        %v665 = vunpack.c.2.s8 %v449
        %v666 = vunpack.c.2.s8 %v450
        %v667 = vunpack.c.2.s8 %v451
        %v668 = vunpack.c.2.s8 %v452
        %v669 = vunpack.c.2.s8 %v453
        %v670 = vunpack.c.2.s8 %v454
        %v671 = vunpack.c.2.s8 %v455
        %v672 = vunpack.c.3.s8 %v448
        %v673 = vunpack.c.3.s8 %v449
        %v674 = vunpack.c.3.s8 %v450
        %v675 = vunpack.c.3.s8 %v451
        %v676 = vunpack.c.3.s8 %v452
        %v677 = vunpack.c.3.s8 %v453
        %v678 = vunpack.c.3.s8 %v454
        %v679 = vunpack.c.3.s8 %v455
        %v680 = vunpack.c.0.s8 %v456
        %v681 = vunpack.c.0.s8 %v457
        %v682 = vunpack.c.0.s8 %v458
        %v683 = vunpack.c.0.s8 %v459
        %v684 = vunpack.c.0.s8 %v460
        %v685 = vunpack.c.0.s8 %v461
        %v686 = vunpack.c.0.s8 %v462
        %v687 = vunpack.c.0.s8 %v463
        %v688 = vunpack.c.1.s8 %v456
        %v689 = vunpack.c.1.s8 %v457
        %v690 = vunpack.c.1.s8 %v458
        %v691 = vunpack.c.1.s8 %v459
        %v692 = vunpack.c.1.s8 %v460
        %v693 = vunpack.c.1.s8 %v461
        %v694 = vunpack.c.1.s8 %v462
        %v695 = vunpack.c.1.s8 %v463
        %v696 = vunpack.c.2.s8 %v456
        %v697 = vunpack.c.2.s8 %v457
        %v698 = vunpack.c.2.s8 %v458
        %v699 = vunpack.c.2.s8 %v459
        %v700 = vunpack.c.2.s8 %v460
        %v701 = vunpack.c.2.s8 %v461
        %v702 = vunpack.c.2.s8 %v462
        %v703 = vunpack.c.2.s8 %v463
        %v704 = vunpack.c.3.s8 %v456
        %v705 = vunpack.c.3.s8 %v457
        %v706 = vunpack.c.3.s8 %v458
        %v707 = vunpack.c.3.s8 %v459
        %v708 = vunpack.c.3.s8 %v460
        %v709 = vunpack.c.3.s8 %v461
        %v710 = vunpack.c.3.s8 %v462
        %v711 = vunpack.c.3.s8 %v463
        %v712 = vunpack.c.0.s8 %v464
        %v713 = vunpack.c.0.s8 %v465
        %v714 = vunpack.c.0.s8 %v466
        %v715 = vunpack.c.0.s8 %v467
        %v716 = vunpack.c.0.s8 %v468
        %v717 = vunpack.c.0.s8 %v469
        %v718 = vunpack.c.0.s8 %v470
        %v719 = vunpack.c.0.s8 %v471
        %v720 = vunpack.c.1.s8 %v464
        %v721 = vunpack.c.1.s8 %v465
        %v722 = vunpack.c.1.s8 %v466
        %v723 = vunpack.c.1.s8 %v467
        %v724 = vunpack.c.1.s8 %v468
        %v725 = vunpack.c.1.s8 %v469
        %v726 = vunpack.c.1.s8 %v470
        %v727 = vunpack.c.1.s8 %v471
        %v728 = vunpack.c.2.s8 %v464
        %v729 = vunpack.c.2.s8 %v465
        %v730 = vunpack.c.2.s8 %v466
        %v731 = vunpack.c.2.s8 %v467
        %v732 = vunpack.c.2.s8 %v468
        %v733 = vunpack.c.2.s8 %v469
        %v734 = vunpack.c.2.s8 %v470
        %v735 = vunpack.c.2.s8 %v471
        %v736 = vunpack.c.3.s8 %v464
        %v737 = vunpack.c.3.s8 %v465
        %v738 = vunpack.c.3.s8 %v466
        %v739 = vunpack.c.3.s8 %v467
        %v740 = vunpack.c.3.s8 %v468
        %v741 = vunpack.c.3.s8 %v469
        %v742 = vunpack.c.3.s8 %v470
        %v743 = vunpack.c.3.s8 %v471
        %v744 = vunpack.c.0.s8 %v472
        %v745 = vunpack.c.0.s8 %v473
        %v746 = vunpack.c.0.s8 %v474
        %v747 = vunpack.c.0.s8 %v475
        %v748 = vunpack.c.0.s8 %v476
        %v749 = vunpack.c.0.s8 %v477
        %v750 = vunpack.c.0.s8 %v478
        %v751 = vunpack.c.0.s8 %v479
        %v752 = vunpack.c.1.s8 %v472
        %v753 = vunpack.c.1.s8 %v473
        %v754 = vunpack.c.1.s8 %v474
        %v755 = vunpack.c.1.s8 %v475
        %v756 = vunpack.c.1.s8 %v476
        %v757 = vunpack.c.1.s8 %v477
        %v758 = vunpack.c.1.s8 %v478
        %v759 = vunpack.c.1.s8 %v479
        %v760 = vunpack.c.2.s8 %v472
        %v761 = vunpack.c.2.s8 %v473
        %v762 = vunpack.c.2.s8 %v474
        %v763 = vunpack.c.2.s8 %v475
        %v764 = vunpack.c.2.s8 %v476
        %v765 = vunpack.c.2.s8 %v477
        %v766 = vunpack.c.2.s8 %v478
        %v767 = vunpack.c.2.s8 %v479
        %v768 = vunpack.c.3.s8 %v472
        %v769 = vunpack.c.3.s8 %v473
        %v770 = vunpack.c.3.s8 %v474
        %v771 = vunpack.c.3.s8 %v475
        %v772 = vunpack.c.3.s8 %v476
        %v773 = vunpack.c.3.s8 %v477
        %v774 = vunpack.c.3.s8 %v478
        %v775 = vunpack.c.3.s8 %v479
        %v776 = vunpack.c.0.s8 %v480
        %v777 = vunpack.c.0.s8 %v481
        %v778 = vunpack.c.0.s8 %v482
        %v779 = vunpack.c.0.s8 %v483
        %v780 = vunpack.c.0.s8 %v484
        %v781 = vunpack.c.0.s8 %v485
        %v782 = vunpack.c.0.s8 %v486
        %v783 = vunpack.c.0.s8 %v487
        %v784 = vunpack.c.1.s8 %v480
        %v785 = vunpack.c.1.s8 %v481
        %v786 = vunpack.c.1.s8 %v482
        %v787 = vunpack.c.1.s8 %v483
        %v788 = vunpack.c.1.s8 %v484
        %v789 = vunpack.c.1.s8 %v485
        %v790 = vunpack.c.1.s8 %v486
        %v791 = vunpack.c.1.s8 %v487
        %v792 = vunpack.c.2.s8 %v480
        %v793 = vunpack.c.2.s8 %v481
        %v794 = vunpack.c.2.s8 %v482
        %v795 = vunpack.c.2.s8 %v483
        %v796 = vunpack.c.2.s8 %v484
        %v797 = vunpack.c.2.s8 %v485
        %v798 = vunpack.c.2.s8 %v486
        %v799 = vunpack.c.2.s8 %v487
        %v800 = vunpack.c.3.s8 %v480
        %v801 = vunpack.c.3.s8 %v481
        %v802 = vunpack.c.3.s8 %v482
        %v803 = vunpack.c.3.s8 %v483
        %v804 = vunpack.c.3.s8 %v484
        %v805 = vunpack.c.3.s8 %v485
        %v806 = vunpack.c.3.s8 %v486
        %v807 = vunpack.c.3.s8 %v487
        %v808 = vunpack.c.0.s8 %v488
        %v809 = vunpack.c.0.s8 %v489
        %v810 = vunpack.c.0.s8 %v490
        %v811 = vunpack.c.0.s8 %v491
        %v812 = vunpack.c.0.s8 %v492
        %v813 = vunpack.c.0.s8 %v493
        %v814 = vunpack.c.0.s8 %v494
        %v815 = vunpack.c.0.s8 %v495
        %v816 = vunpack.c.1.s8 %v488
        %v817 = vunpack.c.1.s8 %v489
        %v818 = vunpack.c.1.s8 %v490
        %v819 = vunpack.c.1.s8 %v491
        %v820 = vunpack.c.1.s8 %v492
        %v821 = vunpack.c.1.s8 %v493
        %v822 = vunpack.c.1.s8 %v494
        %v823 = vunpack.c.1.s8 %v495
        %v824 = vunpack.c.2.s8 %v488
        %v825 = vunpack.c.2.s8 %v489
        %v826 = vunpack.c.2.s8 %v490
        %v827 = vunpack.c.2.s8 %v491
        %v828 = vunpack.c.2.s8 %v492
        %v829 = vunpack.c.2.s8 %v493
        %v830 = vunpack.c.2.s8 %v494
        %v831 = vunpack.c.2.s8 %v495
        %v832 = vunpack.c.3.s8 %v488
        %v833 = vunpack.c.3.s8 %v489
        %v834 = vunpack.c.3.s8 %v490
        %v835 = vunpack.c.3.s8 %v491
        %v836 = vunpack.c.3.s8 %v492
        %v837 = vunpack.c.3.s8 %v493
        %v838 = vunpack.c.3.s8 %v494
        %v839 = vunpack.c.3.s8 %v495
        %v840 = vunpack.c.0.s8 %v496
        %v841 = vunpack.c.0.s8 %v497
        %v842 = vunpack.c.0.s8 %v498
        %v843 = vunpack.c.0.s8 %v499
        %v844 = vunpack.c.0.s8 %v500
        %v845 = vunpack.c.0.s8 %v501
        %v846 = vunpack.c.0.s8 %v502
        %v847 = vunpack.c.0.s8 %v503
        %v848 = vunpack.c.1.s8 %v496
        %v849 = vunpack.c.1.s8 %v497
        %v850 = vunpack.c.1.s8 %v498
        %v851 = vunpack.c.1.s8 %v499
        %v852 = vunpack.c.1.s8 %v500
        %v853 = vunpack.c.1.s8 %v501
        %v854 = vunpack.c.1.s8 %v502
        %v855 = vunpack.c.1.s8 %v503
        %v856 = vunpack.c.2.s8 %v496
        %v857 = vunpack.c.2.s8 %v497
        %v858 = vunpack.c.2.s8 %v498
        %v859 = vunpack.c.2.s8 %v499
        %v860 = vunpack.c.2.s8 %v500
        %v861 = vunpack.c.2.s8 %v501
        %v862 = vunpack.c.2.s8 %v502
        %v863 = vunpack.c.2.s8 %v503
        %v864 = vunpack.c.3.s8 %v496
        %v865 = vunpack.c.3.s8 %v497
        %v866 = vunpack.c.3.s8 %v498
        %v867 = vunpack.c.3.s8 %v499
        %v868 = vunpack.c.3.s8 %v500
        %v869 = vunpack.c.3.s8 %v501
        %v870 = vunpack.c.3.s8 %v502
        %v871 = vunpack.c.3.s8 %v503
        %v872 = vunpack.c.0.s8 %v504
        %v873 = vunpack.c.0.s8 %v505
        %v874 = vunpack.c.0.s8 %v506
        %v875 = vunpack.c.0.s8 %v507
        %v876 = vunpack.c.0.s8 %v508
        %v877 = vunpack.c.0.s8 %v509
        %v878 = vunpack.c.0.s8 %v510
        %v879 = vunpack.c.0.s8 %v511
        %v880 = vunpack.c.1.s8 %v504
        %v881 = vunpack.c.1.s8 %v505
        %v882 = vunpack.c.1.s8 %v506
        %v883 = vunpack.c.1.s8 %v507
        %v884 = vunpack.c.1.s8 %v508
        %v885 = vunpack.c.1.s8 %v509
        %v886 = vunpack.c.1.s8 %v510
        %v887 = vunpack.c.1.s8 %v511
        %v888 = vunpack.c.2.s8 %v504
        %v889 = vunpack.c.2.s8 %v505
        %v890 = vunpack.c.2.s8 %v506
        %v891 = vunpack.c.2.s8 %v507
        %v892 = vunpack.c.2.s8 %v508
        %v893 = vunpack.c.2.s8 %v509
        %v894 = vunpack.c.2.s8 %v510
        %v895 = vunpack.c.2.s8 %v511
        %v896 = vunpack.c.3.s8 %v504
        %v897 = vunpack.c.3.s8 %v505
        %v898 = vunpack.c.3.s8 %v506
        %v899 = vunpack.c.3.s8 %v507
        %v900 = vunpack.c.3.s8 %v508
        %v901 = vunpack.c.3.s8 %v509
        %v902 = vunpack.c.3.s8 %v510
        %v903 = vunpack.c.3.s8 %v511
        %v904 = vunpack.c.0.s8 %v512
        %v905 = vunpack.c.0.s8 %v513
        %v906 = vunpack.c.0.s8 %v514
        %v907 = vunpack.c.0.s8 %v515
        %v908 = vunpack.c.0.s8 %v516
        %v909 = vunpack.c.0.s8 %v517
        %v910 = vunpack.c.0.s8 %v518
        %v911 = vunpack.c.0.s8 %v519
        %v912 = vunpack.c.1.s8 %v512
        %v913 = vunpack.c.1.s8 %v513
        %v914 = vunpack.c.1.s8 %v514
        %v915 = vunpack.c.1.s8 %v515
        %v916 = vunpack.c.1.s8 %v516
        %v917 = vunpack.c.1.s8 %v517
        %v918 = vunpack.c.1.s8 %v518
        %v919 = vunpack.c.1.s8 %v519
        %v920 = vunpack.c.2.s8 %v512
        %v921 = vunpack.c.2.s8 %v513
        %v922 = vunpack.c.2.s8 %v514
        %v923 = vunpack.c.2.s8 %v515
        %v924 = vunpack.c.2.s8 %v516
        %v925 = vunpack.c.2.s8 %v517
        %v926 = vunpack.c.2.s8 %v518
        %v927 = vunpack.c.2.s8 %v519
        %v928 = vunpack.c.3.s8 %v512
        %v929 = vunpack.c.3.s8 %v513
        %v930 = vunpack.c.3.s8 %v514
        %v931 = vunpack.c.3.s8 %v515
        %v932 = vunpack.c.3.s8 %v516
        %v933 = vunpack.c.3.s8 %v517
        %v934 = vunpack.c.3.s8 %v518
        %v935 = vunpack.c.3.s8 %v519
        %v936 = vunpack.c.0.s8 %v520
        %v937 = vunpack.c.0.s8 %v521
        %v938 = vunpack.c.0.s8 %v522
        %v939 = vunpack.c.0.s8 %v523
        %v940 = vunpack.c.0.s8 %v524
        %v941 = vunpack.c.0.s8 %v525
        %v942 = vunpack.c.0.s8 %v526
        %v943 = vunpack.c.0.s8 %v527
        %v944 = vunpack.c.1.s8 %v520
        %v945 = vunpack.c.1.s8 %v521
        %v946 = vunpack.c.1.s8 %v522
        %v947 = vunpack.c.1.s8 %v523
        %v948 = vunpack.c.1.s8 %v524
        %v949 = vunpack.c.1.s8 %v525
        %v950 = vunpack.c.1.s8 %v526
        %v951 = vunpack.c.1.s8 %v527
        %v952 = vunpack.c.2.s8 %v520
        %v953 = vunpack.c.2.s8 %v521
        %v954 = vunpack.c.2.s8 %v522
        %v955 = vunpack.c.2.s8 %v523
        %v956 = vunpack.c.2.s8 %v524
        %v957 = vunpack.c.2.s8 %v525
        %v958 = vunpack.c.2.s8 %v526
        %v959 = vunpack.c.2.s8 %v527
        %v960 = vunpack.c.3.s8 %v520
        %v961 = vunpack.c.3.s8 %v521
        %v962 = vunpack.c.3.s8 %v522
        %v963 = vunpack.c.3.s8 %v523
        %v964 = vunpack.c.3.s8 %v524
        %v965 = vunpack.c.3.s8 %v525
        %v966 = vunpack.c.3.s8 %v526
        %v967 = vunpack.c.3.s8 %v527
        %v968 = vunpack.c.0.s8 %v528
        %v969 = vunpack.c.0.s8 %v529
        %v970 = vunpack.c.0.s8 %v530
        %v971 = vunpack.c.0.s8 %v531
        %v972 = vunpack.c.0.s8 %v532
        %v973 = vunpack.c.0.s8 %v533
        %v974 = vunpack.c.0.s8 %v534
        %v975 = vunpack.c.0.s8 %v535
        %v976 = vunpack.c.1.s8 %v528
        %v977 = vunpack.c.1.s8 %v529
        %v978 = vunpack.c.1.s8 %v530
        %v979 = vunpack.c.1.s8 %v531
        %v980 = vunpack.c.1.s8 %v532
        %v981 = vunpack.c.1.s8 %v533
        %v982 = vunpack.c.1.s8 %v534
        %v983 = vunpack.c.1.s8 %v535
        %v984 = vunpack.c.2.s8 %v528
        %v985 = vunpack.c.2.s8 %v529
        %v986 = vunpack.c.2.s8 %v530
        %v987 = vunpack.c.2.s8 %v531
        %v988 = vunpack.c.2.s8 %v532
        %v989 = vunpack.c.2.s8 %v533
        %v990 = vunpack.c.2.s8 %v534
        %v991 = vunpack.c.2.s8 %v535
        %v992 = vunpack.c.3.s8 %v528
        %v993 = vunpack.c.3.s8 %v529
        %v994 = vunpack.c.3.s8 %v530
        %v995 = vunpack.c.3.s8 %v531
        %v996 = vunpack.c.3.s8 %v532
        %v997 = vunpack.c.3.s8 %v533
        %v998 = vunpack.c.3.s8 %v534
        %v999 = vunpack.c.3.s8 %v535
        %v1000 = vunpack.c.0.s8 %v536
        %v1001 = vunpack.c.0.s8 %v537
        %v1002 = vunpack.c.0.s8 %v538
        %v1003 = vunpack.c.0.s8 %v539
        %v1004 = vunpack.c.0.s8 %v540
        %v1005 = vunpack.c.0.s8 %v541
        %v1006 = vunpack.c.0.s8 %v542
        %v1007 = vunpack.c.0.s8 %v543
        %v1008 = vunpack.c.1.s8 %v536
        %v1009 = vunpack.c.1.s8 %v537
        %v1010 = vunpack.c.1.s8 %v538
        %v1011 = vunpack.c.1.s8 %v539
        %v1012 = vunpack.c.1.s8 %v540
        %v1013 = vunpack.c.1.s8 %v541
        %v1014 = vunpack.c.1.s8 %v542
        %v1015 = vunpack.c.1.s8 %v543
        %v1016 = vunpack.c.2.s8 %v536
        %v1017 = vunpack.c.2.s8 %v537
        %v1018 = vunpack.c.2.s8 %v538
        %v1019 = vunpack.c.2.s8 %v539
        %v1020 = vunpack.c.2.s8 %v540
        %v1021 = vunpack.c.2.s8 %v541
        %v1022 = vunpack.c.2.s8 %v542
        %v1023 = vunpack.c.2.s8 %v543
        %v1024 = vunpack.c.3.s8 %v536
        %v1025 = vunpack.c.3.s8 %v537
        %v1026 = vunpack.c.3.s8 %v538
        %v1027 = vunpack.c.3.s8 %v539
        %v1028 = vunpack.c.3.s8 %v540
        %v1029 = vunpack.c.3.s8 %v541
        %v1030 = vunpack.c.3.s8 %v542
        %v1031 = vunpack.c.3.s8 %v543
        %v1032 = vunpack.c.0.s8 %v544
        %v1033 = vunpack.c.0.s8 %v545
        %v1034 = vunpack.c.0.s8 %v546
        %v1035 = vunpack.c.0.s8 %v547
        %v1036 = vunpack.c.0.s8 %v548
        %v1037 = vunpack.c.0.s8 %v549
        %v1038 = vunpack.c.0.s8 %v550
        %v1039 = vunpack.c.0.s8 %v551
        %v1040 = vunpack.c.1.s8 %v544
        %v1041 = vunpack.c.1.s8 %v545
        %v1042 = vunpack.c.1.s8 %v546
        %v1043 = vunpack.c.1.s8 %v547
        %v1044 = vunpack.c.1.s8 %v548
        %v1045 = vunpack.c.1.s8 %v549
        %v1046 = vunpack.c.1.s8 %v550
        %v1047 = vunpack.c.1.s8 %v551
        %v1048 = vunpack.c.2.s8 %v544
        %v1049 = vunpack.c.2.s8 %v545
        %v1050 = vunpack.c.2.s8 %v546
        %v1051 = vunpack.c.2.s8 %v547
        %v1052 = vunpack.c.2.s8 %v548
        %v1053 = vunpack.c.2.s8 %v549
        %v1054 = vunpack.c.2.s8 %v550
        %v1055 = vunpack.c.2.s8 %v551
        %v1056 = vunpack.c.3.s8 %v544
        %v1057 = vunpack.c.3.s8 %v545
        %v1058 = vunpack.c.3.s8 %v546
        %v1059 = vunpack.c.3.s8 %v547
        %v1060 = vunpack.c.3.s8 %v548
        %v1061 = vunpack.c.3.s8 %v549
        %v1062 = vunpack.c.3.s8 %v550
        %v1063 = vunpack.c.3.s8 %v551
        %v1064 = vcvt.s32.f32 %v552
        %v1065 = vcvt.s32.f32 %v553
        %v1066 = vcvt.s32.f32 %v554
        %v1067 = vcvt.s32.f32 %v555
        %v1068 = vcvt.s32.f32 %v556
        %v1069 = vcvt.s32.f32 %v557
        %v1070 = vcvt.s32.f32 %v558
        %v1071 = vcvt.s32.f32 %v559
        %v1072 = vcvt.s32.f32 %v560
        %v1073 = vcvt.s32.f32 %v561
        %v1074 = vcvt.s32.f32 %v562
        %v1075 = vcvt.s32.f32 %v563
        %v1076 = vcvt.s32.f32 %v564
        %v1077 = vcvt.s32.f32 %v565
        %v1078 = vcvt.s32.f32 %v566
        %v1079 = vcvt.s32.f32 %v567
        %v1080 = vcvt.s32.f32 %v568
        %v1081 = vcvt.s32.f32 %v569
        %v1082 = vcvt.s32.f32 %v570
        %v1083 = vcvt.s32.f32 %v571
        %v1084 = vcvt.s32.f32 %v572
        %v1085 = vcvt.s32.f32 %v573
        %v1086 = vcvt.s32.f32 %v574
        %v1087 = vcvt.s32.f32 %v575
        %v1088 = vcvt.s32.f32 %v576
        %v1089 = vcvt.s32.f32 %v577
        %v1090 = vcvt.s32.f32 %v578
        %v1091 = vcvt.s32.f32 %v579
        %v1092 = vcvt.s32.f32 %v580
        %v1093 = vcvt.s32.f32 %v581
        %v1094 = vcvt.s32.f32 %v582
        %v1095 = vcvt.s32.f32 %v583
        %v1096 = vcvt.s32.f32 %v584
        %v1097 = vcvt.s32.f32 %v585
        %v1098 = vcvt.s32.f32 %v586
        %v1099 = vcvt.s32.f32 %v587
        %v1100 = vcvt.s32.f32 %v588
        %v1101 = vcvt.s32.f32 %v589
        %v1102 = vcvt.s32.f32 %v590
        %v1103 = vcvt.s32.f32 %v591
        %v1104 = vcvt.s32.f32 %v592
        %v1105 = vcvt.s32.f32 %v593
        %v1106 = vcvt.s32.f32 %v594
        %v1107 = vcvt.s32.f32 %v595
        %v1108 = vcvt.s32.f32 %v596
        %v1109 = vcvt.s32.f32 %v597
        %v1110 = vcvt.s32.f32 %v598
        %v1111 = vcvt.s32.f32 %v599
        %v1112 = vcvt.s32.f32 %v600
        %v1113 = vcvt.s32.f32 %v601
        %v1114 = vcvt.s32.f32 %v602
        %v1115 = vcvt.s32.f32 %v603
        %v1116 = vcvt.s32.f32 %v604
        %v1117 = vcvt.s32.f32 %v605
        %v1118 = vcvt.s32.f32 %v606
        %v1119 = vcvt.s32.f32 %v607
        %v1120 = vcvt.s32.f32 %v608
        %v1121 = vcvt.s32.f32 %v609
        %v1122 = vcvt.s32.f32 %v610
        %v1123 = vcvt.s32.f32 %v611
        %v1124 = vcvt.s32.f32 %v612
        %v1125 = vcvt.s32.f32 %v613
        %v1126 = vcvt.s32.f32 %v614
        %v1127 = vcvt.s32.f32 %v615
        %v1128 = vcvt.s32.f32 %v616
        %v1129 = vcvt.s32.f32 %v617
        %v1130 = vcvt.s32.f32 %v618
        %v1131 = vcvt.s32.f32 %v619
        %v1132 = vcvt.s32.f32 %v620
        %v1133 = vcvt.s32.f32 %v621
        %v1134 = vcvt.s32.f32 %v622
        %v1135 = vcvt.s32.f32 %v623
        %v1136 = vcvt.s32.f32 %v624
        %v1137 = vcvt.s32.f32 %v625
        %v1138 = vcvt.s32.f32 %v626
        %v1139 = vcvt.s32.f32 %v627
        %v1140 = vcvt.s32.f32 %v628
        %v1141 = vcvt.s32.f32 %v629
        %v1142 = vcvt.s32.f32 %v630
        %v1143 = vcvt.s32.f32 %v631
        %v1144 = vcvt.s32.f32 %v632
        %v1145 = vcvt.s32.f32 %v633
        %v1146 = vcvt.s32.f32 %v634
        %v1147 = vcvt.s32.f32 %v635
        %v1148 = vcvt.s32.f32 %v636
        %v1149 = vcvt.s32.f32 %v637
        %v1150 = vcvt.s32.f32 %v638
        %v1151 = vcvt.s32.f32 %v639
        %v1152 = vcvt.s32.f32 %v640
        %v1153 = vcvt.s32.f32 %v641
        %v1154 = vcvt.s32.f32 %v642
        %v1155 = vcvt.s32.f32 %v643
        %v1156 = vcvt.s32.f32 %v644
        %v1157 = vcvt.s32.f32 %v645
        %v1158 = vcvt.s32.f32 %v646
        %v1159 = vcvt.s32.f32 %v647
        %v1160 = vcvt.s32.f32 %v648
        %v1161 = vcvt.s32.f32 %v649
        %v1162 = vcvt.s32.f32 %v650
        %v1163 = vcvt.s32.f32 %v651
        %v1164 = vcvt.s32.f32 %v652
        %v1165 = vcvt.s32.f32 %v653
        %v1166 = vcvt.s32.f32 %v654
        %v1167 = vcvt.s32.f32 %v655
        %v1168 = vcvt.s32.f32 %v656
        %v1169 = vcvt.s32.f32 %v657
        %v1170 = vcvt.s32.f32 %v658
        %v1171 = vcvt.s32.f32 %v659
        %v1172 = vcvt.s32.f32 %v660
        %v1173 = vcvt.s32.f32 %v661
        %v1174 = vcvt.s32.f32 %v662
        %v1175 = vcvt.s32.f32 %v663
        %v1176 = vcvt.s32.f32 %v664
        %v1177 = vcvt.s32.f32 %v665
        %v1178 = vcvt.s32.f32 %v666
        %v1179 = vcvt.s32.f32 %v667
        %v1180 = vcvt.s32.f32 %v668
        %v1181 = vcvt.s32.f32 %v669
        %v1182 = vcvt.s32.f32 %v670
        %v1183 = vcvt.s32.f32 %v671
        %v1184 = vcvt.s32.f32 %v672
        %v1185 = vcvt.s32.f32 %v673
        %v1186 = vcvt.s32.f32 %v674
        %v1187 = vcvt.s32.f32 %v675
        %v1188 = vcvt.s32.f32 %v676
        %v1189 = vcvt.s32.f32 %v677
        %v1190 = vcvt.s32.f32 %v678
        %v1191 = vcvt.s32.f32 %v679
        %v1192 = vcvt.s32.f32 %v680
        %v1193 = vcvt.s32.f32 %v681
        %v1194 = vcvt.s32.f32 %v682
        %v1195 = vcvt.s32.f32 %v683
        %v1196 = vcvt.s32.f32 %v684
        %v1197 = vcvt.s32.f32 %v685
        %v1198 = vcvt.s32.f32 %v686
        %v1199 = vcvt.s32.f32 %v687
        %v1200 = vcvt.s32.f32 %v688
        %v1201 = vcvt.s32.f32 %v689
        %v1202 = vcvt.s32.f32 %v690
        %v1203 = vcvt.s32.f32 %v691
        %v1204 = vcvt.s32.f32 %v692
        %v1205 = vcvt.s32.f32 %v693
        %v1206 = vcvt.s32.f32 %v694
        %v1207 = vcvt.s32.f32 %v695
        %v1208 = vcvt.s32.f32 %v696
        %v1209 = vcvt.s32.f32 %v697
        %v1210 = vcvt.s32.f32 %v698
        %v1211 = vcvt.s32.f32 %v699
        %v1212 = vcvt.s32.f32 %v700
        %v1213 = vcvt.s32.f32 %v701
        %v1214 = vcvt.s32.f32 %v702
        %v1215 = vcvt.s32.f32 %v703
        %v1216 = vcvt.s32.f32 %v704
        %v1217 = vcvt.s32.f32 %v705
        %v1218 = vcvt.s32.f32 %v706
        %v1219 = vcvt.s32.f32 %v707
        %v1220 = vcvt.s32.f32 %v708
        %v1221 = vcvt.s32.f32 %v709
        %v1222 = vcvt.s32.f32 %v710
        %v1223 = vcvt.s32.f32 %v711
        %v1224 = vcvt.s32.f32 %v712
        %v1225 = vcvt.s32.f32 %v713
        %v1226 = vcvt.s32.f32 %v714
        %v1227 = vcvt.s32.f32 %v715
        %v1228 = vcvt.s32.f32 %v716
        %v1229 = vcvt.s32.f32 %v717
        %v1230 = vcvt.s32.f32 %v718
        %v1231 = vcvt.s32.f32 %v719
        %v1232 = vcvt.s32.f32 %v720
        %v1233 = vcvt.s32.f32 %v721
        %v1234 = vcvt.s32.f32 %v722
        %v1235 = vcvt.s32.f32 %v723
        %v1236 = vcvt.s32.f32 %v724
        %v1237 = vcvt.s32.f32 %v725
        %v1238 = vcvt.s32.f32 %v726
        %v1239 = vcvt.s32.f32 %v727
        %v1240 = vcvt.s32.f32 %v728
        %v1241 = vcvt.s32.f32 %v729
        %v1242 = vcvt.s32.f32 %v730
        %v1243 = vcvt.s32.f32 %v731
        %v1244 = vcvt.s32.f32 %v732
        %v1245 = vcvt.s32.f32 %v733
        %v1246 = vcvt.s32.f32 %v734
        %v1247 = vcvt.s32.f32 %v735
        %v1248 = vcvt.s32.f32 %v736
        %v1249 = vcvt.s32.f32 %v737
        %v1250 = vcvt.s32.f32 %v738
        %v1251 = vcvt.s32.f32 %v739
        %v1252 = vcvt.s32.f32 %v740
        %v1253 = vcvt.s32.f32 %v741
        %v1254 = vcvt.s32.f32 %v742
        %v1255 = vcvt.s32.f32 %v743
        %v1256 = vcvt.s32.f32 %v744
        %v1257 = vcvt.s32.f32 %v745
        %v1258 = vcvt.s32.f32 %v746
        %v1259 = vcvt.s32.f32 %v747
        %v1260 = vcvt.s32.f32 %v748
        %v1261 = vcvt.s32.f32 %v749
        %v1262 = vcvt.s32.f32 %v750
        %v1263 = vcvt.s32.f32 %v751
        %v1264 = vcvt.s32.f32 %v752
        %v1265 = vcvt.s32.f32 %v753
        %v1266 = vcvt.s32.f32 %v754
        %v1267 = vcvt.s32.f32 %v755
        %v1268 = vcvt.s32.f32 %v756
        %v1269 = vcvt.s32.f32 %v757
        %v1270 = vcvt.s32.f32 %v758
        %v1271 = vcvt.s32.f32 %v759
        %v1272 = vcvt.s32.f32 %v760
        %v1273 = vcvt.s32.f32 %v761
        %v1274 = vcvt.s32.f32 %v762
        %v1275 = vcvt.s32.f32 %v763
        %v1276 = vcvt.s32.f32 %v764
        %v1277 = vcvt.s32.f32 %v765
        %v1278 = vcvt.s32.f32 %v766
        %v1279 = vcvt.s32.f32 %v767
        %v1280 = vcvt.s32.f32 %v768
        %v1281 = vcvt.s32.f32 %v769
        %v1282 = vcvt.s32.f32 %v770
        %v1283 = vcvt.s32.f32 %v771
        %v1284 = vcvt.s32.f32 %v772
        %v1285 = vcvt.s32.f32 %v773
        %v1286 = vcvt.s32.f32 %v774
        %v1287 = vcvt.s32.f32 %v775
        %v1288 = vcvt.s32.f32 %v776
        %v1289 = vcvt.s32.f32 %v777
        %v1290 = vcvt.s32.f32 %v778
        %v1291 = vcvt.s32.f32 %v779
        %v1292 = vcvt.s32.f32 %v780
        %v1293 = vcvt.s32.f32 %v781
        %v1294 = vcvt.s32.f32 %v782
        %v1295 = vcvt.s32.f32 %v783
        %v1296 = vcvt.s32.f32 %v784
        %v1297 = vcvt.s32.f32 %v785
        %v1298 = vcvt.s32.f32 %v786
        %v1299 = vcvt.s32.f32 %v787
        %v1300 = vcvt.s32.f32 %v788
        %v1301 = vcvt.s32.f32 %v789
        %v1302 = vcvt.s32.f32 %v790
        %v1303 = vcvt.s32.f32 %v791
        %v1304 = vcvt.s32.f32 %v792
        %v1305 = vcvt.s32.f32 %v793
        %v1306 = vcvt.s32.f32 %v794
        %v1307 = vcvt.s32.f32 %v795
        %v1308 = vcvt.s32.f32 %v796
        %v1309 = vcvt.s32.f32 %v797
        %v1310 = vcvt.s32.f32 %v798
        %v1311 = vcvt.s32.f32 %v799
        %v1312 = vcvt.s32.f32 %v800
        %v1313 = vcvt.s32.f32 %v801
        %v1314 = vcvt.s32.f32 %v802
        %v1315 = vcvt.s32.f32 %v803
        %v1316 = vcvt.s32.f32 %v804
        %v1317 = vcvt.s32.f32 %v805
        %v1318 = vcvt.s32.f32 %v806
        %v1319 = vcvt.s32.f32 %v807
        %v1320 = vcvt.s32.f32 %v808
        %v1321 = vcvt.s32.f32 %v809
        %v1322 = vcvt.s32.f32 %v810
        %v1323 = vcvt.s32.f32 %v811
        %v1324 = vcvt.s32.f32 %v812
        %v1325 = vcvt.s32.f32 %v813
        %v1326 = vcvt.s32.f32 %v814
        %v1327 = vcvt.s32.f32 %v815
        %v1328 = vcvt.s32.f32 %v816
        %v1329 = vcvt.s32.f32 %v817
        %v1330 = vcvt.s32.f32 %v818
        %v1331 = vcvt.s32.f32 %v819
        %v1332 = vcvt.s32.f32 %v820
        %v1333 = vcvt.s32.f32 %v821
        %v1334 = vcvt.s32.f32 %v822
        %v1335 = vcvt.s32.f32 %v823
        %v1336 = vcvt.s32.f32 %v824
        %v1337 = vcvt.s32.f32 %v825
        %v1338 = vcvt.s32.f32 %v826
        %v1339 = vcvt.s32.f32 %v827
        %v1340 = vcvt.s32.f32 %v828
        %v1341 = vcvt.s32.f32 %v829
        %v1342 = vcvt.s32.f32 %v830
        %v1343 = vcvt.s32.f32 %v831
        %v1344 = vcvt.s32.f32 %v832
        %v1345 = vcvt.s32.f32 %v833
        %v1346 = vcvt.s32.f32 %v834
        %v1347 = vcvt.s32.f32 %v835
        %v1348 = vcvt.s32.f32 %v836
        %v1349 = vcvt.s32.f32 %v837
        %v1350 = vcvt.s32.f32 %v838
        %v1351 = vcvt.s32.f32 %v839
        %v1352 = vcvt.s32.f32 %v840
        %v1353 = vcvt.s32.f32 %v841
        %v1354 = vcvt.s32.f32 %v842
        %v1355 = vcvt.s32.f32 %v843
        %v1356 = vcvt.s32.f32 %v844
        %v1357 = vcvt.s32.f32 %v845
        %v1358 = vcvt.s32.f32 %v846
        %v1359 = vcvt.s32.f32 %v847
        %v1360 = vcvt.s32.f32 %v848
        %v1361 = vcvt.s32.f32 %v849
        %v1362 = vcvt.s32.f32 %v850
        %v1363 = vcvt.s32.f32 %v851
        %v1364 = vcvt.s32.f32 %v852
        %v1365 = vcvt.s32.f32 %v853
        %v1366 = vcvt.s32.f32 %v854
        %v1367 = vcvt.s32.f32 %v855
        %v1368 = vcvt.s32.f32 %v856
        %v1369 = vcvt.s32.f32 %v857
        %v1370 = vcvt.s32.f32 %v858
        %v1371 = vcvt.s32.f32 %v859
        %v1372 = vcvt.s32.f32 %v860
        %v1373 = vcvt.s32.f32 %v861
        %v1374 = vcvt.s32.f32 %v862
        %v1375 = vcvt.s32.f32 %v863
        %v1376 = vcvt.s32.f32 %v864
        %v1377 = vcvt.s32.f32 %v865
        %v1378 = vcvt.s32.f32 %v866
        %v1379 = vcvt.s32.f32 %v867
        %v1380 = vcvt.s32.f32 %v868
        %v1381 = vcvt.s32.f32 %v869
        %v1382 = vcvt.s32.f32 %v870
        %v1383 = vcvt.s32.f32 %v871
        %v1384 = vcvt.s32.f32 %v872
        %v1385 = vcvt.s32.f32 %v873
        %v1386 = vcvt.s32.f32 %v874
        %v1387 = vcvt.s32.f32 %v875
        %v1388 = vcvt.s32.f32 %v876
        %v1389 = vcvt.s32.f32 %v877
        %v1390 = vcvt.s32.f32 %v878
        %v1391 = vcvt.s32.f32 %v879
        %v1392 = vcvt.s32.f32 %v880
        %v1393 = vcvt.s32.f32 %v881
        %v1394 = vcvt.s32.f32 %v882
        %v1395 = vcvt.s32.f32 %v883
        %v1396 = vcvt.s32.f32 %v884
        %v1397 = vcvt.s32.f32 %v885
        %v1398 = vcvt.s32.f32 %v886
        %v1399 = vcvt.s32.f32 %v887
        %v1400 = vcvt.s32.f32 %v888
        %v1401 = vcvt.s32.f32 %v889
        %v1402 = vcvt.s32.f32 %v890
        %v1403 = vcvt.s32.f32 %v891
        %v1404 = vcvt.s32.f32 %v892
        %v1405 = vcvt.s32.f32 %v893
        %v1406 = vcvt.s32.f32 %v894
        %v1407 = vcvt.s32.f32 %v895
        %v1408 = vcvt.s32.f32 %v896
        %v1409 = vcvt.s32.f32 %v897
        %v1410 = vcvt.s32.f32 %v898
        %v1411 = vcvt.s32.f32 %v899
        %v1412 = vcvt.s32.f32 %v900
        %v1413 = vcvt.s32.f32 %v901
        %v1414 = vcvt.s32.f32 %v902
        %v1415 = vcvt.s32.f32 %v903
        %v1416 = vcvt.s32.f32 %v904
        %v1417 = vcvt.s32.f32 %v905
        %v1418 = vcvt.s32.f32 %v906
        %v1419 = vcvt.s32.f32 %v907
        %v1420 = vcvt.s32.f32 %v908
        %v1421 = vcvt.s32.f32 %v909
        %v1422 = vcvt.s32.f32 %v910
        %v1423 = vcvt.s32.f32 %v911
        %v1424 = vcvt.s32.f32 %v912
        %v1425 = vcvt.s32.f32 %v913
        %v1426 = vcvt.s32.f32 %v914
        %v1427 = vcvt.s32.f32 %v915
        %v1428 = vcvt.s32.f32 %v916
        %v1429 = vcvt.s32.f32 %v917
        %v1430 = vcvt.s32.f32 %v918
        %v1431 = vcvt.s32.f32 %v919
        %v1432 = vcvt.s32.f32 %v920
        %v1433 = vcvt.s32.f32 %v921
        %v1434 = vcvt.s32.f32 %v922
        %v1435 = vcvt.s32.f32 %v923
        %v1436 = vcvt.s32.f32 %v924
        %v1437 = vcvt.s32.f32 %v925
        %v1438 = vcvt.s32.f32 %v926
        %v1439 = vcvt.s32.f32 %v927
        %v1440 = vcvt.s32.f32 %v928
        %v1441 = vcvt.s32.f32 %v929
        %v1442 = vcvt.s32.f32 %v930
        %v1443 = vcvt.s32.f32 %v931
        %v1444 = vcvt.s32.f32 %v932
        %v1445 = vcvt.s32.f32 %v933
        %v1446 = vcvt.s32.f32 %v934
        %v1447 = vcvt.s32.f32 %v935
        %v1448 = vcvt.s32.f32 %v936
        %v1449 = vcvt.s32.f32 %v937
        %v1450 = vcvt.s32.f32 %v938
        %v1451 = vcvt.s32.f32 %v939
        %v1452 = vcvt.s32.f32 %v940
        %v1453 = vcvt.s32.f32 %v941
        %v1454 = vcvt.s32.f32 %v942
        %v1455 = vcvt.s32.f32 %v943
        %v1456 = vcvt.s32.f32 %v944
        %v1457 = vcvt.s32.f32 %v945
        %v1458 = vcvt.s32.f32 %v946
        %v1459 = vcvt.s32.f32 %v947
        %v1460 = vcvt.s32.f32 %v948
        %v1461 = vcvt.s32.f32 %v949
        %v1462 = vcvt.s32.f32 %v950
        %v1463 = vcvt.s32.f32 %v951
        %v1464 = vcvt.s32.f32 %v952
        %v1465 = vcvt.s32.f32 %v953
        %v1466 = vcvt.s32.f32 %v954
        %v1467 = vcvt.s32.f32 %v955
        %v1468 = vcvt.s32.f32 %v956
        %v1469 = vcvt.s32.f32 %v957
        %v1470 = vcvt.s32.f32 %v958
        %v1471 = vcvt.s32.f32 %v959
        %v1472 = vcvt.s32.f32 %v960
        %v1473 = vcvt.s32.f32 %v961
        %v1474 = vcvt.s32.f32 %v962
        %v1475 = vcvt.s32.f32 %v963
        %v1476 = vcvt.s32.f32 %v964
        %v1477 = vcvt.s32.f32 %v965
        %v1478 = vcvt.s32.f32 %v966
        %v1479 = vcvt.s32.f32 %v967
        %v1480 = vcvt.s32.f32 %v968
        %v1481 = vcvt.s32.f32 %v969
        %v1482 = vcvt.s32.f32 %v970
        %v1483 = vcvt.s32.f32 %v971
        %v1484 = vcvt.s32.f32 %v972
        %v1485 = vcvt.s32.f32 %v973
        %v1486 = vcvt.s32.f32 %v974
        %v1487 = vcvt.s32.f32 %v975
        %v1488 = vcvt.s32.f32 %v976
        %v1489 = vcvt.s32.f32 %v977
        %v1490 = vcvt.s32.f32 %v978
        %v1491 = vcvt.s32.f32 %v979
        %v1492 = vcvt.s32.f32 %v980
        %v1493 = vcvt.s32.f32 %v981
        %v1494 = vcvt.s32.f32 %v982
        %v1495 = vcvt.s32.f32 %v983
        %v1496 = vcvt.s32.f32 %v984
        %v1497 = vcvt.s32.f32 %v985
        %v1498 = vcvt.s32.f32 %v986
        %v1499 = vcvt.s32.f32 %v987
        %v1500 = vcvt.s32.f32 %v988
        %v1501 = vcvt.s32.f32 %v989
        %v1502 = vcvt.s32.f32 %v990
        %v1503 = vcvt.s32.f32 %v991
        %v1504 = vcvt.s32.f32 %v992
        %v1505 = vcvt.s32.f32 %v993
        %v1506 = vcvt.s32.f32 %v994
        %v1507 = vcvt.s32.f32 %v995
        %v1508 = vcvt.s32.f32 %v996
        %v1509 = vcvt.s32.f32 %v997
        %v1510 = vcvt.s32.f32 %v998
        %v1511 = vcvt.s32.f32 %v999
        %v1512 = vcvt.s32.f32 %v1000
        %v1513 = vcvt.s32.f32 %v1001
        %v1514 = vcvt.s32.f32 %v1002
        %v1515 = vcvt.s32.f32 %v1003
        %v1516 = vcvt.s32.f32 %v1004
        %v1517 = vcvt.s32.f32 %v1005
        %v1518 = vcvt.s32.f32 %v1006
        %v1519 = vcvt.s32.f32 %v1007
        %v1520 = vcvt.s32.f32 %v1008
        %v1521 = vcvt.s32.f32 %v1009
        %v1522 = vcvt.s32.f32 %v1010
        %v1523 = vcvt.s32.f32 %v1011
        %v1524 = vcvt.s32.f32 %v1012
        %v1525 = vcvt.s32.f32 %v1013
        %v1526 = vcvt.s32.f32 %v1014
        %v1527 = vcvt.s32.f32 %v1015
        %v1528 = vcvt.s32.f32 %v1016
        %v1529 = vcvt.s32.f32 %v1017
        %v1530 = vcvt.s32.f32 %v1018
        %v1531 = vcvt.s32.f32 %v1019
        %v1532 = vcvt.s32.f32 %v1020
        %v1533 = vcvt.s32.f32 %v1021
        %v1534 = vcvt.s32.f32 %v1022
        %v1535 = vcvt.s32.f32 %v1023
        %v1536 = vcvt.s32.f32 %v1024
        %v1537 = vcvt.s32.f32 %v1025
        %v1538 = vcvt.s32.f32 %v1026
        %v1539 = vcvt.s32.f32 %v1027
        %v1540 = vcvt.s32.f32 %v1028
        %v1541 = vcvt.s32.f32 %v1029
        %v1542 = vcvt.s32.f32 %v1030
        %v1543 = vcvt.s32.f32 %v1031
        %v1544 = vcvt.s32.f32 %v1032
        %v1545 = vcvt.s32.f32 %v1033
        %v1546 = vcvt.s32.f32 %v1034
        %v1547 = vcvt.s32.f32 %v1035
        %v1548 = vcvt.s32.f32 %v1036
        %v1549 = vcvt.s32.f32 %v1037
        %v1550 = vcvt.s32.f32 %v1038
        %v1551 = vcvt.s32.f32 %v1039
        %v1552 = vcvt.s32.f32 %v1040
        %v1553 = vcvt.s32.f32 %v1041
        %v1554 = vcvt.s32.f32 %v1042
        %v1555 = vcvt.s32.f32 %v1043
        %v1556 = vcvt.s32.f32 %v1044
        %v1557 = vcvt.s32.f32 %v1045
        %v1558 = vcvt.s32.f32 %v1046
        %v1559 = vcvt.s32.f32 %v1047
        %v1560 = vcvt.s32.f32 %v1048
        %v1561 = vcvt.s32.f32 %v1049
        %v1562 = vcvt.s32.f32 %v1050
        %v1563 = vcvt.s32.f32 %v1051
        %v1564 = vcvt.s32.f32 %v1052
        %v1565 = vcvt.s32.f32 %v1053
        %v1566 = vcvt.s32.f32 %v1054
        %v1567 = vcvt.s32.f32 %v1055
        %v1568 = vcvt.s32.f32 %v1056
        %v1569 = vcvt.s32.f32 %v1057
        %v1570 = vcvt.s32.f32 %v1058
        %v1571 = vcvt.s32.f32 %v1059
        %v1572 = vcvt.s32.f32 %v1060
        %v1573 = vcvt.s32.f32 %v1061
        %v1574 = vcvt.s32.f32 %v1062
        %v1575 = vcvt.s32.f32 %v1063
        %v1576 = vpack.c.bf16 %v1072, %v1064
        %v1577 = vpack.c.bf16 %v1073, %v1065
        %v1578 = vpack.c.bf16 %v1074, %v1066
        %v1579 = vpack.c.bf16 %v1075, %v1067
        %v1580 = vpack.c.bf16 %v1076, %v1068
        %v1581 = vpack.c.bf16 %v1077, %v1069
        %v1582 = vpack.c.bf16 %v1078, %v1070
        %v1583 = vpack.c.bf16 %v1079, %v1071
        %v1584 = vpack.c.bf16 %v1088, %v1080
        %v1585 = vpack.c.bf16 %v1089, %v1081
        %v1586 = vpack.c.bf16 %v1090, %v1082
        %v1587 = vpack.c.bf16 %v1091, %v1083
        %v1588 = vpack.c.bf16 %v1092, %v1084
        %v1589 = vpack.c.bf16 %v1093, %v1085
        %v1590 = vpack.c.bf16 %v1094, %v1086
        %v1591 = vpack.c.bf16 %v1095, %v1087
        %v1592 = vpack.c.bf16 %v1104, %v1096
        %v1593 = vpack.c.bf16 %v1105, %v1097
        %v1594 = vpack.c.bf16 %v1106, %v1098
        %v1595 = vpack.c.bf16 %v1107, %v1099
        %v1596 = vpack.c.bf16 %v1108, %v1100
        %v1597 = vpack.c.bf16 %v1109, %v1101
        %v1598 = vpack.c.bf16 %v1110, %v1102
        %v1599 = vpack.c.bf16 %v1111, %v1103
        %v1600 = vpack.c.bf16 %v1120, %v1112
        %v1601 = vpack.c.bf16 %v1121, %v1113
        %v1602 = vpack.c.bf16 %v1122, %v1114
        %v1603 = vpack.c.bf16 %v1123, %v1115
        %v1604 = vpack.c.bf16 %v1124, %v1116
        %v1605 = vpack.c.bf16 %v1125, %v1117
        %v1606 = vpack.c.bf16 %v1126, %v1118
        %v1607 = vpack.c.bf16 %v1127, %v1119
        %v1608 = vpack.c.bf16 %v1136, %v1128
        %v1609 = vpack.c.bf16 %v1137, %v1129
        %v1610 = vpack.c.bf16 %v1138, %v1130
        %v1611 = vpack.c.bf16 %v1139, %v1131
        %v1612 = vpack.c.bf16 %v1140, %v1132
        %v1613 = vpack.c.bf16 %v1141, %v1133
        %v1614 = vpack.c.bf16 %v1142, %v1134
        %v1615 = vpack.c.bf16 %v1143, %v1135
        %v1616 = vpack.c.bf16 %v1152, %v1144
        %v1617 = vpack.c.bf16 %v1153, %v1145
        %v1618 = vpack.c.bf16 %v1154, %v1146
        %v1619 = vpack.c.bf16 %v1155, %v1147
        %v1620 = vpack.c.bf16 %v1156, %v1148
        %v1621 = vpack.c.bf16 %v1157, %v1149
        %v1622 = vpack.c.bf16 %v1158, %v1150
        %v1623 = vpack.c.bf16 %v1159, %v1151
        %v1624 = vpack.c.bf16 %v1168, %v1160
        %v1625 = vpack.c.bf16 %v1169, %v1161
        %v1626 = vpack.c.bf16 %v1170, %v1162
        %v1627 = vpack.c.bf16 %v1171, %v1163
        %v1628 = vpack.c.bf16 %v1172, %v1164
        %v1629 = vpack.c.bf16 %v1173, %v1165
        %v1630 = vpack.c.bf16 %v1174, %v1166
        %v1631 = vpack.c.bf16 %v1175, %v1167
        %v1632 = vpack.c.bf16 %v1184, %v1176
        %v1633 = vpack.c.bf16 %v1185, %v1177
        %v1634 = vpack.c.bf16 %v1186, %v1178
        %v1635 = vpack.c.bf16 %v1187, %v1179
        %v1636 = vpack.c.bf16 %v1188, %v1180
        %v1637 = vpack.c.bf16 %v1189, %v1181
        %v1638 = vpack.c.bf16 %v1190, %v1182
        %v1639 = vpack.c.bf16 %v1191, %v1183
        %v1640 = vpack.c.bf16 %v1200, %v1192
        %v1641 = vpack.c.bf16 %v1201, %v1193
        %v1642 = vpack.c.bf16 %v1202, %v1194
        %v1643 = vpack.c.bf16 %v1203, %v1195
        %v1644 = vpack.c.bf16 %v1204, %v1196
        %v1645 = vpack.c.bf16 %v1205, %v1197
        %v1646 = vpack.c.bf16 %v1206, %v1198
        %v1647 = vpack.c.bf16 %v1207, %v1199
        %v1648 = vpack.c.bf16 %v1216, %v1208
        %v1649 = vpack.c.bf16 %v1217, %v1209
        %v1650 = vpack.c.bf16 %v1218, %v1210
        %v1651 = vpack.c.bf16 %v1219, %v1211
        %v1652 = vpack.c.bf16 %v1220, %v1212
        %v1653 = vpack.c.bf16 %v1221, %v1213
        %v1654 = vpack.c.bf16 %v1222, %v1214
        %v1655 = vpack.c.bf16 %v1223, %v1215
        %v1656 = vpack.c.bf16 %v1232, %v1224
        %v1657 = vpack.c.bf16 %v1233, %v1225
        %v1658 = vpack.c.bf16 %v1234, %v1226
        %v1659 = vpack.c.bf16 %v1235, %v1227
        %v1660 = vpack.c.bf16 %v1236, %v1228
        %v1661 = vpack.c.bf16 %v1237, %v1229
        %v1662 = vpack.c.bf16 %v1238, %v1230
        %v1663 = vpack.c.bf16 %v1239, %v1231
        %v1664 = vpack.c.bf16 %v1248, %v1240
        %v1665 = vpack.c.bf16 %v1249, %v1241
        %v1666 = vpack.c.bf16 %v1250, %v1242
        %v1667 = vpack.c.bf16 %v1251, %v1243
        %v1668 = vpack.c.bf16 %v1252, %v1244
        %v1669 = vpack.c.bf16 %v1253, %v1245
        %v1670 = vpack.c.bf16 %v1254, %v1246
        %v1671 = vpack.c.bf16 %v1255, %v1247
        %v1672 = vpack.c.bf16 %v1264, %v1256
        %v1673 = vpack.c.bf16 %v1265, %v1257
        %v1674 = vpack.c.bf16 %v1266, %v1258
        %v1675 = vpack.c.bf16 %v1267, %v1259
        %v1676 = vpack.c.bf16 %v1268, %v1260
        %v1677 = vpack.c.bf16 %v1269, %v1261
        %v1678 = vpack.c.bf16 %v1270, %v1262
        %v1679 = vpack.c.bf16 %v1271, %v1263
        %v1680 = vpack.c.bf16 %v1280, %v1272
        %v1681 = vpack.c.bf16 %v1281, %v1273
        %v1682 = vpack.c.bf16 %v1282, %v1274
        %v1683 = vpack.c.bf16 %v1283, %v1275
        %v1684 = vpack.c.bf16 %v1284, %v1276
        %v1685 = vpack.c.bf16 %v1285, %v1277
        %v1686 = vpack.c.bf16 %v1286, %v1278
        %v1687 = vpack.c.bf16 %v1287, %v1279
        %v1688 = vpack.c.bf16 %v1296, %v1288
        %v1689 = vpack.c.bf16 %v1297, %v1289
        %v1690 = vpack.c.bf16 %v1298, %v1290
        %v1691 = vpack.c.bf16 %v1299, %v1291
        %v1692 = vpack.c.bf16 %v1300, %v1292
        %v1693 = vpack.c.bf16 %v1301, %v1293
        %v1694 = vpack.c.bf16 %v1302, %v1294
        %v1695 = vpack.c.bf16 %v1303, %v1295
        %v1696 = vpack.c.bf16 %v1312, %v1304
        %v1697 = vpack.c.bf16 %v1313, %v1305
        %v1698 = vpack.c.bf16 %v1314, %v1306
        %v1699 = vpack.c.bf16 %v1315, %v1307
        %v1700 = vpack.c.bf16 %v1316, %v1308
        %v1701 = vpack.c.bf16 %v1317, %v1309
        %v1702 = vpack.c.bf16 %v1318, %v1310
        %v1703 = vpack.c.bf16 %v1319, %v1311
        %v1704 = vpack.c.bf16 %v1328, %v1320
        %v1705 = vpack.c.bf16 %v1329, %v1321
        %v1706 = vpack.c.bf16 %v1330, %v1322
        %v1707 = vpack.c.bf16 %v1331, %v1323
        %v1708 = vpack.c.bf16 %v1332, %v1324
        %v1709 = vpack.c.bf16 %v1333, %v1325
        %v1710 = vpack.c.bf16 %v1334, %v1326
        %v1711 = vpack.c.bf16 %v1335, %v1327
        %v1712 = vpack.c.bf16 %v1344, %v1336
        %v1713 = vpack.c.bf16 %v1345, %v1337
        %v1714 = vpack.c.bf16 %v1346, %v1338
        %v1715 = vpack.c.bf16 %v1347, %v1339
        %v1716 = vpack.c.bf16 %v1348, %v1340
        %v1717 = vpack.c.bf16 %v1349, %v1341
        %v1718 = vpack.c.bf16 %v1350, %v1342
        %v1719 = vpack.c.bf16 %v1351, %v1343
        %v1720 = vpack.c.bf16 %v1360, %v1352
        %v1721 = vpack.c.bf16 %v1361, %v1353
        %v1722 = vpack.c.bf16 %v1362, %v1354
        %v1723 = vpack.c.bf16 %v1363, %v1355
        %v1724 = vpack.c.bf16 %v1364, %v1356
        %v1725 = vpack.c.bf16 %v1365, %v1357
        %v1726 = vpack.c.bf16 %v1366, %v1358
        %v1727 = vpack.c.bf16 %v1367, %v1359
        %v1728 = vpack.c.bf16 %v1376, %v1368
        %v1729 = vpack.c.bf16 %v1377, %v1369
        %v1730 = vpack.c.bf16 %v1378, %v1370
        %v1731 = vpack.c.bf16 %v1379, %v1371
        %v1732 = vpack.c.bf16 %v1380, %v1372
        %v1733 = vpack.c.bf16 %v1381, %v1373
        %v1734 = vpack.c.bf16 %v1382, %v1374
        %v1735 = vpack.c.bf16 %v1383, %v1375
        %v1736 = vpack.c.bf16 %v1392, %v1384
        %v1737 = vpack.c.bf16 %v1393, %v1385
        %v1738 = vpack.c.bf16 %v1394, %v1386
        %v1739 = vpack.c.bf16 %v1395, %v1387
        %v1740 = vpack.c.bf16 %v1396, %v1388
        %v1741 = vpack.c.bf16 %v1397, %v1389
        %v1742 = vpack.c.bf16 %v1398, %v1390
        %v1743 = vpack.c.bf16 %v1399, %v1391
        %v1744 = vpack.c.bf16 %v1408, %v1400
        %v1745 = vpack.c.bf16 %v1409, %v1401
        %v1746 = vpack.c.bf16 %v1410, %v1402
        %v1747 = vpack.c.bf16 %v1411, %v1403
        %v1748 = vpack.c.bf16 %v1412, %v1404
        %v1749 = vpack.c.bf16 %v1413, %v1405
        %v1750 = vpack.c.bf16 %v1414, %v1406
        %v1751 = vpack.c.bf16 %v1415, %v1407
        %v1752 = vpack.c.bf16 %v1424, %v1416
        %v1753 = vpack.c.bf16 %v1425, %v1417
        %v1754 = vpack.c.bf16 %v1426, %v1418
        %v1755 = vpack.c.bf16 %v1427, %v1419
        %v1756 = vpack.c.bf16 %v1428, %v1420
        %v1757 = vpack.c.bf16 %v1429, %v1421
        %v1758 = vpack.c.bf16 %v1430, %v1422
        %v1759 = vpack.c.bf16 %v1431, %v1423
        %v1760 = vpack.c.bf16 %v1440, %v1432
        %v1761 = vpack.c.bf16 %v1441, %v1433
        %v1762 = vpack.c.bf16 %v1442, %v1434
        %v1763 = vpack.c.bf16 %v1443, %v1435
        %v1764 = vpack.c.bf16 %v1444, %v1436
        %v1765 = vpack.c.bf16 %v1445, %v1437
        %v1766 = vpack.c.bf16 %v1446, %v1438
        %v1767 = vpack.c.bf16 %v1447, %v1439
        %v1768 = vpack.c.bf16 %v1456, %v1448
        %v1769 = vpack.c.bf16 %v1457, %v1449
        %v1770 = vpack.c.bf16 %v1458, %v1450
        %v1771 = vpack.c.bf16 %v1459, %v1451
        %v1772 = vpack.c.bf16 %v1460, %v1452
        %v1773 = vpack.c.bf16 %v1461, %v1453
        %v1774 = vpack.c.bf16 %v1462, %v1454
        %v1775 = vpack.c.bf16 %v1463, %v1455
        %v1776 = vpack.c.bf16 %v1472, %v1464
        %v1777 = vpack.c.bf16 %v1473, %v1465
        %v1778 = vpack.c.bf16 %v1474, %v1466
        %v1779 = vpack.c.bf16 %v1475, %v1467
        %v1780 = vpack.c.bf16 %v1476, %v1468
        %v1781 = vpack.c.bf16 %v1477, %v1469
        %v1782 = vpack.c.bf16 %v1478, %v1470
        %v1783 = vpack.c.bf16 %v1479, %v1471
        %v1784 = vpack.c.bf16 %v1488, %v1480
        %v1785 = vpack.c.bf16 %v1489, %v1481
        %v1786 = vpack.c.bf16 %v1490, %v1482
        %v1787 = vpack.c.bf16 %v1491, %v1483
        %v1788 = vpack.c.bf16 %v1492, %v1484
        %v1789 = vpack.c.bf16 %v1493, %v1485
        %v1790 = vpack.c.bf16 %v1494, %v1486
        %v1791 = vpack.c.bf16 %v1495, %v1487
        %v1792 = vpack.c.bf16 %v1504, %v1496
        %v1793 = vpack.c.bf16 %v1505, %v1497
        %v1794 = vpack.c.bf16 %v1506, %v1498
        %v1795 = vpack.c.bf16 %v1507, %v1499
        %v1796 = vpack.c.bf16 %v1508, %v1500
        %v1797 = vpack.c.bf16 %v1509, %v1501
        %v1798 = vpack.c.bf16 %v1510, %v1502
        %v1799 = vpack.c.bf16 %v1511, %v1503
        %v1800 = vpack.c.bf16 %v1520, %v1512
        %v1801 = vpack.c.bf16 %v1521, %v1513
        %v1802 = vpack.c.bf16 %v1522, %v1514
        %v1803 = vpack.c.bf16 %v1523, %v1515
        %v1804 = vpack.c.bf16 %v1524, %v1516
        %v1805 = vpack.c.bf16 %v1525, %v1517
        %v1806 = vpack.c.bf16 %v1526, %v1518
        %v1807 = vpack.c.bf16 %v1527, %v1519
        %v1808 = vpack.c.bf16 %v1536, %v1528
        %v1809 = vpack.c.bf16 %v1537, %v1529
        %v1810 = vpack.c.bf16 %v1538, %v1530
        %v1811 = vpack.c.bf16 %v1539, %v1531
        %v1812 = vpack.c.bf16 %v1540, %v1532
        %v1813 = vpack.c.bf16 %v1541, %v1533
        %v1814 = vpack.c.bf16 %v1542, %v1534
        %v1815 = vpack.c.bf16 %v1543, %v1535
        %v1816 = vpack.c.bf16 %v1552, %v1544
        %v1817 = vpack.c.bf16 %v1553, %v1545
        %v1818 = vpack.c.bf16 %v1554, %v1546
        %v1819 = vpack.c.bf16 %v1555, %v1547
        %v1820 = vpack.c.bf16 %v1556, %v1548
        %v1821 = vpack.c.bf16 %v1557, %v1549
        %v1822 = vpack.c.bf16 %v1558, %v1550
        %v1823 = vpack.c.bf16 %v1559, %v1551
        %v1824 = vpack.c.bf16 %v1568, %v1560
        %v1825 = vpack.c.bf16 %v1569, %v1561
        %v1826 = vpack.c.bf16 %v1570, %v1562
        %v1827 = vpack.c.bf16 %v1571, %v1563
        %v1828 = vpack.c.bf16 %v1572, %v1564
        %v1829 = vpack.c.bf16 %v1573, %v1565
        %v1830 = vpack.c.bf16 %v1574, %v1566
        %v1831 = vpack.c.bf16 %v1575, %v1567
        %v1832 = vld [vmem:[#allocation5] sm:$0xf]
        %v1833 = vld [vmem:[#allocation5 + $0x4] sm:$0xf]
        %v1834 = vld [vmem:[#allocation5 + $0x8] sm:$0xf]
        %v1835 = vld [vmem:[#allocation5 + $0xc] sm:$0xf]
        %v1836 = vld [vmem:[#allocation5 + $0x10] sm:$0xf]
        %v1837 = vld [vmem:[#allocation5 + $0x14] sm:$0xf]
        %v1838 = vld [vmem:[#allocation5 + $0x18] sm:$0xf]
        %v1839 = vld [vmem:[#allocation5 + $0x1c] sm:$0xf]
        %v1840 = vld [vmem:[#allocation5 + $0x20] sm:$0xf]
        %v1841 = vld [vmem:[#allocation5 + $0x24] sm:$0xf]
        %v1842 = vld [vmem:[#allocation5 + $0x28] sm:$0xf]
        %v1843 = vld [vmem:[#allocation5 + $0x2c] sm:$0xf]
        %v1844 = vld [vmem:[#allocation5 + $0x30] sm:$0xf]
        %v1845 = vld [vmem:[#allocation5 + $0x34] sm:$0xf]
        %v1846 = vld [vmem:[#allocation5 + $0x38] sm:$0xf]
        %v1847 = vld [vmem:[#allocation5 + $0x3c] sm:$0xf]
        %v1848 = vld [vmem:[#allocation5 + $0x40] sm:$0xf]
        %v1849 = vld [vmem:[#allocation5 + $0x44] sm:$0xf]
        %v1850 = vld [vmem:[#allocation5 + $0x48] sm:$0xf]
        %v1851 = vld [vmem:[#allocation5 + $0x4c] sm:$0xf]
        %v1852 = vld [vmem:[#allocation5 + $0x50] sm:$0xf]
        %v1853 = vld [vmem:[#allocation5 + $0x54] sm:$0xf]
        %v1854 = vld [vmem:[#allocation5 + $0x58] sm:$0xf]
        %v1855 = vld [vmem:[#allocation5 + $0x5c] sm:$0xf]
        %v1856 = vld [vmem:[#allocation5 + $0x60] sm:$0xf]
        %v1857 = vld [vmem:[#allocation5 + $0x64] sm:$0xf]
        %v1858 = vld [vmem:[#allocation5 + $0x68] sm:$0xf]
        %v1859 = vld [vmem:[#allocation5 + $0x6c] sm:$0xf]
        %v1860 = vld [vmem:[#allocation5 + $0x70] sm:$0xf]
        %v1861 = vld [vmem:[#allocation5 + $0x74] sm:$0xf]
        %v1862 = vld [vmem:[#allocation5 + $0x78] sm:$0xf]
        %v1863 = vld [vmem:[#allocation5 + $0x7c] sm:$0xf]
        %v1864 = vld [vmem:[#allocation5 + $0x80] sm:$0xf]
        %v1865 = vld [vmem:[#allocation5 + $0x84] sm:$0xf]
        %v1866 = vld [vmem:[#allocation5 + $0x88] sm:$0xf]
        %v1867 = vld [vmem:[#allocation5 + $0x8c] sm:$0xf]
        %v1868 = vld [vmem:[#allocation5 + $0x90] sm:$0xf]
        %v1869 = vld [vmem:[#allocation5 + $0x94] sm:$0xf]
        %v1870 = vld [vmem:[#allocation5 + $0x98] sm:$0xf]
        %v1871 = vld [vmem:[#allocation5 + $0x9c] sm:$0xf]
        %v1872 = vld [vmem:[#allocation5 + $0xa0] sm:$0xf]
        %v1873 = vld [vmem:[#allocation5 + $0xa4] sm:$0xf]
        %v1874 = vld [vmem:[#allocation5 + $0xa8] sm:$0xf]
        %v1875 = vld [vmem:[#allocation5 + $0xac] sm:$0xf]
        %v1876 = vld [vmem:[#allocation5 + $0xb0] sm:$0xf]
        %v1877 = vld [vmem:[#allocation5 + $0xb4] sm:$0xf]
        %v1878 = vld [vmem:[#allocation5 + $0xb8] sm:$0xf]
        %v1879 = vld [vmem:[#allocation5 + $0xbc] sm:$0xf]
        %v1880 = vld [vmem:[#allocation5 + $0xc0] sm:$0xf]
        %v1881 = vld [vmem:[#allocation5 + $0xc4] sm:$0xf]
        %v1882 = vld [vmem:[#allocation5 + $0xc8] sm:$0xf]
        %v1883 = vld [vmem:[#allocation5 + $0xcc] sm:$0xf]
        %v1884 = vld [vmem:[#allocation5 + $0xd0] sm:$0xf]
        %v1885 = vld [vmem:[#allocation5 + $0xd4] sm:$0xf]
        %v1886 = vld [vmem:[#allocation5 + $0xd8] sm:$0xf]
        %v1887 = vld [vmem:[#allocation5 + $0xdc] sm:$0xf]
        %v1888 = vld [vmem:[#allocation5 + $0xe0] sm:$0xf]
        %v1889 = vld [vmem:[#allocation5 + $0xe4] sm:$0xf]
        %v1890 = vld [vmem:[#allocation5 + $0xe8] sm:$0xf]
        %v1891 = vld [vmem:[#allocation5 + $0xec] sm:$0xf]
        %v1892 = vld [vmem:[#allocation5 + $0xf0] sm:$0xf]
        %v1893 = vld [vmem:[#allocation5 + $0xf4] sm:$0xf]
        %v1894 = vld [vmem:[#allocation5 + $0xf8] sm:$0xf]
        %v1895 = vld [vmem:[#allocation5 + $0xfc] sm:$0xf]
        %v1896 = vld [vmem:[#allocation5 + $0x100] sm:$0xf]
        %v1897 = vld [vmem:[#allocation5 + $0x104] sm:$0xf]
        %v1898 = vld [vmem:[#allocation5 + $0x108] sm:$0xf]
        %v1899 = vld [vmem:[#allocation5 + $0x10c] sm:$0xf]
        %v1900 = vld [vmem:[#allocation5 + $0x110] sm:$0xf]
        %v1901 = vld [vmem:[#allocation5 + $0x114] sm:$0xf]
        %v1902 = vld [vmem:[#allocation5 + $0x118] sm:$0xf]
        %v1903 = vld [vmem:[#allocation5 + $0x11c] sm:$0xf]
        %v1904 = vld [vmem:[#allocation5 + $0x120] sm:$0xf]
        %v1905 = vld [vmem:[#allocation5 + $0x124] sm:$0xf]
        %v1906 = vld [vmem:[#allocation5 + $0x128] sm:$0xf]
        %v1907 = vld [vmem:[#allocation5 + $0x12c] sm:$0xf]
        %v1908 = vld [vmem:[#allocation5 + $0x130] sm:$0xf]
        %v1909 = vld [vmem:[#allocation5 + $0x134] sm:$0xf]
        %v1910 = vld [vmem:[#allocation5 + $0x138] sm:$0xf]
        %v1911 = vld [vmem:[#allocation5 + $0x13c] sm:$0xf]
        %v1912 = vld [vmem:[#allocation5 + $0x140] sm:$0xf]
        %v1913 = vld [vmem:[#allocation5 + $0x144] sm:$0xf]
        %v1914 = vld [vmem:[#allocation5 + $0x148] sm:$0xf]
        %v1915 = vld [vmem:[#allocation5 + $0x14c] sm:$0xf]
        %v1916 = vld [vmem:[#allocation5 + $0x150] sm:$0xf]
        %v1917 = vld [vmem:[#allocation5 + $0x154] sm:$0xf]
        %v1918 = vld [vmem:[#allocation5 + $0x158] sm:$0xf]
        %v1919 = vld [vmem:[#allocation5 + $0x15c] sm:$0xf]
        %v1920 = vld [vmem:[#allocation5 + $0x160] sm:$0xf]
        %v1921 = vld [vmem:[#allocation5 + $0x164] sm:$0xf]
        %v1922 = vld [vmem:[#allocation5 + $0x168] sm:$0xf]
        %v1923 = vld [vmem:[#allocation5 + $0x16c] sm:$0xf]
        %v1924 = vld [vmem:[#allocation5 + $0x170] sm:$0xf]
        %v1925 = vld [vmem:[#allocation5 + $0x174] sm:$0xf]
        %v1926 = vld [vmem:[#allocation5 + $0x178] sm:$0xf]
        %v1927 = vld [vmem:[#allocation5 + $0x17c] sm:$0xf]
        %v1928 = vld [vmem:[#allocation5 + $0x180] sm:$0xf]
        %v1929 = vld [vmem:[#allocation5 + $0x184] sm:$0xf]
        %v1930 = vld [vmem:[#allocation5 + $0x188] sm:$0xf]
        %v1931 = vld [vmem:[#allocation5 + $0x18c] sm:$0xf]
        %v1932 = vld [vmem:[#allocation5 + $0x190] sm:$0xf]
        %v1933 = vld [vmem:[#allocation5 + $0x194] sm:$0xf]
        %v1934 = vld [vmem:[#allocation5 + $0x198] sm:$0xf]
        %v1935 = vld [vmem:[#allocation5 + $0x19c] sm:$0xf]
        %v1936 = vld [vmem:[#allocation5 + $0x1a0] sm:$0xf]
        %v1937 = vld [vmem:[#allocation5 + $0x1a4] sm:$0xf]
        %v1938 = vld [vmem:[#allocation5 + $0x1a8] sm:$0xf]
        %v1939 = vld [vmem:[#allocation5 + $0x1ac] sm:$0xf]
        %v1940 = vld [vmem:[#allocation5 + $0x1b0] sm:$0xf]
        %v1941 = vld [vmem:[#allocation5 + $0x1b4] sm:$0xf]
        %v1942 = vld [vmem:[#allocation5 + $0x1b8] sm:$0xf]
        %v1943 = vld [vmem:[#allocation5 + $0x1bc] sm:$0xf]
        %v1944 = vld [vmem:[#allocation5 + $0x1c0] sm:$0xf]
        %v1945 = vld [vmem:[#allocation5 + $0x1c4] sm:$0xf]
        %v1946 = vld [vmem:[#allocation5 + $0x1c8] sm:$0xf]
        %v1947 = vld [vmem:[#allocation5 + $0x1cc] sm:$0xf]
        %v1948 = vld [vmem:[#allocation5 + $0x1d0] sm:$0xf]
        %v1949 = vld [vmem:[#allocation5 + $0x1d4] sm:$0xf]
        %v1950 = vld [vmem:[#allocation5 + $0x1d8] sm:$0xf]
        %v1951 = vld [vmem:[#allocation5 + $0x1dc] sm:$0xf]
        %v1952 = vld [vmem:[#allocation5 + $0x1e0] sm:$0xf]
        %v1953 = vld [vmem:[#allocation5 + $0x1e4] sm:$0xf]
        %v1954 = vld [vmem:[#allocation5 + $0x1e8] sm:$0xf]
        %v1955 = vld [vmem:[#allocation5 + $0x1ec] sm:$0xf]
        %v1956 = vld [vmem:[#allocation5 + $0x1f0] sm:$0xf]
        %v1957 = vld [vmem:[#allocation5 + $0x1f4] sm:$0xf]
        %v1958 = vld [vmem:[#allocation5 + $0x1f8] sm:$0xf]
        %v1959 = vld [vmem:[#allocation5 + $0x1fc] sm:$0xf]
        %v2088 = vunpack.c.l.b16 %v1832
        %v2089 = vunpack.c.l.b16 %v1833
        %v2090 = vunpack.c.l.b16 %v1834
        %v2091 = vunpack.c.l.b16 %v1835
        %v2092 = vunpack.c.l.b16 %v1836
        %v2093 = vunpack.c.l.b16 %v1837
        %v2094 = vunpack.c.l.b16 %v1838
        %v2095 = vunpack.c.l.b16 %v1839
        %v2096 = vunpack.c.l.b16 %v1840
        %v2097 = vunpack.c.l.b16 %v1841
        %v2098 = vunpack.c.l.b16 %v1842
        %v2099 = vunpack.c.l.b16 %v1843
        %v2100 = vunpack.c.l.b16 %v1844
        %v2101 = vunpack.c.l.b16 %v1845
        %v2102 = vunpack.c.l.b16 %v1846
        %v2103 = vunpack.c.l.b16 %v1847
        %v2104 = vunpack.c.l.b16 %v1848
        %v2105 = vunpack.c.l.b16 %v1849
        %v2106 = vunpack.c.l.b16 %v1850
        %v2107 = vunpack.c.l.b16 %v1851
        %v2108 = vunpack.c.l.b16 %v1852
        %v2109 = vunpack.c.l.b16 %v1853
        %v2110 = vunpack.c.l.b16 %v1854
        %v2111 = vunpack.c.l.b16 %v1855
        %v2112 = vunpack.c.l.b16 %v1856
        %v2113 = vunpack.c.l.b16 %v1857
        %v2114 = vunpack.c.l.b16 %v1858
        %v2115 = vunpack.c.l.b16 %v1859
        %v2116 = vunpack.c.l.b16 %v1860
        %v2117 = vunpack.c.l.b16 %v1861
        %v2118 = vunpack.c.l.b16 %v1862
        %v2119 = vunpack.c.l.b16 %v1863
        %v2120 = vunpack.c.l.b16 %v1864
        %v2121 = vunpack.c.l.b16 %v1865
        %v2122 = vunpack.c.l.b16 %v1866
        %v2123 = vunpack.c.l.b16 %v1867
        %v2124 = vunpack.c.l.b16 %v1868
        %v2125 = vunpack.c.l.b16 %v1869
        %v2126 = vunpack.c.l.b16 %v1870
        %v2127 = vunpack.c.l.b16 %v1871
        %v2128 = vunpack.c.l.b16 %v1872
        %v2129 = vunpack.c.l.b16 %v1873
        %v2130 = vunpack.c.l.b16 %v1874
        %v2131 = vunpack.c.l.b16 %v1875
        %v2132 = vunpack.c.l.b16 %v1876
        %v2133 = vunpack.c.l.b16 %v1877
        %v2134 = vunpack.c.l.b16 %v1878
        %v2135 = vunpack.c.l.b16 %v1879
        %v2136 = vunpack.c.l.b16 %v1880
        %v2137 = vunpack.c.l.b16 %v1881
        %v2138 = vunpack.c.l.b16 %v1882
        %v2139 = vunpack.c.l.b16 %v1883
        %v2140 = vunpack.c.l.b16 %v1884
        %v2141 = vunpack.c.l.b16 %v1885
        %v2142 = vunpack.c.l.b16 %v1886
        %v2143 = vunpack.c.l.b16 %v1887
        %v2144 = vunpack.c.l.b16 %v1888
        %v2145 = vunpack.c.l.b16 %v1889
        %v2146 = vunpack.c.l.b16 %v1890
        %v2147 = vunpack.c.l.b16 %v1891
        %v2148 = vunpack.c.l.b16 %v1892
        %v2149 = vunpack.c.l.b16 %v1893
        %v2150 = vunpack.c.l.b16 %v1894
        %v2151 = vunpack.c.l.b16 %v1895
        %v2152 = vunpack.c.l.b16 %v1896
        %v2153 = vunpack.c.l.b16 %v1897
        %v2154 = vunpack.c.l.b16 %v1898
        %v2155 = vunpack.c.l.b16 %v1899
        %v2156 = vunpack.c.l.b16 %v1900
        %v2157 = vunpack.c.l.b16 %v1901
        %v2158 = vunpack.c.l.b16 %v1902
        %v2159 = vunpack.c.l.b16 %v1903
        %v2160 = vunpack.c.l.b16 %v1904
        %v2161 = vunpack.c.l.b16 %v1905
        %v2162 = vunpack.c.l.b16 %v1906
        %v2163 = vunpack.c.l.b16 %v1907
        %v2164 = vunpack.c.l.b16 %v1908
        %v2165 = vunpack.c.l.b16 %v1909
        %v2166 = vunpack.c.l.b16 %v1910
        %v2167 = vunpack.c.l.b16 %v1911
        %v2168 = vunpack.c.l.b16 %v1912
        %v2169 = vunpack.c.l.b16 %v1913
        %v2170 = vunpack.c.l.b16 %v1914
        %v2171 = vunpack.c.l.b16 %v1915
        %v2172 = vunpack.c.l.b16 %v1916
        %v2173 = vunpack.c.l.b16 %v1917
        %v2174 = vunpack.c.l.b16 %v1918
        %v2175 = vunpack.c.l.b16 %v1919
        %v2176 = vunpack.c.l.b16 %v1920
        %v2177 = vunpack.c.l.b16 %v1921
        %v2178 = vunpack.c.l.b16 %v1922
        %v2179 = vunpack.c.l.b16 %v1923
        %v2180 = vunpack.c.l.b16 %v1924
        %v2181 = vunpack.c.l.b16 %v1925
        %v2182 = vunpack.c.l.b16 %v1926
        %v2183 = vunpack.c.l.b16 %v1927
        %v2184 = vunpack.c.l.b16 %v1928
        %v2185 = vunpack.c.l.b16 %v1929
        %v2186 = vunpack.c.l.b16 %v1930
        %v2187 = vunpack.c.l.b16 %v1931
        %v2188 = vunpack.c.l.b16 %v1932
        %v2189 = vunpack.c.l.b16 %v1933
        %v2190 = vunpack.c.l.b16 %v1934
        %v2191 = vunpack.c.l.b16 %v1935
        %v2192 = vunpack.c.l.b16 %v1936
        %v2193 = vunpack.c.l.b16 %v1937
        %v2194 = vunpack.c.l.b16 %v1938
        %v2195 = vunpack.c.l.b16 %v1939
        %v2196 = vunpack.c.l.b16 %v1940
        %v2197 = vunpack.c.l.b16 %v1941
        %v2198 = vunpack.c.l.b16 %v1942
        %v2199 = vunpack.c.l.b16 %v1943
        %v2200 = vunpack.c.l.b16 %v1944
        %v2201 = vunpack.c.l.b16 %v1945
        %v2202 = vunpack.c.l.b16 %v1946
        %v2203 = vunpack.c.l.b16 %v1947
        %v2204 = vunpack.c.l.b16 %v1948
        %v2205 = vunpack.c.l.b16 %v1949
        %v2206 = vunpack.c.l.b16 %v1950
        %v2207 = vunpack.c.l.b16 %v1951
        %v2208 = vunpack.c.l.b16 %v1952
        %v2209 = vunpack.c.l.b16 %v1953
        %v2210 = vunpack.c.l.b16 %v1954
        %v2211 = vunpack.c.l.b16 %v1955
        %v2212 = vunpack.c.l.b16 %v1956
        %v2213 = vunpack.c.l.b16 %v1957
        %v2214 = vunpack.c.l.b16 %v1958
        %v2215 = vunpack.c.l.b16 %v1959
        %v2216 = vpack.c.b16 %v2089, %v2088
        %v2217 = vpack.c.b16 %v2091, %v2090
        %v2218 = vpack.c.b16 %v2093, %v2092
        %v2219 = vpack.c.b16 %v2095, %v2094
        %v2220 = vpack.c.b16 %v2097, %v2096
        %v2221 = vpack.c.b16 %v2099, %v2098
        %v2222 = vpack.c.b16 %v2101, %v2100
        %v2223 = vpack.c.b16 %v2103, %v2102
        %v2224 = vpack.c.b16 %v2105, %v2104
        %v2225 = vpack.c.b16 %v2107, %v2106
        %v2226 = vpack.c.b16 %v2109, %v2108
        %v2227 = vpack.c.b16 %v2111, %v2110
        %v2228 = vpack.c.b16 %v2113, %v2112
        %v2229 = vpack.c.b16 %v2115, %v2114
        %v2230 = vpack.c.b16 %v2117, %v2116
        %v2231 = vpack.c.b16 %v2119, %v2118
        %v2232 = vpack.c.b16 %v2121, %v2120
        %v2233 = vpack.c.b16 %v2123, %v2122
        %v2234 = vpack.c.b16 %v2125, %v2124
        %v2235 = vpack.c.b16 %v2127, %v2126
        %v2236 = vpack.c.b16 %v2129, %v2128
        %v2237 = vpack.c.b16 %v2131, %v2130
        %v2238 = vpack.c.b16 %v2133, %v2132
        %v2239 = vpack.c.b16 %v2135, %v2134
        %v2240 = vpack.c.b16 %v2137, %v2136
        %v2241 = vpack.c.b16 %v2139, %v2138
        %v2242 = vpack.c.b16 %v2141, %v2140
        %v2243 = vpack.c.b16 %v2143, %v2142
        %v2244 = vpack.c.b16 %v2145, %v2144
        %v2245 = vpack.c.b16 %v2147, %v2146
        %v2246 = vpack.c.b16 %v2149, %v2148
        %v2247 = vpack.c.b16 %v2151, %v2150
        %v2248 = vpack.c.b16 %v2153, %v2152
        %v2249 = vpack.c.b16 %v2155, %v2154
        %v2250 = vpack.c.b16 %v2157, %v2156
        %v2251 = vpack.c.b16 %v2159, %v2158
        %v2252 = vpack.c.b16 %v2161, %v2160
        %v2253 = vpack.c.b16 %v2163, %v2162
        %v2254 = vpack.c.b16 %v2165, %v2164
        %v2255 = vpack.c.b16 %v2167, %v2166
        %v2256 = vpack.c.b16 %v2169, %v2168
        %v2257 = vpack.c.b16 %v2171, %v2170
        %v2258 = vpack.c.b16 %v2173, %v2172
        %v2259 = vpack.c.b16 %v2175, %v2174
        %v2260 = vpack.c.b16 %v2177, %v2176
        %v2261 = vpack.c.b16 %v2179, %v2178
        %v2262 = vpack.c.b16 %v2181, %v2180
        %v2263 = vpack.c.b16 %v2183, %v2182
        %v2264 = vpack.c.b16 %v2185, %v2184
        %v2265 = vpack.c.b16 %v2187, %v2186
        %v2266 = vpack.c.b16 %v2189, %v2188
        %v2267 = vpack.c.b16 %v2191, %v2190
        %v2268 = vpack.c.b16 %v2193, %v2192
        %v2269 = vpack.c.b16 %v2195, %v2194
        %v2270 = vpack.c.b16 %v2197, %v2196
        %v2271 = vpack.c.b16 %v2199, %v2198
        %v2272 = vpack.c.b16 %v2201, %v2200
        %v2273 = vpack.c.b16 %v2203, %v2202
        %v2274 = vpack.c.b16 %v2205, %v2204
        %v2275 = vpack.c.b16 %v2207, %v2206
        %v2276 = vpack.c.b16 %v2209, %v2208
        %v2277 = vpack.c.b16 %v2211, %v2210
        %v2278 = vpack.c.b16 %v2213, %v2212
        %v2279 = vpack.c.b16 %v2215, %v2214
        %2344 = vmatpush.bf16.msra.mxu0 %v2223
        %2345 = vmatpush.bf16.msra.mxu0 %v2222
        %2346 = vmatpush.bf16.msra.mxu0 %v2221
        %2347 = vmatpush.bf16.msra.mxu0 %v2220
        %2348 = vmatpush.bf16.msra.mxu0 %v2219
        %2349 = vmatpush.bf16.msra.mxu0 %v2218
        %2350 = vmatpush.bf16.msra.mxu0 %v2217
        %2351 = vmatpush.bf16.msra.mxu0 %v2216
        %2352 = vmatmul.bf16.gmra.mxu0 %v1576
        %v2353 = vpop.f32.mrf.mxu0
        %v2354 = vadd.f32 0.0, %v2353
        %v2355 = vpop.f32.mrf.mxu0
        %v2356 = vadd.f32 0.0, %v2355
        %2357 = vmatmul.bf16.gmra.mxu0 %v1584
        %v2358 = vpop.f32.mrf.mxu0
        %v2359 = vadd.f32 0.0, %v2358
        %v2360 = vpop.f32.mrf.mxu0
        %v2361 = vadd.f32 0.0, %v2360
        %2362 = vmatmul.bf16.gmra.mxu0 %v1592
        %v2363 = vpop.f32.mrf.mxu0
        %v2364 = vadd.f32 0.0, %v2363
        %v2365 = vpop.f32.mrf.mxu0
        %v2366 = vadd.f32 0.0, %v2365
        %2367 = vmatmul.bf16.gmra.mxu0 %v1600
        %v2368 = vpop.f32.mrf.mxu0
        %v2369 = vadd.f32 0.0, %v2368
        %v2370 = vpop.f32.mrf.mxu0
        %v2371 = vadd.f32 0.0, %v2370
        %2372 = vmatmul.bf16.gmra.mxu0 %v1608
        %v2373 = vpop.f32.mrf.mxu0
        %v2374 = vadd.f32 0.0, %v2373
        %v2375 = vpop.f32.mrf.mxu0
        %v2376 = vadd.f32 0.0, %v2375
        %2377 = vmatmul.bf16.gmra.mxu0 %v1616
        %v2378 = vpop.f32.mrf.mxu0
        %v2379 = vadd.f32 0.0, %v2378
        %v2380 = vpop.f32.mrf.mxu0
        %v2381 = vadd.f32 0.0, %v2380
        %2382 = vmatmul.bf16.gmra.mxu0 %v1624
        %v2383 = vpop.f32.mrf.mxu0
        %v2384 = vadd.f32 0.0, %v2383
        %v2385 = vpop.f32.mrf.mxu0
        %v2386 = vadd.f32 0.0, %v2385
        %2387 = vmatmul.bf16.gmra.mxu0 %v1632
        %v2388 = vpop.f32.mrf.mxu0
        %v2389 = vadd.f32 0.0, %v2388
        %v2390 = vpop.f32.mrf.mxu0
        %v2391 = vadd.f32 0.0, %v2390
        %2392 = vmatmul.bf16.gmra.mxu0 %v1640
        %v2393 = vpop.f32.mrf.mxu0
        %v2394 = vadd.f32 0.0, %v2393
        %v2395 = vpop.f32.mrf.mxu0
        %v2396 = vadd.f32 0.0, %v2395
        %2397 = vmatmul.bf16.gmra.mxu0 %v1648
        %v2398 = vpop.f32.mrf.mxu0
        %v2399 = vadd.f32 0.0, %v2398
        %v2400 = vpop.f32.mrf.mxu0
        %v2401 = vadd.f32 0.0, %v2400
        %2402 = vmatmul.bf16.gmra.mxu0 %v1656
        %v2403 = vpop.f32.mrf.mxu0
        %v2404 = vadd.f32 0.0, %v2403
        %v2405 = vpop.f32.mrf.mxu0
        %v2406 = vadd.f32 0.0, %v2405
        %2407 = vmatmul.bf16.gmra.mxu0 %v1664
        %v2408 = vpop.f32.mrf.mxu0
        %v2409 = vadd.f32 0.0, %v2408
        %v2410 = vpop.f32.mrf.mxu0
        %v2411 = vadd.f32 0.0, %v2410
        %2412 = vmatmul.bf16.gmra.mxu0 %v1672
        %v2413 = vpop.f32.mrf.mxu0
        %v2414 = vadd.f32 0.0, %v2413
        %v2415 = vpop.f32.mrf.mxu0
        %v2416 = vadd.f32 0.0, %v2415
        %2417 = vmatmul.bf16.gmra.mxu0 %v1680
        %v2418 = vpop.f32.mrf.mxu0
        %v2419 = vadd.f32 0.0, %v2418
        %v2420 = vpop.f32.mrf.mxu0
        %v2421 = vadd.f32 0.0, %v2420
        %2422 = vmatmul.bf16.gmra.mxu0 %v1688
        %v2423 = vpop.f32.mrf.mxu0
        %v2424 = vadd.f32 0.0, %v2423
        %v2425 = vpop.f32.mrf.mxu0
        %v2426 = vadd.f32 0.0, %v2425
        %2427 = vmatmul.bf16.gmra.mxu0 %v1696
        %v2428 = vpop.f32.mrf.mxu0
        %v2429 = vadd.f32 0.0, %v2428
        %v2430 = vpop.f32.mrf.mxu0
        %v2431 = vadd.f32 0.0, %v2430
        %2432 = vmatmul.bf16.gmra.mxu0 %v1704
        %v2433 = vpop.f32.mrf.mxu0
        %v2434 = vadd.f32 0.0, %v2433
        %v2435 = vpop.f32.mrf.mxu0
        %v2436 = vadd.f32 0.0, %v2435
        %2437 = vmatmul.bf16.gmra.mxu0 %v1712
        %v2438 = vpop.f32.mrf.mxu0
        %v2439 = vadd.f32 0.0, %v2438
        %v2440 = vpop.f32.mrf.mxu0
        %v2441 = vadd.f32 0.0, %v2440
        %2442 = vmatmul.bf16.gmra.mxu0 %v1720
        %v2443 = vpop.f32.mrf.mxu0
        %v2444 = vadd.f32 0.0, %v2443
        %v2445 = vpop.f32.mrf.mxu0
        %v2446 = vadd.f32 0.0, %v2445
        %2447 = vmatmul.bf16.gmra.mxu0 %v1728
        %v2448 = vpop.f32.mrf.mxu0
        %v2449 = vadd.f32 0.0, %v2448
        %v2450 = vpop.f32.mrf.mxu0
        %v2451 = vadd.f32 0.0, %v2450
        %2452 = vmatmul.bf16.gmra.mxu0 %v1736
        %v2453 = vpop.f32.mrf.mxu0
        %v2454 = vadd.f32 0.0, %v2453
        %v2455 = vpop.f32.mrf.mxu0
        %v2456 = vadd.f32 0.0, %v2455
        %2457 = vmatmul.bf16.gmra.mxu0 %v1744
        %v2458 = vpop.f32.mrf.mxu0
        %v2459 = vadd.f32 0.0, %v2458
        %v2460 = vpop.f32.mrf.mxu0
        %v2461 = vadd.f32 0.0, %v2460
        %2462 = vmatmul.bf16.gmra.mxu0 %v1752
        %v2463 = vpop.f32.mrf.mxu0
        %v2464 = vadd.f32 0.0, %v2463
        %v2465 = vpop.f32.mrf.mxu0
        %v2466 = vadd.f32 0.0, %v2465
        %2467 = vmatmul.bf16.gmra.mxu0 %v1760
        %v2468 = vpop.f32.mrf.mxu0
        %v2469 = vadd.f32 0.0, %v2468
        %v2470 = vpop.f32.mrf.mxu0
        %v2471 = vadd.f32 0.0, %v2470
        %2472 = vmatmul.bf16.gmra.mxu0 %v1768
        %v2473 = vpop.f32.mrf.mxu0
        %v2474 = vadd.f32 0.0, %v2473
        %v2475 = vpop.f32.mrf.mxu0
        %v2476 = vadd.f32 0.0, %v2475
        %2477 = vmatmul.bf16.gmra.mxu0 %v1776
        %v2478 = vpop.f32.mrf.mxu0
        %v2479 = vadd.f32 0.0, %v2478
        %v2480 = vpop.f32.mrf.mxu0
        %v2481 = vadd.f32 0.0, %v2480
        %2482 = vmatmul.bf16.gmra.mxu0 %v1784
        %v2483 = vpop.f32.mrf.mxu0
        %v2484 = vadd.f32 0.0, %v2483
        %v2485 = vpop.f32.mrf.mxu0
        %v2486 = vadd.f32 0.0, %v2485
        %2487 = vmatmul.bf16.gmra.mxu0 %v1792
        %v2488 = vpop.f32.mrf.mxu0
        %v2489 = vadd.f32 0.0, %v2488
        %v2490 = vpop.f32.mrf.mxu0
        %v2491 = vadd.f32 0.0, %v2490
        %2492 = vmatmul.bf16.gmra.mxu0 %v1800
        %v2493 = vpop.f32.mrf.mxu0
        %v2494 = vadd.f32 0.0, %v2493
        %v2495 = vpop.f32.mrf.mxu0
        %v2496 = vadd.f32 0.0, %v2495
        %2497 = vmatmul.bf16.gmra.mxu0 %v1808
        %v2498 = vpop.f32.mrf.mxu0
        %v2499 = vadd.f32 0.0, %v2498
        %v2500 = vpop.f32.mrf.mxu0
        %v2501 = vadd.f32 0.0, %v2500
        %2502 = vmatmul.bf16.gmra.mxu0 %v1816
        %v2503 = vpop.f32.mrf.mxu0
        %v2504 = vadd.f32 0.0, %v2503
        %v2505 = vpop.f32.mrf.mxu0
        %v2506 = vadd.f32 0.0, %v2505
        %2507 = vmatmul.bf16.gmra.mxu0 %v1824
        %v2508 = vpop.f32.mrf.mxu0
        %v2509 = vadd.f32 0.0, %v2508
        %v2510 = vpop.f32.mrf.mxu0
        %v2511 = vadd.f32 0.0, %v2510
        %2512 = vdwg.mxu0
        %2513 = vmatpush.bf16.msra.mxu0 %v2231
        %2514 = vmatpush.bf16.msra.mxu0 %v2230
        %2515 = vmatpush.bf16.msra.mxu0 %v2229
        %2516 = vmatpush.bf16.msra.mxu0 %v2228
        %2517 = vmatpush.bf16.msra.mxu0 %v2227
        %2518 = vmatpush.bf16.msra.mxu0 %v2226
        %2519 = vmatpush.bf16.msra.mxu0 %v2225
        %2520 = vmatpush.bf16.msra.mxu0 %v2224
        %2521 = vmatmul.bf16.gmra.mxu0 %v1577
        %v2522 = vpop.f32.mrf.mxu0
        %v2523 = vadd.f32 %v2354, %v2522
        %v2524 = vpop.f32.mrf.mxu0
        %v2525 = vadd.f32 %v2356, %v2524
        %2526 = vmatmul.bf16.gmra.mxu0 %v1585
        %v2527 = vpop.f32.mrf.mxu0
        %v2528 = vadd.f32 %v2359, %v2527
        %v2529 = vpop.f32.mrf.mxu0
        %v2530 = vadd.f32 %v2361, %v2529
        %2531 = vmatmul.bf16.gmra.mxu0 %v1593
        %v2532 = vpop.f32.mrf.mxu0
        %v2533 = vadd.f32 %v2364, %v2532
        %v2534 = vpop.f32.mrf.mxu0
        %v2535 = vadd.f32 %v2366, %v2534
        %2536 = vmatmul.bf16.gmra.mxu0 %v1601
        %v2537 = vpop.f32.mrf.mxu0
        %v2538 = vadd.f32 %v2369, %v2537
        %v2539 = vpop.f32.mrf.mxu0
        %v2540 = vadd.f32 %v2371, %v2539
        %2541 = vmatmul.bf16.gmra.mxu0 %v1609
        %v2542 = vpop.f32.mrf.mxu0
        %v2543 = vadd.f32 %v2374, %v2542
        %v2544 = vpop.f32.mrf.mxu0
        %v2545 = vadd.f32 %v2376, %v2544
        %2546 = vmatmul.bf16.gmra.mxu0 %v1617
        %v2547 = vpop.f32.mrf.mxu0
        %v2548 = vadd.f32 %v2379, %v2547
        %v2549 = vpop.f32.mrf.mxu0
        %v2550 = vadd.f32 %v2381, %v2549
        %2551 = vmatmul.bf16.gmra.mxu0 %v1625
        %v2552 = vpop.f32.mrf.mxu0
        %v2553 = vadd.f32 %v2384, %v2552
        %v2554 = vpop.f32.mrf.mxu0
        %v2555 = vadd.f32 %v2386, %v2554
        %2556 = vmatmul.bf16.gmra.mxu0 %v1633
        %v2557 = vpop.f32.mrf.mxu0
        %v2558 = vadd.f32 %v2389, %v2557
        %v2559 = vpop.f32.mrf.mxu0
        %v2560 = vadd.f32 %v2391, %v2559
        %2561 = vmatmul.bf16.gmra.mxu0 %v1641
        %v2562 = vpop.f32.mrf.mxu0
        %v2563 = vadd.f32 %v2394, %v2562
        %v2564 = vpop.f32.mrf.mxu0
        %v2565 = vadd.f32 %v2396, %v2564
        %2566 = vmatmul.bf16.gmra.mxu0 %v1649
        %v2567 = vpop.f32.mrf.mxu0
        %v2568 = vadd.f32 %v2399, %v2567
        %v2569 = vpop.f32.mrf.mxu0
        %v2570 = vadd.f32 %v2401, %v2569
        %2571 = vmatmul.bf16.gmra.mxu0 %v1657
        %v2572 = vpop.f32.mrf.mxu0
        %v2573 = vadd.f32 %v2404, %v2572
        %v2574 = vpop.f32.mrf.mxu0
        %v2575 = vadd.f32 %v2406, %v2574
        %2576 = vmatmul.bf16.gmra.mxu0 %v1665
        %v2577 = vpop.f32.mrf.mxu0
        %v2578 = vadd.f32 %v2409, %v2577
        %v2579 = vpop.f32.mrf.mxu0
        %v2580 = vadd.f32 %v2411, %v2579
        %2581 = vmatmul.bf16.gmra.mxu0 %v1673
        %v2582 = vpop.f32.mrf.mxu0
        %v2583 = vadd.f32 %v2414, %v2582
        %v2584 = vpop.f32.mrf.mxu0
        %v2585 = vadd.f32 %v2416, %v2584
        %2586 = vmatmul.bf16.gmra.mxu0 %v1681
        %v2587 = vpop.f32.mrf.mxu0
        %v2588 = vadd.f32 %v2419, %v2587
        %v2589 = vpop.f32.mrf.mxu0
        %v2590 = vadd.f32 %v2421, %v2589
        %2591 = vmatmul.bf16.gmra.mxu0 %v1689
        %v2592 = vpop.f32.mrf.mxu0
        %v2593 = vadd.f32 %v2424, %v2592
        %v2594 = vpop.f32.mrf.mxu0
        %v2595 = vadd.f32 %v2426, %v2594
        %2596 = vmatmul.bf16.gmra.mxu0 %v1697
        %v2597 = vpop.f32.mrf.mxu0
        %v2598 = vadd.f32 %v2429, %v2597
        %v2599 = vpop.f32.mrf.mxu0
        %v2600 = vadd.f32 %v2431, %v2599
        %2601 = vmatmul.bf16.gmra.mxu0 %v1705
        %v2602 = vpop.f32.mrf.mxu0
        %v2603 = vadd.f32 %v2434, %v2602
        %v2604 = vpop.f32.mrf.mxu0
        %v2605 = vadd.f32 %v2436, %v2604
        %2606 = vmatmul.bf16.gmra.mxu0 %v1713
        %v2607 = vpop.f32.mrf.mxu0
        %v2608 = vadd.f32 %v2439, %v2607
        %v2609 = vpop.f32.mrf.mxu0
        %v2610 = vadd.f32 %v2441, %v2609
        %2611 = vmatmul.bf16.gmra.mxu0 %v1721
        %v2612 = vpop.f32.mrf.mxu0
        %v2613 = vadd.f32 %v2444, %v2612
        %v2614 = vpop.f32.mrf.mxu0
        %v2615 = vadd.f32 %v2446, %v2614
        %2616 = vmatmul.bf16.gmra.mxu0 %v1729
        %v2617 = vpop.f32.mrf.mxu0
        %v2618 = vadd.f32 %v2449, %v2617
        %v2619 = vpop.f32.mrf.mxu0
        %v2620 = vadd.f32 %v2451, %v2619
        %2621 = vmatmul.bf16.gmra.mxu0 %v1737
        %v2622 = vpop.f32.mrf.mxu0
        %v2623 = vadd.f32 %v2454, %v2622
        %v2624 = vpop.f32.mrf.mxu0
        %v2625 = vadd.f32 %v2456, %v2624
        %2626 = vmatmul.bf16.gmra.mxu0 %v1745
        %v2627 = vpop.f32.mrf.mxu0
        %v2628 = vadd.f32 %v2459, %v2627
        %v2629 = vpop.f32.mrf.mxu0
        %v2630 = vadd.f32 %v2461, %v2629
        %2631 = vmatmul.bf16.gmra.mxu0 %v1753
        %v2632 = vpop.f32.mrf.mxu0
        %v2633 = vadd.f32 %v2464, %v2632
        %v2634 = vpop.f32.mrf.mxu0
        %v2635 = vadd.f32 %v2466, %v2634
        %2636 = vmatmul.bf16.gmra.mxu0 %v1761
        %v2637 = vpop.f32.mrf.mxu0
        %v2638 = vadd.f32 %v2469, %v2637
        %v2639 = vpop.f32.mrf.mxu0
        %v2640 = vadd.f32 %v2471, %v2639
        %2641 = vmatmul.bf16.gmra.mxu0 %v1769
        %v2642 = vpop.f32.mrf.mxu0
        %v2643 = vadd.f32 %v2474, %v2642
        %v2644 = vpop.f32.mrf.mxu0
        %v2645 = vadd.f32 %v2476, %v2644
        %2646 = vmatmul.bf16.gmra.mxu0 %v1777
        %v2647 = vpop.f32.mrf.mxu0
        %v2648 = vadd.f32 %v2479, %v2647
        %v2649 = vpop.f32.mrf.mxu0
        %v2650 = vadd.f32 %v2481, %v2649
        %2651 = vmatmul.bf16.gmra.mxu0 %v1785
        %v2652 = vpop.f32.mrf.mxu0
        %v2653 = vadd.f32 %v2484, %v2652
        %v2654 = vpop.f32.mrf.mxu0
        %v2655 = vadd.f32 %v2486, %v2654
        %2656 = vmatmul.bf16.gmra.mxu0 %v1793
        %v2657 = vpop.f32.mrf.mxu0
        %v2658 = vadd.f32 %v2489, %v2657
        %v2659 = vpop.f32.mrf.mxu0
        %v2660 = vadd.f32 %v2491, %v2659
        %2661 = vmatmul.bf16.gmra.mxu0 %v1801
        %v2662 = vpop.f32.mrf.mxu0
        %v2663 = vadd.f32 %v2494, %v2662
        %v2664 = vpop.f32.mrf.mxu0
        %v2665 = vadd.f32 %v2496, %v2664
        %2666 = vmatmul.bf16.gmra.mxu0 %v1809
        %v2667 = vpop.f32.mrf.mxu0
        %v2668 = vadd.f32 %v2499, %v2667
        %v2669 = vpop.f32.mrf.mxu0
        %v2670 = vadd.f32 %v2501, %v2669
        %2671 = vmatmul.bf16.gmra.mxu0 %v1817
        %v2672 = vpop.f32.mrf.mxu0
        %v2673 = vadd.f32 %v2504, %v2672
        %v2674 = vpop.f32.mrf.mxu0
        %v2675 = vadd.f32 %v2506, %v2674
        %2676 = vmatmul.bf16.gmra.mxu0 %v1825
        %v2677 = vpop.f32.mrf.mxu0
        %v2678 = vadd.f32 %v2509, %v2677
        %v2679 = vpop.f32.mrf.mxu0
        %v2680 = vadd.f32 %v2511, %v2679
        %2681 = vdwg.mxu0
        %2682 = vmatpush.bf16.msra.mxu0 %v2239
        %2683 = vmatpush.bf16.msra.mxu0 %v2238
        %2684 = vmatpush.bf16.msra.mxu0 %v2237
        %2685 = vmatpush.bf16.msra.mxu0 %v2236
        %2686 = vmatpush.bf16.msra.mxu0 %v2235
        %2687 = vmatpush.bf16.msra.mxu0 %v2234
        %2688 = vmatpush.bf16.msra.mxu0 %v2233
        %2689 = vmatpush.bf16.msra.mxu0 %v2232
        %2690 = vmatmul.bf16.gmra.mxu0 %v1578
        %v2691 = vpop.f32.mrf.mxu0
        %v2692 = vadd.f32 %v2523, %v2691
        %v2693 = vpop.f32.mrf.mxu0
        %v2694 = vadd.f32 %v2525, %v2693
        %2695 = vmatmul.bf16.gmra.mxu0 %v1586
        %v2696 = vpop.f32.mrf.mxu0
        %v2697 = vadd.f32 %v2528, %v2696
        %v2698 = vpop.f32.mrf.mxu0
        %v2699 = vadd.f32 %v2530, %v2698
        %2700 = vmatmul.bf16.gmra.mxu0 %v1594
        %v2701 = vpop.f32.mrf.mxu0
        %v2702 = vadd.f32 %v2533, %v2701
        %v2703 = vpop.f32.mrf.mxu0
        %v2704 = vadd.f32 %v2535, %v2703
        %2705 = vmatmul.bf16.gmra.mxu0 %v1602
        %v2706 = vpop.f32.mrf.mxu0
        %v2707 = vadd.f32 %v2538, %v2706
        %v2708 = vpop.f32.mrf.mxu0
        %v2709 = vadd.f32 %v2540, %v2708
        %2710 = vmatmul.bf16.gmra.mxu0 %v1610
        %v2711 = vpop.f32.mrf.mxu0
        %v2712 = vadd.f32 %v2543, %v2711
        %v2713 = vpop.f32.mrf.mxu0
        %v2714 = vadd.f32 %v2545, %v2713
        %2715 = vmatmul.bf16.gmra.mxu0 %v1618
        %v2716 = vpop.f32.mrf.mxu0
        %v2717 = vadd.f32 %v2548, %v2716
        %v2718 = vpop.f32.mrf.mxu0
        %v2719 = vadd.f32 %v2550, %v2718
        %2720 = vmatmul.bf16.gmra.mxu0 %v1626
        %v2721 = vpop.f32.mrf.mxu0
        %v2722 = vadd.f32 %v2553, %v2721
        %v2723 = vpop.f32.mrf.mxu0
        %v2724 = vadd.f32 %v2555, %v2723
        %2725 = vmatmul.bf16.gmra.mxu0 %v1634
        %v2726 = vpop.f32.mrf.mxu0
        %v2727 = vadd.f32 %v2558, %v2726
        %v2728 = vpop.f32.mrf.mxu0
        %v2729 = vadd.f32 %v2560, %v2728
        %2730 = vmatmul.bf16.gmra.mxu0 %v1642
        %v2731 = vpop.f32.mrf.mxu0
        %v2732 = vadd.f32 %v2563, %v2731
        %v2733 = vpop.f32.mrf.mxu0
        %v2734 = vadd.f32 %v2565, %v2733
        %2735 = vmatmul.bf16.gmra.mxu0 %v1650
        %v2736 = vpop.f32.mrf.mxu0
        %v2737 = vadd.f32 %v2568, %v2736
        %v2738 = vpop.f32.mrf.mxu0
        %v2739 = vadd.f32 %v2570, %v2738
        %2740 = vmatmul.bf16.gmra.mxu0 %v1658
        %v2741 = vpop.f32.mrf.mxu0
        %v2742 = vadd.f32 %v2573, %v2741
        %v2743 = vpop.f32.mrf.mxu0
        %v2744 = vadd.f32 %v2575, %v2743
        %2745 = vmatmul.bf16.gmra.mxu0 %v1666
        %v2746 = vpop.f32.mrf.mxu0
        %v2747 = vadd.f32 %v2578, %v2746
        %v2748 = vpop.f32.mrf.mxu0
        %v2749 = vadd.f32 %v2580, %v2748
        %2750 = vmatmul.bf16.gmra.mxu0 %v1674
        %v2751 = vpop.f32.mrf.mxu0
        %v2752 = vadd.f32 %v2583, %v2751
        %v2753 = vpop.f32.mrf.mxu0
        %v2754 = vadd.f32 %v2585, %v2753
        %2755 = vmatmul.bf16.gmra.mxu0 %v1682
        %v2756 = vpop.f32.mrf.mxu0
        %v2757 = vadd.f32 %v2588, %v2756
        %v2758 = vpop.f32.mrf.mxu0
        %v2759 = vadd.f32 %v2590, %v2758
        %2760 = vmatmul.bf16.gmra.mxu0 %v1690
        %v2761 = vpop.f32.mrf.mxu0
        %v2762 = vadd.f32 %v2593, %v2761
        %v2763 = vpop.f32.mrf.mxu0
        %v2764 = vadd.f32 %v2595, %v2763
        %2765 = vmatmul.bf16.gmra.mxu0 %v1698
        %v2766 = vpop.f32.mrf.mxu0
        %v2767 = vadd.f32 %v2598, %v2766
        %v2768 = vpop.f32.mrf.mxu0
        %v2769 = vadd.f32 %v2600, %v2768
        %2770 = vmatmul.bf16.gmra.mxu0 %v1706
        %v2771 = vpop.f32.mrf.mxu0
        %v2772 = vadd.f32 %v2603, %v2771
        %v2773 = vpop.f32.mrf.mxu0
        %v2774 = vadd.f32 %v2605, %v2773
        %2775 = vmatmul.bf16.gmra.mxu0 %v1714
        %v2776 = vpop.f32.mrf.mxu0
        %v2777 = vadd.f32 %v2608, %v2776
        %v2778 = vpop.f32.mrf.mxu0
        %v2779 = vadd.f32 %v2610, %v2778
        %2780 = vmatmul.bf16.gmra.mxu0 %v1722
        %v2781 = vpop.f32.mrf.mxu0
        %v2782 = vadd.f32 %v2613, %v2781
        %v2783 = vpop.f32.mrf.mxu0
        %v2784 = vadd.f32 %v2615, %v2783
        %2785 = vmatmul.bf16.gmra.mxu0 %v1730
        %v2786 = vpop.f32.mrf.mxu0
        %v2787 = vadd.f32 %v2618, %v2786
        %v2788 = vpop.f32.mrf.mxu0
        %v2789 = vadd.f32 %v2620, %v2788
        %2790 = vmatmul.bf16.gmra.mxu0 %v1738
        %v2791 = vpop.f32.mrf.mxu0
        %v2792 = vadd.f32 %v2623, %v2791
        %v2793 = vpop.f32.mrf.mxu0
        %v2794 = vadd.f32 %v2625, %v2793
        %2795 = vmatmul.bf16.gmra.mxu0 %v1746
        %v2796 = vpop.f32.mrf.mxu0
        %v2797 = vadd.f32 %v2628, %v2796
        %v2798 = vpop.f32.mrf.mxu0
        %v2799 = vadd.f32 %v2630, %v2798
        %2800 = vmatmul.bf16.gmra.mxu0 %v1754
        %v2801 = vpop.f32.mrf.mxu0
        %v2802 = vadd.f32 %v2633, %v2801
        %v2803 = vpop.f32.mrf.mxu0
        %v2804 = vadd.f32 %v2635, %v2803
        %2805 = vmatmul.bf16.gmra.mxu0 %v1762
        %v2806 = vpop.f32.mrf.mxu0
        %v2807 = vadd.f32 %v2638, %v2806
        %v2808 = vpop.f32.mrf.mxu0
        %v2809 = vadd.f32 %v2640, %v2808
        %2810 = vmatmul.bf16.gmra.mxu0 %v1770
        %v2811 = vpop.f32.mrf.mxu0
        %v2812 = vadd.f32 %v2643, %v2811
        %v2813 = vpop.f32.mrf.mxu0
        %v2814 = vadd.f32 %v2645, %v2813
        %2815 = vmatmul.bf16.gmra.mxu0 %v1778
        %v2816 = vpop.f32.mrf.mxu0
        %v2817 = vadd.f32 %v2648, %v2816
        %v2818 = vpop.f32.mrf.mxu0
        %v2819 = vadd.f32 %v2650, %v2818
        %2820 = vmatmul.bf16.gmra.mxu0 %v1786
        %v2821 = vpop.f32.mrf.mxu0
        %v2822 = vadd.f32 %v2653, %v2821
        %v2823 = vpop.f32.mrf.mxu0
        %v2824 = vadd.f32 %v2655, %v2823
        %2825 = vmatmul.bf16.gmra.mxu0 %v1794
        %v2826 = vpop.f32.mrf.mxu0
        %v2827 = vadd.f32 %v2658, %v2826
        %v2828 = vpop.f32.mrf.mxu0
        %v2829 = vadd.f32 %v2660, %v2828
        %2830 = vmatmul.bf16.gmra.mxu0 %v1802
        %v2831 = vpop.f32.mrf.mxu0
        %v2832 = vadd.f32 %v2663, %v2831
        %v2833 = vpop.f32.mrf.mxu0
        %v2834 = vadd.f32 %v2665, %v2833
        %2835 = vmatmul.bf16.gmra.mxu0 %v1810
        %v2836 = vpop.f32.mrf.mxu0
        %v2837 = vadd.f32 %v2668, %v2836
        %v2838 = vpop.f32.mrf.mxu0
        %v2839 = vadd.f32 %v2670, %v2838
        %2840 = vmatmul.bf16.gmra.mxu0 %v1818
        %v2841 = vpop.f32.mrf.mxu0
        %v2842 = vadd.f32 %v2673, %v2841
        %v2843 = vpop.f32.mrf.mxu0
        %v2844 = vadd.f32 %v2675, %v2843
        %2845 = vmatmul.bf16.gmra.mxu0 %v1826
        %v2846 = vpop.f32.mrf.mxu0
        %v2847 = vadd.f32 %v2678, %v2846
        %v2848 = vpop.f32.mrf.mxu0
        %v2849 = vadd.f32 %v2680, %v2848
        %2850 = vdwg.mxu0
        %2851 = vmatpush.bf16.msra.mxu0 %v2247
        %2852 = vmatpush.bf16.msra.mxu0 %v2246
        %2853 = vmatpush.bf16.msra.mxu0 %v2245
        %2854 = vmatpush.bf16.msra.mxu0 %v2244
        %2855 = vmatpush.bf16.msra.mxu0 %v2243
        %2856 = vmatpush.bf16.msra.mxu0 %v2242
        %2857 = vmatpush.bf16.msra.mxu0 %v2241
        %2858 = vmatpush.bf16.msra.mxu0 %v2240
        %2859 = vmatmul.bf16.gmra.mxu0 %v1579
        %v2860 = vpop.f32.mrf.mxu0
        %v2861 = vadd.f32 %v2692, %v2860
        %v2862 = vpop.f32.mrf.mxu0
        %v2863 = vadd.f32 %v2694, %v2862
        %2864 = vmatmul.bf16.gmra.mxu0 %v1587
        %v2865 = vpop.f32.mrf.mxu0
        %v2866 = vadd.f32 %v2697, %v2865
        %v2867 = vpop.f32.mrf.mxu0
        %v2868 = vadd.f32 %v2699, %v2867
        %2869 = vmatmul.bf16.gmra.mxu0 %v1595
        %v2870 = vpop.f32.mrf.mxu0
        %v2871 = vadd.f32 %v2702, %v2870
        %v2872 = vpop.f32.mrf.mxu0
        %v2873 = vadd.f32 %v2704, %v2872
        %2874 = vmatmul.bf16.gmra.mxu0 %v1603
        %v2875 = vpop.f32.mrf.mxu0
        %v2876 = vadd.f32 %v2707, %v2875
        %v2877 = vpop.f32.mrf.mxu0
        %v2878 = vadd.f32 %v2709, %v2877
        %2879 = vmatmul.bf16.gmra.mxu0 %v1611
        %v2880 = vpop.f32.mrf.mxu0
        %v2881 = vadd.f32 %v2712, %v2880
        %v2882 = vpop.f32.mrf.mxu0
        %v2883 = vadd.f32 %v2714, %v2882
        %2884 = vmatmul.bf16.gmra.mxu0 %v1619
        %v2885 = vpop.f32.mrf.mxu0
        %v2886 = vadd.f32 %v2717, %v2885
        %v2887 = vpop.f32.mrf.mxu0
        %v2888 = vadd.f32 %v2719, %v2887
        %2889 = vmatmul.bf16.gmra.mxu0 %v1627
        %v2890 = vpop.f32.mrf.mxu0
        %v2891 = vadd.f32 %v2722, %v2890
        %v2892 = vpop.f32.mrf.mxu0
        %v2893 = vadd.f32 %v2724, %v2892
        %2894 = vmatmul.bf16.gmra.mxu0 %v1635
        %v2895 = vpop.f32.mrf.mxu0
        %v2896 = vadd.f32 %v2727, %v2895
        %v2897 = vpop.f32.mrf.mxu0
        %v2898 = vadd.f32 %v2729, %v2897
        %2899 = vmatmul.bf16.gmra.mxu0 %v1643
        %v2900 = vpop.f32.mrf.mxu0
        %v2901 = vadd.f32 %v2732, %v2900
        %v2902 = vpop.f32.mrf.mxu0
        %v2903 = vadd.f32 %v2734, %v2902
        %2904 = vmatmul.bf16.gmra.mxu0 %v1651
        %v2905 = vpop.f32.mrf.mxu0
        %v2906 = vadd.f32 %v2737, %v2905
        %v2907 = vpop.f32.mrf.mxu0
        %v2908 = vadd.f32 %v2739, %v2907
        %2909 = vmatmul.bf16.gmra.mxu0 %v1659
        %v2910 = vpop.f32.mrf.mxu0
        %v2911 = vadd.f32 %v2742, %v2910
        %v2912 = vpop.f32.mrf.mxu0
        %v2913 = vadd.f32 %v2744, %v2912
        %2914 = vmatmul.bf16.gmra.mxu0 %v1667
        %v2915 = vpop.f32.mrf.mxu0
        %v2916 = vadd.f32 %v2747, %v2915
        %v2917 = vpop.f32.mrf.mxu0
        %v2918 = vadd.f32 %v2749, %v2917
        %2919 = vmatmul.bf16.gmra.mxu0 %v1675
        %v2920 = vpop.f32.mrf.mxu0
        %v2921 = vadd.f32 %v2752, %v2920
        %v2922 = vpop.f32.mrf.mxu0
        %v2923 = vadd.f32 %v2754, %v2922
        %2924 = vmatmul.bf16.gmra.mxu0 %v1683
        %v2925 = vpop.f32.mrf.mxu0
        %v2926 = vadd.f32 %v2757, %v2925
        %v2927 = vpop.f32.mrf.mxu0
        %v2928 = vadd.f32 %v2759, %v2927
        %2929 = vmatmul.bf16.gmra.mxu0 %v1691
        %v2930 = vpop.f32.mrf.mxu0
        %v2931 = vadd.f32 %v2762, %v2930
        %v2932 = vpop.f32.mrf.mxu0
        %v2933 = vadd.f32 %v2764, %v2932
        %2934 = vmatmul.bf16.gmra.mxu0 %v1699
        %v2935 = vpop.f32.mrf.mxu0
        %v2936 = vadd.f32 %v2767, %v2935
        %v2937 = vpop.f32.mrf.mxu0
        %v2938 = vadd.f32 %v2769, %v2937
        %2939 = vmatmul.bf16.gmra.mxu0 %v1707
        %v2940 = vpop.f32.mrf.mxu0
        %v2941 = vadd.f32 %v2772, %v2940
        %v2942 = vpop.f32.mrf.mxu0
        %v2943 = vadd.f32 %v2774, %v2942
        %2944 = vmatmul.bf16.gmra.mxu0 %v1715
        %v2945 = vpop.f32.mrf.mxu0
        %v2946 = vadd.f32 %v2777, %v2945
        %v2947 = vpop.f32.mrf.mxu0
        %v2948 = vadd.f32 %v2779, %v2947
        %2949 = vmatmul.bf16.gmra.mxu0 %v1723
        %v2950 = vpop.f32.mrf.mxu0
        %v2951 = vadd.f32 %v2782, %v2950
        %v2952 = vpop.f32.mrf.mxu0
        %v2953 = vadd.f32 %v2784, %v2952
        %2954 = vmatmul.bf16.gmra.mxu0 %v1731
        %v2955 = vpop.f32.mrf.mxu0
        %v2956 = vadd.f32 %v2787, %v2955
        %v2957 = vpop.f32.mrf.mxu0
        %v2958 = vadd.f32 %v2789, %v2957
        %2959 = vmatmul.bf16.gmra.mxu0 %v1739
        %v2960 = vpop.f32.mrf.mxu0
        %v2961 = vadd.f32 %v2792, %v2960
        %v2962 = vpop.f32.mrf.mxu0
        %v2963 = vadd.f32 %v2794, %v2962
        %2964 = vmatmul.bf16.gmra.mxu0 %v1747
        %v2965 = vpop.f32.mrf.mxu0
        %v2966 = vadd.f32 %v2797, %v2965
        %v2967 = vpop.f32.mrf.mxu0
        %v2968 = vadd.f32 %v2799, %v2967
        %2969 = vmatmul.bf16.gmra.mxu0 %v1755
        %v2970 = vpop.f32.mrf.mxu0
        %v2971 = vadd.f32 %v2802, %v2970
        %v2972 = vpop.f32.mrf.mxu0
        %v2973 = vadd.f32 %v2804, %v2972
        %2974 = vmatmul.bf16.gmra.mxu0 %v1763
        %v2975 = vpop.f32.mrf.mxu0
        %v2976 = vadd.f32 %v2807, %v2975
        %v2977 = vpop.f32.mrf.mxu0
        %v2978 = vadd.f32 %v2809, %v2977
        %2979 = vmatmul.bf16.gmra.mxu0 %v1771
        %v2980 = vpop.f32.mrf.mxu0
        %v2981 = vadd.f32 %v2812, %v2980
        %v2982 = vpop.f32.mrf.mxu0
        %v2983 = vadd.f32 %v2814, %v2982
        %2984 = vmatmul.bf16.gmra.mxu0 %v1779
        %v2985 = vpop.f32.mrf.mxu0
        %v2986 = vadd.f32 %v2817, %v2985
        %v2987 = vpop.f32.mrf.mxu0
        %v2988 = vadd.f32 %v2819, %v2987
        %2989 = vmatmul.bf16.gmra.mxu0 %v1787
        %v2990 = vpop.f32.mrf.mxu0
        %v2991 = vadd.f32 %v2822, %v2990
        %v2992 = vpop.f32.mrf.mxu0
        %v2993 = vadd.f32 %v2824, %v2992
        %2994 = vmatmul.bf16.gmra.mxu0 %v1795
        %v2995 = vpop.f32.mrf.mxu0
        %v2996 = vadd.f32 %v2827, %v2995
        %v2997 = vpop.f32.mrf.mxu0
        %v2998 = vadd.f32 %v2829, %v2997
        %2999 = vmatmul.bf16.gmra.mxu0 %v1803
        %v3000 = vpop.f32.mrf.mxu0
        %v3001 = vadd.f32 %v2832, %v3000
        %v3002 = vpop.f32.mrf.mxu0
        %v3003 = vadd.f32 %v2834, %v3002
        %3004 = vmatmul.bf16.gmra.mxu0 %v1811
        %v3005 = vpop.f32.mrf.mxu0
        %v3006 = vadd.f32 %v2837, %v3005
        %v3007 = vpop.f32.mrf.mxu0
        %v3008 = vadd.f32 %v2839, %v3007
        %3009 = vmatmul.bf16.gmra.mxu0 %v1819
        %v3010 = vpop.f32.mrf.mxu0
        %v3011 = vadd.f32 %v2842, %v3010
        %v3012 = vpop.f32.mrf.mxu0
        %v3013 = vadd.f32 %v2844, %v3012
        %3014 = vmatmul.bf16.gmra.mxu0 %v1827
        %v3015 = vpop.f32.mrf.mxu0
        %v3016 = vadd.f32 %v2847, %v3015
        %v3017 = vpop.f32.mrf.mxu0
        %v3018 = vadd.f32 %v2849, %v3017
        %3019 = vdwg.mxu0
        %3020 = vmatpush.bf16.msra.mxu0 %v2255
        %3021 = vmatpush.bf16.msra.mxu0 %v2254
        %3022 = vmatpush.bf16.msra.mxu0 %v2253
        %3023 = vmatpush.bf16.msra.mxu0 %v2252
        %3024 = vmatpush.bf16.msra.mxu0 %v2251
        %3025 = vmatpush.bf16.msra.mxu0 %v2250
        %3026 = vmatpush.bf16.msra.mxu0 %v2249
        %3027 = vmatpush.bf16.msra.mxu0 %v2248
        %3028 = vmatmul.bf16.gmra.mxu0 %v1580
        %v3029 = vpop.f32.mrf.mxu0
        %v3030 = vadd.f32 %v2861, %v3029
        %v3031 = vpop.f32.mrf.mxu0
        %v3032 = vadd.f32 %v2863, %v3031
        %3033 = vmatmul.bf16.gmra.mxu0 %v1588
        %v3034 = vpop.f32.mrf.mxu0
        %v3035 = vadd.f32 %v2866, %v3034
        %v3036 = vpop.f32.mrf.mxu0
        %v3037 = vadd.f32 %v2868, %v3036
        %3038 = vmatmul.bf16.gmra.mxu0 %v1596
        %v3039 = vpop.f32.mrf.mxu0
        %v3040 = vadd.f32 %v2871, %v3039
        %v3041 = vpop.f32.mrf.mxu0
        %v3042 = vadd.f32 %v2873, %v3041
        %3043 = vmatmul.bf16.gmra.mxu0 %v1604
        %v3044 = vpop.f32.mrf.mxu0
        %v3045 = vadd.f32 %v2876, %v3044
        %v3046 = vpop.f32.mrf.mxu0
        %v3047 = vadd.f32 %v2878, %v3046
        %3048 = vmatmul.bf16.gmra.mxu0 %v1612
        %v3049 = vpop.f32.mrf.mxu0
        %v3050 = vadd.f32 %v2881, %v3049
        %v3051 = vpop.f32.mrf.mxu0
        %v3052 = vadd.f32 %v2883, %v3051
        %3053 = vmatmul.bf16.gmra.mxu0 %v1620
        %v3054 = vpop.f32.mrf.mxu0
        %v3055 = vadd.f32 %v2886, %v3054
        %v3056 = vpop.f32.mrf.mxu0
        %v3057 = vadd.f32 %v2888, %v3056
        %3058 = vmatmul.bf16.gmra.mxu0 %v1628
        %v3059 = vpop.f32.mrf.mxu0
        %v3060 = vadd.f32 %v2891, %v3059
        %v3061 = vpop.f32.mrf.mxu0
        %v3062 = vadd.f32 %v2893, %v3061
        %3063 = vmatmul.bf16.gmra.mxu0 %v1636
        %v3064 = vpop.f32.mrf.mxu0
        %v3065 = vadd.f32 %v2896, %v3064
        %v3066 = vpop.f32.mrf.mxu0
        %v3067 = vadd.f32 %v2898, %v3066
        %3068 = vmatmul.bf16.gmra.mxu0 %v1644
        %v3069 = vpop.f32.mrf.mxu0
        %v3070 = vadd.f32 %v2901, %v3069
        %v3071 = vpop.f32.mrf.mxu0
        %v3072 = vadd.f32 %v2903, %v3071
        %3073 = vmatmul.bf16.gmra.mxu0 %v1652
        %v3074 = vpop.f32.mrf.mxu0
        %v3075 = vadd.f32 %v2906, %v3074
        %v3076 = vpop.f32.mrf.mxu0
        %v3077 = vadd.f32 %v2908, %v3076
        %3078 = vmatmul.bf16.gmra.mxu0 %v1660
        %v3079 = vpop.f32.mrf.mxu0
        %v3080 = vadd.f32 %v2911, %v3079
        %v3081 = vpop.f32.mrf.mxu0
        %v3082 = vadd.f32 %v2913, %v3081
        %3083 = vmatmul.bf16.gmra.mxu0 %v1668
        %v3084 = vpop.f32.mrf.mxu0
        %v3085 = vadd.f32 %v2916, %v3084
        %v3086 = vpop.f32.mrf.mxu0
        %v3087 = vadd.f32 %v2918, %v3086
        %3088 = vmatmul.bf16.gmra.mxu0 %v1676
        %v3089 = vpop.f32.mrf.mxu0
        %v3090 = vadd.f32 %v2921, %v3089
        %v3091 = vpop.f32.mrf.mxu0
        %v3092 = vadd.f32 %v2923, %v3091
        %3093 = vmatmul.bf16.gmra.mxu0 %v1684
        %v3094 = vpop.f32.mrf.mxu0
        %v3095 = vadd.f32 %v2926, %v3094
        %v3096 = vpop.f32.mrf.mxu0
        %v3097 = vadd.f32 %v2928, %v3096
        %3098 = vmatmul.bf16.gmra.mxu0 %v1692
        %v3099 = vpop.f32.mrf.mxu0
        %v3100 = vadd.f32 %v2931, %v3099
        %v3101 = vpop.f32.mrf.mxu0
        %v3102 = vadd.f32 %v2933, %v3101
        %3103 = vmatmul.bf16.gmra.mxu0 %v1700
        %v3104 = vpop.f32.mrf.mxu0
        %v3105 = vadd.f32 %v2936, %v3104
        %v3106 = vpop.f32.mrf.mxu0
        %v3107 = vadd.f32 %v2938, %v3106
        %3108 = vmatmul.bf16.gmra.mxu0 %v1708
        %v3109 = vpop.f32.mrf.mxu0
        %v3110 = vadd.f32 %v2941, %v3109
        %v3111 = vpop.f32.mrf.mxu0
        %v3112 = vadd.f32 %v2943, %v3111
        %3113 = vmatmul.bf16.gmra.mxu0 %v1716
        %v3114 = vpop.f32.mrf.mxu0
        %v3115 = vadd.f32 %v2946, %v3114
        %v3116 = vpop.f32.mrf.mxu0
        %v3117 = vadd.f32 %v2948, %v3116
        %3118 = vmatmul.bf16.gmra.mxu0 %v1724
        %v3119 = vpop.f32.mrf.mxu0
        %v3120 = vadd.f32 %v2951, %v3119
        %v3121 = vpop.f32.mrf.mxu0
        %v3122 = vadd.f32 %v2953, %v3121
        %3123 = vmatmul.bf16.gmra.mxu0 %v1732
        %v3124 = vpop.f32.mrf.mxu0
        %v3125 = vadd.f32 %v2956, %v3124
        %v3126 = vpop.f32.mrf.mxu0
        %v3127 = vadd.f32 %v2958, %v3126
        %3128 = vmatmul.bf16.gmra.mxu0 %v1740
        %v3129 = vpop.f32.mrf.mxu0
        %v3130 = vadd.f32 %v2961, %v3129
        %v3131 = vpop.f32.mrf.mxu0
        %v3132 = vadd.f32 %v2963, %v3131
        %3133 = vmatmul.bf16.gmra.mxu0 %v1748
        %v3134 = vpop.f32.mrf.mxu0
        %v3135 = vadd.f32 %v2966, %v3134
        %v3136 = vpop.f32.mrf.mxu0
        %v3137 = vadd.f32 %v2968, %v3136
        %3138 = vmatmul.bf16.gmra.mxu0 %v1756
        %v3139 = vpop.f32.mrf.mxu0
        %v3140 = vadd.f32 %v2971, %v3139
        %v3141 = vpop.f32.mrf.mxu0
        %v3142 = vadd.f32 %v2973, %v3141
        %3143 = vmatmul.bf16.gmra.mxu0 %v1764
        %v3144 = vpop.f32.mrf.mxu0
        %v3145 = vadd.f32 %v2976, %v3144
        %v3146 = vpop.f32.mrf.mxu0
        %v3147 = vadd.f32 %v2978, %v3146
        %3148 = vmatmul.bf16.gmra.mxu0 %v1772
        %v3149 = vpop.f32.mrf.mxu0
        %v3150 = vadd.f32 %v2981, %v3149
        %v3151 = vpop.f32.mrf.mxu0
        %v3152 = vadd.f32 %v2983, %v3151
        %3153 = vmatmul.bf16.gmra.mxu0 %v1780
        %v3154 = vpop.f32.mrf.mxu0
        %v3155 = vadd.f32 %v2986, %v3154
        %v3156 = vpop.f32.mrf.mxu0
        %v3157 = vadd.f32 %v2988, %v3156
        %3158 = vmatmul.bf16.gmra.mxu0 %v1788
        %v3159 = vpop.f32.mrf.mxu0
        %v3160 = vadd.f32 %v2991, %v3159
        %v3161 = vpop.f32.mrf.mxu0
        %v3162 = vadd.f32 %v2993, %v3161
        %3163 = vmatmul.bf16.gmra.mxu0 %v1796
        %v3164 = vpop.f32.mrf.mxu0
        %v3165 = vadd.f32 %v2996, %v3164
        %v3166 = vpop.f32.mrf.mxu0
        %v3167 = vadd.f32 %v2998, %v3166
        %3168 = vmatmul.bf16.gmra.mxu0 %v1804
        %v3169 = vpop.f32.mrf.mxu0
        %v3170 = vadd.f32 %v3001, %v3169
        %v3171 = vpop.f32.mrf.mxu0
        %v3172 = vadd.f32 %v3003, %v3171
        %3173 = vmatmul.bf16.gmra.mxu0 %v1812
        %v3174 = vpop.f32.mrf.mxu0
        %v3175 = vadd.f32 %v3006, %v3174
        %v3176 = vpop.f32.mrf.mxu0
        %v3177 = vadd.f32 %v3008, %v3176
        %3178 = vmatmul.bf16.gmra.mxu0 %v1820
        %v3179 = vpop.f32.mrf.mxu0
        %v3180 = vadd.f32 %v3011, %v3179
        %v3181 = vpop.f32.mrf.mxu0
        %v3182 = vadd.f32 %v3013, %v3181
        %3183 = vmatmul.bf16.gmra.mxu0 %v1828
        %v3184 = vpop.f32.mrf.mxu0
        %v3185 = vadd.f32 %v3016, %v3184
        %v3186 = vpop.f32.mrf.mxu0
        %v3187 = vadd.f32 %v3018, %v3186
        %3188 = vdwg.mxu0
        %3189 = vmatpush.bf16.msra.mxu0 %v2263
        %3190 = vmatpush.bf16.msra.mxu0 %v2262
        %3191 = vmatpush.bf16.msra.mxu0 %v2261
        %3192 = vmatpush.bf16.msra.mxu0 %v2260
        %3193 = vmatpush.bf16.msra.mxu0 %v2259
        %3194 = vmatpush.bf16.msra.mxu0 %v2258
        %3195 = vmatpush.bf16.msra.mxu0 %v2257
        %3196 = vmatpush.bf16.msra.mxu0 %v2256
        %3197 = vmatmul.bf16.gmra.mxu0 %v1581
        %v3198 = vpop.f32.mrf.mxu0
        %v3199 = vadd.f32 %v3030, %v3198
        %v3200 = vpop.f32.mrf.mxu0
        %v3201 = vadd.f32 %v3032, %v3200
        %3202 = vmatmul.bf16.gmra.mxu0 %v1589
        %v3203 = vpop.f32.mrf.mxu0
        %v3204 = vadd.f32 %v3035, %v3203
        %v3205 = vpop.f32.mrf.mxu0
        %v3206 = vadd.f32 %v3037, %v3205
        %3207 = vmatmul.bf16.gmra.mxu0 %v1597
        %v3208 = vpop.f32.mrf.mxu0
        %v3209 = vadd.f32 %v3040, %v3208
        %v3210 = vpop.f32.mrf.mxu0
        %v3211 = vadd.f32 %v3042, %v3210
        %3212 = vmatmul.bf16.gmra.mxu0 %v1605
        %v3213 = vpop.f32.mrf.mxu0
        %v3214 = vadd.f32 %v3045, %v3213
        %v3215 = vpop.f32.mrf.mxu0
        %v3216 = vadd.f32 %v3047, %v3215
        %3217 = vmatmul.bf16.gmra.mxu0 %v1613
        %v3218 = vpop.f32.mrf.mxu0
        %v3219 = vadd.f32 %v3050, %v3218
        %v3220 = vpop.f32.mrf.mxu0
        %v3221 = vadd.f32 %v3052, %v3220
        %3222 = vmatmul.bf16.gmra.mxu0 %v1621
        %v3223 = vpop.f32.mrf.mxu0
        %v3224 = vadd.f32 %v3055, %v3223
        %v3225 = vpop.f32.mrf.mxu0
        %v3226 = vadd.f32 %v3057, %v3225
        %3227 = vmatmul.bf16.gmra.mxu0 %v1629
        %v3228 = vpop.f32.mrf.mxu0
        %v3229 = vadd.f32 %v3060, %v3228
        %v3230 = vpop.f32.mrf.mxu0
        %v3231 = vadd.f32 %v3062, %v3230
        %3232 = vmatmul.bf16.gmra.mxu0 %v1637
        %v3233 = vpop.f32.mrf.mxu0
        %v3234 = vadd.f32 %v3065, %v3233
        %v3235 = vpop.f32.mrf.mxu0
        %v3236 = vadd.f32 %v3067, %v3235
        %3237 = vmatmul.bf16.gmra.mxu0 %v1645
        %v3238 = vpop.f32.mrf.mxu0
        %v3239 = vadd.f32 %v3070, %v3238
        %v3240 = vpop.f32.mrf.mxu0
        %v3241 = vadd.f32 %v3072, %v3240
        %3242 = vmatmul.bf16.gmra.mxu0 %v1653
        %v3243 = vpop.f32.mrf.mxu0
        %v3244 = vadd.f32 %v3075, %v3243
        %v3245 = vpop.f32.mrf.mxu0
        %v3246 = vadd.f32 %v3077, %v3245
        %3247 = vmatmul.bf16.gmra.mxu0 %v1661
        %v3248 = vpop.f32.mrf.mxu0
        %v3249 = vadd.f32 %v3080, %v3248
        %v3250 = vpop.f32.mrf.mxu0
        %v3251 = vadd.f32 %v3082, %v3250
        %3252 = vmatmul.bf16.gmra.mxu0 %v1669
        %v3253 = vpop.f32.mrf.mxu0
        %v3254 = vadd.f32 %v3085, %v3253
        %v3255 = vpop.f32.mrf.mxu0
        %v3256 = vadd.f32 %v3087, %v3255
        %3257 = vmatmul.bf16.gmra.mxu0 %v1677
        %v3258 = vpop.f32.mrf.mxu0
        %v3259 = vadd.f32 %v3090, %v3258
        %v3260 = vpop.f32.mrf.mxu0
        %v3261 = vadd.f32 %v3092, %v3260
        %3262 = vmatmul.bf16.gmra.mxu0 %v1685
        %v3263 = vpop.f32.mrf.mxu0
        %v3264 = vadd.f32 %v3095, %v3263
        %v3265 = vpop.f32.mrf.mxu0
        %v3266 = vadd.f32 %v3097, %v3265
        %3267 = vmatmul.bf16.gmra.mxu0 %v1693
        %v3268 = vpop.f32.mrf.mxu0
        %v3269 = vadd.f32 %v3100, %v3268
        %v3270 = vpop.f32.mrf.mxu0
        %v3271 = vadd.f32 %v3102, %v3270
        %3272 = vmatmul.bf16.gmra.mxu0 %v1701
        %v3273 = vpop.f32.mrf.mxu0
        %v3274 = vadd.f32 %v3105, %v3273
        %v3275 = vpop.f32.mrf.mxu0
        %v3276 = vadd.f32 %v3107, %v3275
        %3277 = vmatmul.bf16.gmra.mxu0 %v1709
        %v3278 = vpop.f32.mrf.mxu0
        %v3279 = vadd.f32 %v3110, %v3278
        %v3280 = vpop.f32.mrf.mxu0
        %v3281 = vadd.f32 %v3112, %v3280
        %3282 = vmatmul.bf16.gmra.mxu0 %v1717
        %v3283 = vpop.f32.mrf.mxu0
        %v3284 = vadd.f32 %v3115, %v3283
        %v3285 = vpop.f32.mrf.mxu0
        %v3286 = vadd.f32 %v3117, %v3285
        %3287 = vmatmul.bf16.gmra.mxu0 %v1725
        %v3288 = vpop.f32.mrf.mxu0
        %v3289 = vadd.f32 %v3120, %v3288
        %v3290 = vpop.f32.mrf.mxu0
        %v3291 = vadd.f32 %v3122, %v3290
        %3292 = vmatmul.bf16.gmra.mxu0 %v1733
        %v3293 = vpop.f32.mrf.mxu0
        %v3294 = vadd.f32 %v3125, %v3293
        %v3295 = vpop.f32.mrf.mxu0
        %v3296 = vadd.f32 %v3127, %v3295
        %3297 = vmatmul.bf16.gmra.mxu0 %v1741
        %v3298 = vpop.f32.mrf.mxu0
        %v3299 = vadd.f32 %v3130, %v3298
        %v3300 = vpop.f32.mrf.mxu0
        %v3301 = vadd.f32 %v3132, %v3300
        %3302 = vmatmul.bf16.gmra.mxu0 %v1749
        %v3303 = vpop.f32.mrf.mxu0
        %v3304 = vadd.f32 %v3135, %v3303
        %v3305 = vpop.f32.mrf.mxu0
        %v3306 = vadd.f32 %v3137, %v3305
        %3307 = vmatmul.bf16.gmra.mxu0 %v1757
        %v3308 = vpop.f32.mrf.mxu0
        %v3309 = vadd.f32 %v3140, %v3308
        %v3310 = vpop.f32.mrf.mxu0
        %v3311 = vadd.f32 %v3142, %v3310
        %3312 = vmatmul.bf16.gmra.mxu0 %v1765
        %v3313 = vpop.f32.mrf.mxu0
        %v3314 = vadd.f32 %v3145, %v3313
        %v3315 = vpop.f32.mrf.mxu0
        %v3316 = vadd.f32 %v3147, %v3315
        %3317 = vmatmul.bf16.gmra.mxu0 %v1773
        %v3318 = vpop.f32.mrf.mxu0
        %v3319 = vadd.f32 %v3150, %v3318
        %v3320 = vpop.f32.mrf.mxu0
        %v3321 = vadd.f32 %v3152, %v3320
        %3322 = vmatmul.bf16.gmra.mxu0 %v1781
        %v3323 = vpop.f32.mrf.mxu0
        %v3324 = vadd.f32 %v3155, %v3323
        %v3325 = vpop.f32.mrf.mxu0
        %v3326 = vadd.f32 %v3157, %v3325
        %3327 = vmatmul.bf16.gmra.mxu0 %v1789
        %v3328 = vpop.f32.mrf.mxu0
        %v3329 = vadd.f32 %v3160, %v3328
        %v3330 = vpop.f32.mrf.mxu0
        %v3331 = vadd.f32 %v3162, %v3330
        %3332 = vmatmul.bf16.gmra.mxu0 %v1797
        %v3333 = vpop.f32.mrf.mxu0
        %v3334 = vadd.f32 %v3165, %v3333
        %v3335 = vpop.f32.mrf.mxu0
        %v3336 = vadd.f32 %v3167, %v3335
        %3337 = vmatmul.bf16.gmra.mxu0 %v1805
        %v3338 = vpop.f32.mrf.mxu0
        %v3339 = vadd.f32 %v3170, %v3338
        %v3340 = vpop.f32.mrf.mxu0
        %v3341 = vadd.f32 %v3172, %v3340
        %3342 = vmatmul.bf16.gmra.mxu0 %v1813
        %v3343 = vpop.f32.mrf.mxu0
        %v3344 = vadd.f32 %v3175, %v3343
        %v3345 = vpop.f32.mrf.mxu0
        %v3346 = vadd.f32 %v3177, %v3345
        %3347 = vmatmul.bf16.gmra.mxu0 %v1821
        %v3348 = vpop.f32.mrf.mxu0
        %v3349 = vadd.f32 %v3180, %v3348
        %v3350 = vpop.f32.mrf.mxu0
        %v3351 = vadd.f32 %v3182, %v3350
        %3352 = vmatmul.bf16.gmra.mxu0 %v1829
        %v3353 = vpop.f32.mrf.mxu0
        %v3354 = vadd.f32 %v3185, %v3353
        %v3355 = vpop.f32.mrf.mxu0
        %v3356 = vadd.f32 %v3187, %v3355
        %3357 = vdwg.mxu0
        %3358 = vmatpush.bf16.msra.mxu0 %v2271
        %3359 = vmatpush.bf16.msra.mxu0 %v2270
        %3360 = vmatpush.bf16.msra.mxu0 %v2269
        %3361 = vmatpush.bf16.msra.mxu0 %v2268
        %3362 = vmatpush.bf16.msra.mxu0 %v2267
        %3363 = vmatpush.bf16.msra.mxu0 %v2266
        %3364 = vmatpush.bf16.msra.mxu0 %v2265
        %3365 = vmatpush.bf16.msra.mxu0 %v2264
        %3366 = vmatmul.bf16.gmra.mxu0 %v1582
        %v3367 = vpop.f32.mrf.mxu0
        %v3368 = vadd.f32 %v3199, %v3367
        %v3369 = vpop.f32.mrf.mxu0
        %v3370 = vadd.f32 %v3201, %v3369
        %3371 = vmatmul.bf16.gmra.mxu0 %v1590
        %v3372 = vpop.f32.mrf.mxu0
        %v3373 = vadd.f32 %v3204, %v3372
        %v3374 = vpop.f32.mrf.mxu0
        %v3375 = vadd.f32 %v3206, %v3374
        %3376 = vmatmul.bf16.gmra.mxu0 %v1598
        %v3377 = vpop.f32.mrf.mxu0
        %v3378 = vadd.f32 %v3209, %v3377
        %v3379 = vpop.f32.mrf.mxu0
        %v3380 = vadd.f32 %v3211, %v3379
        %3381 = vmatmul.bf16.gmra.mxu0 %v1606
        %v3382 = vpop.f32.mrf.mxu0
        %v3383 = vadd.f32 %v3214, %v3382
        %v3384 = vpop.f32.mrf.mxu0
        %v3385 = vadd.f32 %v3216, %v3384
        %3386 = vmatmul.bf16.gmra.mxu0 %v1614
        %v3387 = vpop.f32.mrf.mxu0
        %v3388 = vadd.f32 %v3219, %v3387
        %v3389 = vpop.f32.mrf.mxu0
        %v3390 = vadd.f32 %v3221, %v3389
        %3391 = vmatmul.bf16.gmra.mxu0 %v1622
        %v3392 = vpop.f32.mrf.mxu0
        %v3393 = vadd.f32 %v3224, %v3392
        %v3394 = vpop.f32.mrf.mxu0
        %v3395 = vadd.f32 %v3226, %v3394
        %3396 = vmatmul.bf16.gmra.mxu0 %v1630
        %v3397 = vpop.f32.mrf.mxu0
        %v3398 = vadd.f32 %v3229, %v3397
        %v3399 = vpop.f32.mrf.mxu0
        %v3400 = vadd.f32 %v3231, %v3399
        %3401 = vmatmul.bf16.gmra.mxu0 %v1638
        %v3402 = vpop.f32.mrf.mxu0
        %v3403 = vadd.f32 %v3234, %v3402
        %v3404 = vpop.f32.mrf.mxu0
        %v3405 = vadd.f32 %v3236, %v3404
        %3406 = vmatmul.bf16.gmra.mxu0 %v1646
        %v3407 = vpop.f32.mrf.mxu0
        %v3408 = vadd.f32 %v3239, %v3407
        %v3409 = vpop.f32.mrf.mxu0
        %v3410 = vadd.f32 %v3241, %v3409
        %3411 = vmatmul.bf16.gmra.mxu0 %v1654
        %v3412 = vpop.f32.mrf.mxu0
        %v3413 = vadd.f32 %v3244, %v3412
        %v3414 = vpop.f32.mrf.mxu0
        %v3415 = vadd.f32 %v3246, %v3414
        %3416 = vmatmul.bf16.gmra.mxu0 %v1662
        %v3417 = vpop.f32.mrf.mxu0
        %v3418 = vadd.f32 %v3249, %v3417
        %v3419 = vpop.f32.mrf.mxu0
        %v3420 = vadd.f32 %v3251, %v3419
        %3421 = vmatmul.bf16.gmra.mxu0 %v1670
        %v3422 = vpop.f32.mrf.mxu0
        %v3423 = vadd.f32 %v3254, %v3422
        %v3424 = vpop.f32.mrf.mxu0
        %v3425 = vadd.f32 %v3256, %v3424
        %3426 = vmatmul.bf16.gmra.mxu0 %v1678
        %v3427 = vpop.f32.mrf.mxu0
        %v3428 = vadd.f32 %v3259, %v3427
        %v3429 = vpop.f32.mrf.mxu0
        %v3430 = vadd.f32 %v3261, %v3429
        %3431 = vmatmul.bf16.gmra.mxu0 %v1686
        %v3432 = vpop.f32.mrf.mxu0
        %v3433 = vadd.f32 %v3264, %v3432
        %v3434 = vpop.f32.mrf.mxu0
        %v3435 = vadd.f32 %v3266, %v3434
        %3436 = vmatmul.bf16.gmra.mxu0 %v1694
        %v3437 = vpop.f32.mrf.mxu0
        %v3438 = vadd.f32 %v3269, %v3437
        %v3439 = vpop.f32.mrf.mxu0
        %v3440 = vadd.f32 %v3271, %v3439
        %3441 = vmatmul.bf16.gmra.mxu0 %v1702
        %v3442 = vpop.f32.mrf.mxu0
        %v3443 = vadd.f32 %v3274, %v3442
        %v3444 = vpop.f32.mrf.mxu0
        %v3445 = vadd.f32 %v3276, %v3444
        %3446 = vmatmul.bf16.gmra.mxu0 %v1710
        %v3447 = vpop.f32.mrf.mxu0
        %v3448 = vadd.f32 %v3279, %v3447
        %v3449 = vpop.f32.mrf.mxu0
        %v3450 = vadd.f32 %v3281, %v3449
        %3451 = vmatmul.bf16.gmra.mxu0 %v1718
        %v3452 = vpop.f32.mrf.mxu0
        %v3453 = vadd.f32 %v3284, %v3452
        %v3454 = vpop.f32.mrf.mxu0
        %v3455 = vadd.f32 %v3286, %v3454
        %3456 = vmatmul.bf16.gmra.mxu0 %v1726
        %v3457 = vpop.f32.mrf.mxu0
        %v3458 = vadd.f32 %v3289, %v3457
        %v3459 = vpop.f32.mrf.mxu0
        %v3460 = vadd.f32 %v3291, %v3459
        %3461 = vmatmul.bf16.gmra.mxu0 %v1734
        %v3462 = vpop.f32.mrf.mxu0
        %v3463 = vadd.f32 %v3294, %v3462
        %v3464 = vpop.f32.mrf.mxu0
        %v3465 = vadd.f32 %v3296, %v3464
        %3466 = vmatmul.bf16.gmra.mxu0 %v1742
        %v3467 = vpop.f32.mrf.mxu0
        %v3468 = vadd.f32 %v3299, %v3467
        %v3469 = vpop.f32.mrf.mxu0
        %v3470 = vadd.f32 %v3301, %v3469
        %3471 = vmatmul.bf16.gmra.mxu0 %v1750
        %v3472 = vpop.f32.mrf.mxu0
        %v3473 = vadd.f32 %v3304, %v3472
        %v3474 = vpop.f32.mrf.mxu0
        %v3475 = vadd.f32 %v3306, %v3474
        %3476 = vmatmul.bf16.gmra.mxu0 %v1758
        %v3477 = vpop.f32.mrf.mxu0
        %v3478 = vadd.f32 %v3309, %v3477
        %v3479 = vpop.f32.mrf.mxu0
        %v3480 = vadd.f32 %v3311, %v3479
        %3481 = vmatmul.bf16.gmra.mxu0 %v1766
        %v3482 = vpop.f32.mrf.mxu0
        %v3483 = vadd.f32 %v3314, %v3482
        %v3484 = vpop.f32.mrf.mxu0
        %v3485 = vadd.f32 %v3316, %v3484
        %3486 = vmatmul.bf16.gmra.mxu0 %v1774
        %v3487 = vpop.f32.mrf.mxu0
        %v3488 = vadd.f32 %v3319, %v3487
        %v3489 = vpop.f32.mrf.mxu0
        %v3490 = vadd.f32 %v3321, %v3489
        %3491 = vmatmul.bf16.gmra.mxu0 %v1782
        %v3492 = vpop.f32.mrf.mxu0
        %v3493 = vadd.f32 %v3324, %v3492
        %v3494 = vpop.f32.mrf.mxu0
        %v3495 = vadd.f32 %v3326, %v3494
        %3496 = vmatmul.bf16.gmra.mxu0 %v1790
        %v3497 = vpop.f32.mrf.mxu0
        %v3498 = vadd.f32 %v3329, %v3497
        %v3499 = vpop.f32.mrf.mxu0
        %v3500 = vadd.f32 %v3331, %v3499
        %3501 = vmatmul.bf16.gmra.mxu0 %v1798
        %v3502 = vpop.f32.mrf.mxu0
        %v3503 = vadd.f32 %v3334, %v3502
        %v3504 = vpop.f32.mrf.mxu0
        %v3505 = vadd.f32 %v3336, %v3504
        %3506 = vmatmul.bf16.gmra.mxu0 %v1806
        %v3507 = vpop.f32.mrf.mxu0
        %v3508 = vadd.f32 %v3339, %v3507
        %v3509 = vpop.f32.mrf.mxu0
        %v3510 = vadd.f32 %v3341, %v3509
        %3511 = vmatmul.bf16.gmra.mxu0 %v1814
        %v3512 = vpop.f32.mrf.mxu0
        %v3513 = vadd.f32 %v3344, %v3512
        %v3514 = vpop.f32.mrf.mxu0
        %v3515 = vadd.f32 %v3346, %v3514
        %3516 = vmatmul.bf16.gmra.mxu0 %v1822
        %v3517 = vpop.f32.mrf.mxu0
        %v3518 = vadd.f32 %v3349, %v3517
        %v3519 = vpop.f32.mrf.mxu0
        %v3520 = vadd.f32 %v3351, %v3519
        %3521 = vmatmul.bf16.gmra.mxu0 %v1830
        %v3522 = vpop.f32.mrf.mxu0
        %v3523 = vadd.f32 %v3354, %v3522
        %v3524 = vpop.f32.mrf.mxu0
        %v3525 = vadd.f32 %v3356, %v3524
        %3526 = vdwg.mxu0
        %3527 = vmatpush.bf16.msra.mxu0 %v2279
        %3528 = vmatpush.bf16.msra.mxu0 %v2278
        %3529 = vmatpush.bf16.msra.mxu0 %v2277
        %3530 = vmatpush.bf16.msra.mxu0 %v2276
        %3531 = vmatpush.bf16.msra.mxu0 %v2275
        %3532 = vmatpush.bf16.msra.mxu0 %v2274
        %3533 = vmatpush.bf16.msra.mxu0 %v2273
        %3534 = vmatpush.bf16.msra.mxu0 %v2272
        %3535 = vmatmul.bf16.gmra.mxu0 %v1583
        %v3536 = vpop.f32.mrf.mxu0
        %v3537 = vadd.f32 %v3368, %v3536
        %v3538 = vpop.f32.mrf.mxu0
        %v3539 = vadd.f32 %v3370, %v3538
        %3540 = vmatmul.bf16.gmra.mxu0 %v1591
        %v3541 = vpop.f32.mrf.mxu0
        %v3542 = vadd.f32 %v3373, %v3541
        %v3543 = vpop.f32.mrf.mxu0
        %v3544 = vadd.f32 %v3375, %v3543
        %3545 = vmatmul.bf16.gmra.mxu0 %v1599
        %v3546 = vpop.f32.mrf.mxu0
        %v3547 = vadd.f32 %v3378, %v3546
        %v3548 = vpop.f32.mrf.mxu0
        %v3549 = vadd.f32 %v3380, %v3548
        %3550 = vmatmul.bf16.gmra.mxu0 %v1607
        %v3551 = vpop.f32.mrf.mxu0
        %v3552 = vadd.f32 %v3383, %v3551
        %v3553 = vpop.f32.mrf.mxu0
        %v3554 = vadd.f32 %v3385, %v3553
        %3555 = vmatmul.bf16.gmra.mxu0 %v1615
        %v3556 = vpop.f32.mrf.mxu0
        %v3557 = vadd.f32 %v3388, %v3556
        %v3558 = vpop.f32.mrf.mxu0
        %v3559 = vadd.f32 %v3390, %v3558
        %3560 = vmatmul.bf16.gmra.mxu0 %v1623
        %v3561 = vpop.f32.mrf.mxu0
        %v3562 = vadd.f32 %v3393, %v3561
        %v3563 = vpop.f32.mrf.mxu0
        %v3564 = vadd.f32 %v3395, %v3563
        %3565 = vmatmul.bf16.gmra.mxu0 %v1631
        %v3566 = vpop.f32.mrf.mxu0
        %v3567 = vadd.f32 %v3398, %v3566
        %v3568 = vpop.f32.mrf.mxu0
        %v3569 = vadd.f32 %v3400, %v3568
        %3570 = vmatmul.bf16.gmra.mxu0 %v1639
        %v3571 = vpop.f32.mrf.mxu0
        %v3572 = vadd.f32 %v3403, %v3571
        %v3573 = vpop.f32.mrf.mxu0
        %v3574 = vadd.f32 %v3405, %v3573
        %3575 = vmatmul.bf16.gmra.mxu0 %v1647
        %v3576 = vpop.f32.mrf.mxu0
        %v3577 = vadd.f32 %v3408, %v3576
        %v3578 = vpop.f32.mrf.mxu0
        %v3579 = vadd.f32 %v3410, %v3578
        %3580 = vmatmul.bf16.gmra.mxu0 %v1655
        %v3581 = vpop.f32.mrf.mxu0
        %v3582 = vadd.f32 %v3413, %v3581
        %v3583 = vpop.f32.mrf.mxu0
        %v3584 = vadd.f32 %v3415, %v3583
        %3585 = vmatmul.bf16.gmra.mxu0 %v1663
        %v3586 = vpop.f32.mrf.mxu0
        %v3587 = vadd.f32 %v3418, %v3586
        %v3588 = vpop.f32.mrf.mxu0
        %v3589 = vadd.f32 %v3420, %v3588
        %3590 = vmatmul.bf16.gmra.mxu0 %v1671
        %v3591 = vpop.f32.mrf.mxu0
        %v3592 = vadd.f32 %v3423, %v3591
        %v3593 = vpop.f32.mrf.mxu0
        %v3594 = vadd.f32 %v3425, %v3593
        %3595 = vmatmul.bf16.gmra.mxu0 %v1679
        %v3596 = vpop.f32.mrf.mxu0
        %v3597 = vadd.f32 %v3428, %v3596
        %v3598 = vpop.f32.mrf.mxu0
        %v3599 = vadd.f32 %v3430, %v3598
        %3600 = vmatmul.bf16.gmra.mxu0 %v1687
        %v3601 = vpop.f32.mrf.mxu0
        %v3602 = vadd.f32 %v3433, %v3601
        %v3603 = vpop.f32.mrf.mxu0
        %v3604 = vadd.f32 %v3435, %v3603
        %3605 = vmatmul.bf16.gmra.mxu0 %v1695
        %v3606 = vpop.f32.mrf.mxu0
        %v3607 = vadd.f32 %v3438, %v3606
        %v3608 = vpop.f32.mrf.mxu0
        %v3609 = vadd.f32 %v3440, %v3608
        %3610 = vmatmul.bf16.gmra.mxu0 %v1703
        %v3611 = vpop.f32.mrf.mxu0
        %v3612 = vadd.f32 %v3443, %v3611
        %v3613 = vpop.f32.mrf.mxu0
        %v3614 = vadd.f32 %v3445, %v3613
        %3615 = vmatmul.bf16.gmra.mxu0 %v1711
        %v3616 = vpop.f32.mrf.mxu0
        %v3617 = vadd.f32 %v3448, %v3616
        %v3618 = vpop.f32.mrf.mxu0
        %v3619 = vadd.f32 %v3450, %v3618
        %3620 = vmatmul.bf16.gmra.mxu0 %v1719
        %v3621 = vpop.f32.mrf.mxu0
        %v3622 = vadd.f32 %v3453, %v3621
        %v3623 = vpop.f32.mrf.mxu0
        %v3624 = vadd.f32 %v3455, %v3623
        %3625 = vmatmul.bf16.gmra.mxu0 %v1727
        %v3626 = vpop.f32.mrf.mxu0
        %v3627 = vadd.f32 %v3458, %v3626
        %v3628 = vpop.f32.mrf.mxu0
        %v3629 = vadd.f32 %v3460, %v3628
        %3630 = vmatmul.bf16.gmra.mxu0 %v1735
        %v3631 = vpop.f32.mrf.mxu0
        %v3632 = vadd.f32 %v3463, %v3631
        %v3633 = vpop.f32.mrf.mxu0
        %v3634 = vadd.f32 %v3465, %v3633
        %3635 = vmatmul.bf16.gmra.mxu0 %v1743
        %v3636 = vpop.f32.mrf.mxu0
        %v3637 = vadd.f32 %v3468, %v3636
        %v3638 = vpop.f32.mrf.mxu0
        %v3639 = vadd.f32 %v3470, %v3638
        %3640 = vmatmul.bf16.gmra.mxu0 %v1751
        %v3641 = vpop.f32.mrf.mxu0
        %v3642 = vadd.f32 %v3473, %v3641
        %v3643 = vpop.f32.mrf.mxu0
        %v3644 = vadd.f32 %v3475, %v3643
        %3645 = vmatmul.bf16.gmra.mxu0 %v1759
        %v3646 = vpop.f32.mrf.mxu0
        %v3647 = vadd.f32 %v3478, %v3646
        %v3648 = vpop.f32.mrf.mxu0
        %v3649 = vadd.f32 %v3480, %v3648
        %3650 = vmatmul.bf16.gmra.mxu0 %v1767
        %v3651 = vpop.f32.mrf.mxu0
        %v3652 = vadd.f32 %v3483, %v3651
        %v3653 = vpop.f32.mrf.mxu0
        %v3654 = vadd.f32 %v3485, %v3653
        %3655 = vmatmul.bf16.gmra.mxu0 %v1775
        %v3656 = vpop.f32.mrf.mxu0
        %v3657 = vadd.f32 %v3488, %v3656
        %v3658 = vpop.f32.mrf.mxu0
        %v3659 = vadd.f32 %v3490, %v3658
        %3660 = vmatmul.bf16.gmra.mxu0 %v1783
        %v3661 = vpop.f32.mrf.mxu0
        %v3662 = vadd.f32 %v3493, %v3661
        %v3663 = vpop.f32.mrf.mxu0
        %v3664 = vadd.f32 %v3495, %v3663
        %3665 = vmatmul.bf16.gmra.mxu0 %v1791
        %v3666 = vpop.f32.mrf.mxu0
        %v3667 = vadd.f32 %v3498, %v3666
        %v3668 = vpop.f32.mrf.mxu0
        %v3669 = vadd.f32 %v3500, %v3668
        %3670 = vmatmul.bf16.gmra.mxu0 %v1799
        %v3671 = vpop.f32.mrf.mxu0
        %v3672 = vadd.f32 %v3503, %v3671
        %v3673 = vpop.f32.mrf.mxu0
        %v3674 = vadd.f32 %v3505, %v3673
        %3675 = vmatmul.bf16.gmra.mxu0 %v1807
        %v3676 = vpop.f32.mrf.mxu0
        %v3677 = vadd.f32 %v3508, %v3676
        %v3678 = vpop.f32.mrf.mxu0
        %v3679 = vadd.f32 %v3510, %v3678
        %3680 = vmatmul.bf16.gmra.mxu0 %v1815
        %v3681 = vpop.f32.mrf.mxu0
        %v3682 = vadd.f32 %v3513, %v3681
        %v3683 = vpop.f32.mrf.mxu0
        %v3684 = vadd.f32 %v3515, %v3683
        %3685 = vmatmul.bf16.gmra.mxu0 %v1823
        %v3686 = vpop.f32.mrf.mxu0
        %v3687 = vadd.f32 %v3518, %v3686
        %v3688 = vpop.f32.mrf.mxu0
        %v3689 = vadd.f32 %v3520, %v3688
        %3690 = vmatmul.bf16.gmra.mxu0 %v1831
        %v3691 = vpop.f32.mrf.mxu0
        %v3692 = vadd.f32 %v3523, %v3691
        %v3693 = vpop.f32.mrf.mxu0
        %v3694 = vadd.f32 %v3525, %v3693
        %3695 = vdwg.mxu0
        %v3696 = vadd.f32 %v360, %v3537
        %v3697 = vadd.f32 %v361, %v3539
        %v3698 = vadd.f32 %v362, %v3542
        %v3699 = vadd.f32 %v363, %v3544
        %v3700 = vadd.f32 %v364, %v3547
        %v3701 = vadd.f32 %v365, %v3549
        %v3702 = vadd.f32 %v366, %v3552
        %v3703 = vadd.f32 %v367, %v3554
        %v3704 = vadd.f32 %v368, %v3557
        %v3705 = vadd.f32 %v369, %v3559
        %v3706 = vadd.f32 %v370, %v3562
        %v3707 = vadd.f32 %v371, %v3564
        %v3708 = vadd.f32 %v372, %v3567
        %v3709 = vadd.f32 %v373, %v3569
        %v3710 = vadd.f32 %v374, %v3572
        %v3711 = vadd.f32 %v375, %v3574
        %v3712 = vadd.f32 %v376, %v3577
        %v3713 = vadd.f32 %v377, %v3579
        %v3714 = vadd.f32 %v378, %v3582
        %v3715 = vadd.f32 %v379, %v3584
        %v3716 = vadd.f32 %v380, %v3587
        %v3717 = vadd.f32 %v381, %v3589
        %v3718 = vadd.f32 %v382, %v3592
        %v3719 = vadd.f32 %v383, %v3594
        %v3720 = vadd.f32 %v384, %v3597
        %v3721 = vadd.f32 %v385, %v3599
        %v3722 = vadd.f32 %v386, %v3602
        %v3723 = vadd.f32 %v387, %v3604
        %v3724 = vadd.f32 %v388, %v3607
        %v3725 = vadd.f32 %v389, %v3609
        %v3726 = vadd.f32 %v390, %v3612
        %v3727 = vadd.f32 %v391, %v3614
        %v3728 = vadd.f32 %v392, %v3617
        %v3729 = vadd.f32 %v393, %v3619
        %v3730 = vadd.f32 %v394, %v3622
        %v3731 = vadd.f32 %v395, %v3624
        %v3732 = vadd.f32 %v396, %v3627
        %v3733 = vadd.f32 %v397, %v3629
        %v3734 = vadd.f32 %v398, %v3632
        %v3735 = vadd.f32 %v399, %v3634
        %v3736 = vadd.f32 %v400, %v3637
        %v3737 = vadd.f32 %v401, %v3639
        %v3738 = vadd.f32 %v402, %v3642
        %v3739 = vadd.f32 %v403, %v3644
        %v3740 = vadd.f32 %v404, %v3647
        %v3741 = vadd.f32 %v405, %v3649
        %v3742 = vadd.f32 %v406, %v3652
        %v3743 = vadd.f32 %v407, %v3654
        %v3744 = vadd.f32 %v408, %v3657
        %v3745 = vadd.f32 %v409, %v3659
        %v3746 = vadd.f32 %v410, %v3662
        %v3747 = vadd.f32 %v411, %v3664
        %v3748 = vadd.f32 %v412, %v3667
        %v3749 = vadd.f32 %v413, %v3669
        %v3750 = vadd.f32 %v414, %v3672
        %v3751 = vadd.f32 %v415, %v3674
        %v3752 = vadd.f32 %v416, %v3677
        %v3753 = vadd.f32 %v417, %v3679
        %v3754 = vadd.f32 %v418, %v3682
        %v3755 = vadd.f32 %v419, %v3684
        %v3756 = vadd.f32 %v420, %v3687
        %v3757 = vadd.f32 %v421, %v3689
        %v3758 = vadd.f32 %v422, %v3692
        %v3759 = vadd.f32 %v423, %v3694
        %3760 = vst [vmem:[%s286] sm:$0xff] %v3696
        %3761 = vst [vmem:[%s286 + $0x8] sm:$0xff] %v3697
        %3762 = vst [vmem:[%s286 + $0x10] sm:$0xff] %v3698
        %3763 = vst [vmem:[%s286 + $0x18] sm:$0xff] %v3699
        %3764 = vst [vmem:[%s286 + $0x20] sm:$0xff] %v3700
        %3765 = vst [vmem:[%s286 + $0x28] sm:$0xff] %v3701
        %3766 = vst [vmem:[%s286 + $0x30] sm:$0xff] %v3702
        %3767 = vst [vmem:[%s286 + $0x38] sm:$0xff] %v3703
        %3768 = vst [vmem:[%s286 + $0x40] sm:$0xff] %v3704
        %3769 = vst [vmem:[%s286 + $0x48] sm:$0xff] %v3705
        %3770 = vst [vmem:[%s286 + $0x50] sm:$0xff] %v3706
        %3771 = vst [vmem:[%s286 + $0x58] sm:$0xff] %v3707
        %3772 = vst [vmem:[%s286 + $0x60] sm:$0xff] %v3708
        %3773 = vst [vmem:[%s286 + $0x68] sm:$0xff] %v3709
        %3774 = vst [vmem:[%s286 + $0x70] sm:$0xff] %v3710
        %3775 = vst [vmem:[%s286 + $0x78] sm:$0xff] %v3711
        %3776 = vst [vmem:[%s286 + $0x80] sm:$0xff] %v3712
        %3777 = vst [vmem:[%s286 + $0x88] sm:$0xff] %v3713
        %3778 = vst [vmem:[%s286 + $0x90] sm:$0xff] %v3714
        %3779 = vst [vmem:[%s286 + $0x98] sm:$0xff] %v3715
        %3780 = vst [vmem:[%s286 + $0xa0] sm:$0xff] %v3716
        %3781 = vst [vmem:[%s286 + $0xa8] sm:$0xff] %v3717
        %3782 = vst [vmem:[%s286 + $0xb0] sm:$0xff] %v3718
        %3783 = vst [vmem:[%s286 + $0xb8] sm:$0xff] %v3719
        %3784 = vst [vmem:[%s286 + $0xc0] sm:$0xff] %v3720
        %3785 = vst [vmem:[%s286 + $0xc8] sm:$0xff] %v3721
        %3786 = vst [vmem:[%s286 + $0xd0] sm:$0xff] %v3722
        %3787 = vst [vmem:[%s286 + $0xd8] sm:$0xff] %v3723
        %3788 = vst [vmem:[%s286 + $0xe0] sm:$0xff] %v3724
        %3789 = vst [vmem:[%s286 + $0xe8] sm:$0xff] %v3725
        %3790 = vst [vmem:[%s286 + $0xf0] sm:$0xff] %v3726
        %3791 = vst [vmem:[%s286 + $0xf8] sm:$0xff] %v3727
        %3792 = vst [vmem:[%s286 + $0x100] sm:$0xff] %v3728
        %3793 = vst [vmem:[%s286 + $0x108] sm:$0xff] %v3729
        %3794 = vst [vmem:[%s286 + $0x110] sm:$0xff] %v3730
        %3795 = vst [vmem:[%s286 + $0x118] sm:$0xff] %v3731
        %3796 = vst [vmem:[%s286 + $0x120] sm:$0xff] %v3732
        %3797 = vst [vmem:[%s286 + $0x128] sm:$0xff] %v3733
        %3798 = vst [vmem:[%s286 + $0x130] sm:$0xff] %v3734
        %3799 = vst [vmem:[%s286 + $0x138] sm:$0xff] %v3735
        %3800 = vst [vmem:[%s286 + $0x140] sm:$0xff] %v3736
        %3801 = vst [vmem:[%s286 + $0x148] sm:$0xff] %v3737
        %3802 = vst [vmem:[%s286 + $0x150] sm:$0xff] %v3738
        %3803 = vst [vmem:[%s286 + $0x158] sm:$0xff] %v3739
        %3804 = vst [vmem:[%s286 + $0x160] sm:$0xff] %v3740
        %3805 = vst [vmem:[%s286 + $0x168] sm:$0xff] %v3741
        %3806 = vst [vmem:[%s286 + $0x170] sm:$0xff] %v3742
        %3807 = vst [vmem:[%s286 + $0x178] sm:$0xff] %v3743
        %3808 = vst [vmem:[%s286 + $0x180] sm:$0xff] %v3744
        %3809 = vst [vmem:[%s286 + $0x188] sm:$0xff] %v3745
        %3810 = vst [vmem:[%s286 + $0x190] sm:$0xff] %v3746
        %3811 = vst [vmem:[%s286 + $0x198] sm:$0xff] %v3747
        %3812 = vst [vmem:[%s286 + $0x1a0] sm:$0xff] %v3748
        %3813 = vst [vmem:[%s286 + $0x1a8] sm:$0xff] %v3749
        %3814 = vst [vmem:[%s286 + $0x1b0] sm:$0xff] %v3750
        %3815 = vst [vmem:[%s286 + $0x1b8] sm:$0xff] %v3751
        %3816 = vst [vmem:[%s286 + $0x1c0] sm:$0xff] %v3752
        %3817 = vst [vmem:[%s286 + $0x1c8] sm:$0xff] %v3753
        %3818 = vst [vmem:[%s286 + $0x1d0] sm:$0xff] %v3754
        %3819 = vst [vmem:[%s286 + $0x1d8] sm:$0xff] %v3755
        %3820 = vst [vmem:[%s286 + $0x1e0] sm:$0xff] %v3756
        %3821 = vst [vmem:[%s286 + $0x1e8] sm:$0xff] %v3757
        %3822 = vst [vmem:[%s286 + $0x1f0] sm:$0xff] %v3758
        %3823 = vst [vmem:[%s286 + $0x1f8] sm:$0xff] %v3759
        // Predicated region
        $region49: #{tpu_custom_call.1} parent=31 // pred_check
          %p3824 = pneg %p292
        $region50: #{tpu_custom_call.1} parent=31 // pred_check_branch
          %3826 = sbr.rel (%p3824) target = $region52
        $region51: #{tpu_custom_call.1} parent=31 // pred_region
          %v3827 = vld [vmem:[%s286] sm:$0xff]
          %v3828 = vld [vmem:[%s286 + $0x8] sm:$0xff]
          %v3829 = vld [vmem:[%s286 + $0x10] sm:$0xff]
          %v3830 = vld [vmem:[%s286 + $0x18] sm:$0xff]
          %v3831 = vld [vmem:[%s286 + $0x20] sm:$0xff]
          %v3832 = vld [vmem:[%s286 + $0x28] sm:$0xff]
          %v3833 = vld [vmem:[%s286 + $0x30] sm:$0xff]
          %v3834 = vld [vmem:[%s286 + $0x38] sm:$0xff]
          %v3835 = vld [vmem:[%s286 + $0x40] sm:$0xff]
          %v3836 = vld [vmem:[%s286 + $0x48] sm:$0xff]
          %v3837 = vld [vmem:[%s286 + $0x50] sm:$0xff]
          %v3838 = vld [vmem:[%s286 + $0x58] sm:$0xff]
          %v3839 = vld [vmem:[%s286 + $0x60] sm:$0xff]
          %v3840 = vld [vmem:[%s286 + $0x68] sm:$0xff]
          %v3841 = vld [vmem:[%s286 + $0x70] sm:$0xff]
          %v3842 = vld [vmem:[%s286 + $0x78] sm:$0xff]
          %v3843 = vld [vmem:[%s286 + $0x80] sm:$0xff]
          %v3844 = vld [vmem:[%s286 + $0x88] sm:$0xff]
          %v3845 = vld [vmem:[%s286 + $0x90] sm:$0xff]
          %v3846 = vld [vmem:[%s286 + $0x98] sm:$0xff]
          %v3847 = vld [vmem:[%s286 + $0xa0] sm:$0xff]
          %v3848 = vld [vmem:[%s286 + $0xa8] sm:$0xff]
          %v3849 = vld [vmem:[%s286 + $0xb0] sm:$0xff]
          %v3850 = vld [vmem:[%s286 + $0xb8] sm:$0xff]
          %v3851 = vld [vmem:[%s286 + $0xc0] sm:$0xff]
          %v3852 = vld [vmem:[%s286 + $0xc8] sm:$0xff]
          %v3853 = vld [vmem:[%s286 + $0xd0] sm:$0xff]
          %v3854 = vld [vmem:[%s286 + $0xd8] sm:$0xff]
          %v3855 = vld [vmem:[%s286 + $0xe0] sm:$0xff]
          %v3856 = vld [vmem:[%s286 + $0xe8] sm:$0xff]
          %v3857 = vld [vmem:[%s286 + $0xf0] sm:$0xff]
          %v3858 = vld [vmem:[%s286 + $0xf8] sm:$0xff]
          %v3859 = vld [vmem:[%s286 + $0x100] sm:$0xff]
          %v3860 = vld [vmem:[%s286 + $0x108] sm:$0xff]
          %v3861 = vld [vmem:[%s286 + $0x110] sm:$0xff]
          %v3862 = vld [vmem:[%s286 + $0x118] sm:$0xff]
          %v3863 = vld [vmem:[%s286 + $0x120] sm:$0xff]
          %v3864 = vld [vmem:[%s286 + $0x128] sm:$0xff]
          %v3865 = vld [vmem:[%s286 + $0x130] sm:$0xff]
          %v3866 = vld [vmem:[%s286 + $0x138] sm:$0xff]
          %v3867 = vld [vmem:[%s286 + $0x140] sm:$0xff]
          %v3868 = vld [vmem:[%s286 + $0x148] sm:$0xff]
          %v3869 = vld [vmem:[%s286 + $0x150] sm:$0xff]
          %v3870 = vld [vmem:[%s286 + $0x158] sm:$0xff]
          %v3871 = vld [vmem:[%s286 + $0x160] sm:$0xff]
          %v3872 = vld [vmem:[%s286 + $0x168] sm:$0xff]
          %v3873 = vld [vmem:[%s286 + $0x170] sm:$0xff]
          %v3874 = vld [vmem:[%s286 + $0x178] sm:$0xff]
          %v3875 = vld [vmem:[%s286 + $0x180] sm:$0xff]
          %v3876 = vld [vmem:[%s286 + $0x188] sm:$0xff]
          %v3877 = vld [vmem:[%s286 + $0x190] sm:$0xff]
          %v3878 = vld [vmem:[%s286 + $0x198] sm:$0xff]
          %v3879 = vld [vmem:[%s286 + $0x1a0] sm:$0xff]
          %v3880 = vld [vmem:[%s286 + $0x1a8] sm:$0xff]
          %v3881 = vld [vmem:[%s286 + $0x1b0] sm:$0xff]
          %v3882 = vld [vmem:[%s286 + $0x1b8] sm:$0xff]
          %v3883 = vld [vmem:[%s286 + $0x1c0] sm:$0xff]
          %v3884 = vld [vmem:[%s286 + $0x1c8] sm:$0xff]
          %v3885 = vld [vmem:[%s286 + $0x1d0] sm:$0xff]
          %v3886 = vld [vmem:[%s286 + $0x1d8] sm:$0xff]
          %v3887 = vld [vmem:[%s286 + $0x1e0] sm:$0xff]
          %v3888 = vld [vmem:[%s286 + $0x1e8] sm:$0xff]
          %v3889 = vld [vmem:[%s286 + $0x1f0] sm:$0xff]
          %v3890 = vld [vmem:[%s286 + $0x1f8] sm:$0xff]
          %v3891 = vld [vmem:[%s258] sm:$0xff]
          %v3892 = vld [vmem:[%s258 + $0x8] sm:$0xff]
          %v3893 = vld [vmem:[%s258 + $0x10] sm:$0xff]
          %v3894 = vld [vmem:[%s258 + $0x18] sm:$0xff]
          %v3895 = vld [vmem:[%s258 + $0x20] sm:$0xff]
          %v3896 = vld [vmem:[%s258 + $0x28] sm:$0xff]
          %v3897 = vld [vmem:[%s258 + $0x30] sm:$0xff]
          %v3898 = vld [vmem:[%s258 + $0x38] sm:$0xff]
          %v3899 = vld [vmem:[%s258 + $0x40] sm:$0xff]
          %v3900 = vld [vmem:[%s258 + $0x48] sm:$0xff]
          %v3901 = vld [vmem:[%s258 + $0x50] sm:$0xff]
          %v3902 = vld [vmem:[%s258 + $0x58] sm:$0xff]
          %v3903 = vld [vmem:[%s258 + $0x60] sm:$0xff]
          %v3904 = vld [vmem:[%s258 + $0x68] sm:$0xff]
          %v3905 = vld [vmem:[%s258 + $0x70] sm:$0xff]
          %v3906 = vld [vmem:[%s258 + $0x78] sm:$0xff]
          %v3907 = vld [vmem:[%s258 + $0x80] sm:$0xff]
          %v3908 = vld [vmem:[%s258 + $0x88] sm:$0xff]
          %v3909 = vld [vmem:[%s258 + $0x90] sm:$0xff]
          %v3910 = vld [vmem:[%s258 + $0x98] sm:$0xff]
          %v3911 = vld [vmem:[%s258 + $0xa0] sm:$0xff]
          %v3912 = vld [vmem:[%s258 + $0xa8] sm:$0xff]
          %v3913 = vld [vmem:[%s258 + $0xb0] sm:$0xff]
          %v3914 = vld [vmem:[%s258 + $0xb8] sm:$0xff]
          %v3915 = vld [vmem:[%s258 + $0xc0] sm:$0xff]
          %v3916 = vld [vmem:[%s258 + $0xc8] sm:$0xff]
          %v3917 = vld [vmem:[%s258 + $0xd0] sm:$0xff]
          %v3918 = vld [vmem:[%s258 + $0xd8] sm:$0xff]
          %v3919 = vld [vmem:[%s258 + $0xe0] sm:$0xff]
          %v3920 = vld [vmem:[%s258 + $0xe8] sm:$0xff]
          %v3921 = vld [vmem:[%s258 + $0xf0] sm:$0xff]
          %v3922 = vld [vmem:[%s258 + $0xf8] sm:$0xff]
          %v3923 = vld [vmem:[%s258 + $0x100] sm:$0xff]
          %v3924 = vld [vmem:[%s258 + $0x108] sm:$0xff]
          %v3925 = vld [vmem:[%s258 + $0x110] sm:$0xff]
          %v3926 = vld [vmem:[%s258 + $0x118] sm:$0xff]
          %v3927 = vld [vmem:[%s258 + $0x120] sm:$0xff]
          %v3928 = vld [vmem:[%s258 + $0x128] sm:$0xff]
          %v3929 = vld [vmem:[%s258 + $0x130] sm:$0xff]
          %v3930 = vld [vmem:[%s258 + $0x138] sm:$0xff]
          %v3931 = vld [vmem:[%s258 + $0x140] sm:$0xff]
          %v3932 = vld [vmem:[%s258 + $0x148] sm:$0xff]
          %v3933 = vld [vmem:[%s258 + $0x150] sm:$0xff]
          %v3934 = vld [vmem:[%s258 + $0x158] sm:$0xff]
          %v3935 = vld [vmem:[%s258 + $0x160] sm:$0xff]
          %v3936 = vld [vmem:[%s258 + $0x168] sm:$0xff]
          %v3937 = vld [vmem:[%s258 + $0x170] sm:$0xff]
          %v3938 = vld [vmem:[%s258 + $0x178] sm:$0xff]
          %v3939 = vld [vmem:[%s258 + $0x180] sm:$0xff]
          %v3940 = vld [vmem:[%s258 + $0x188] sm:$0xff]
          %v3941 = vld [vmem:[%s258 + $0x190] sm:$0xff]
          %v3942 = vld [vmem:[%s258 + $0x198] sm:$0xff]
          %v3943 = vld [vmem:[%s258 + $0x1a0] sm:$0xff]
          %v3944 = vld [vmem:[%s258 + $0x1a8] sm:$0xff]
          %v3945 = vld [vmem:[%s258 + $0x1b0] sm:$0xff]
          %v3946 = vld [vmem:[%s258 + $0x1b8] sm:$0xff]
          %v3947 = vld [vmem:[%s258 + $0x1c0] sm:$0xff]
          %v3948 = vld [vmem:[%s258 + $0x1c8] sm:$0xff]
          %v3949 = vld [vmem:[%s258 + $0x1d0] sm:$0xff]
          %v3950 = vld [vmem:[%s258 + $0x1d8] sm:$0xff]
          %v3951 = vld [vmem:[%s258 + $0x1e0] sm:$0xff]
          %v3952 = vld [vmem:[%s258 + $0x1e8] sm:$0xff]
          %v3953 = vld [vmem:[%s258 + $0x1f0] sm:$0xff]
          %v3954 = vld [vmem:[%s258 + $0x1f8] sm:$0xff]
          %v3955 = vmul.f32 %v3827, %v3891
          %v3956 = vmul.f32 %v3828, %v3892
          %v3957 = vmul.f32 %v3829, %v3893
          %v3958 = vmul.f32 %v3830, %v3894
          %v3959 = vmul.f32 %v3831, %v3895
          %v3960 = vmul.f32 %v3832, %v3896
          %v3961 = vmul.f32 %v3833, %v3897
          %v3962 = vmul.f32 %v3834, %v3898
          %v3963 = vmul.f32 %v3835, %v3899
          %v3964 = vmul.f32 %v3836, %v3900
          %v3965 = vmul.f32 %v3837, %v3901
          %v3966 = vmul.f32 %v3838, %v3902
          %v3967 = vmul.f32 %v3839, %v3903
          %v3968 = vmul.f32 %v3840, %v3904
          %v3969 = vmul.f32 %v3841, %v3905
          %v3970 = vmul.f32 %v3842, %v3906
          %v3971 = vmul.f32 %v3843, %v3907
          %v3972 = vmul.f32 %v3844, %v3908
          %v3973 = vmul.f32 %v3845, %v3909
          %v3974 = vmul.f32 %v3846, %v3910
          %v3975 = vmul.f32 %v3847, %v3911
          %v3976 = vmul.f32 %v3848, %v3912
          %v3977 = vmul.f32 %v3849, %v3913
          %v3978 = vmul.f32 %v3850, %v3914
          %v3979 = vmul.f32 %v3851, %v3915
          %v3980 = vmul.f32 %v3852, %v3916
          %v3981 = vmul.f32 %v3853, %v3917
          %v3982 = vmul.f32 %v3854, %v3918
          %v3983 = vmul.f32 %v3855, %v3919
          %v3984 = vmul.f32 %v3856, %v3920
          %v3985 = vmul.f32 %v3857, %v3921
          %v3986 = vmul.f32 %v3858, %v3922
          %v3987 = vmul.f32 %v3859, %v3923
          %v3988 = vmul.f32 %v3860, %v3924
          %v3989 = vmul.f32 %v3861, %v3925
          %v3990 = vmul.f32 %v3862, %v3926
          %v3991 = vmul.f32 %v3863, %v3927
          %v3992 = vmul.f32 %v3864, %v3928
          %v3993 = vmul.f32 %v3865, %v3929
          %v3994 = vmul.f32 %v3866, %v3930
          %v3995 = vmul.f32 %v3867, %v3931
          %v3996 = vmul.f32 %v3868, %v3932
          %v3997 = vmul.f32 %v3869, %v3933
          %v3998 = vmul.f32 %v3870, %v3934
          %v3999 = vmul.f32 %v3871, %v3935
          %v4000 = vmul.f32 %v3872, %v3936
          %v4001 = vmul.f32 %v3873, %v3937
          %v4002 = vmul.f32 %v3874, %v3938
          %v4003 = vmul.f32 %v3875, %v3939
          %v4004 = vmul.f32 %v3876, %v3940
          %v4005 = vmul.f32 %v3877, %v3941
          %v4006 = vmul.f32 %v3878, %v3942
          %v4007 = vmul.f32 %v3879, %v3943
          %v4008 = vmul.f32 %v3880, %v3944
          %v4009 = vmul.f32 %v3881, %v3945
          %v4010 = vmul.f32 %v3882, %v3946
          %v4011 = vmul.f32 %v3883, %v3947
          %v4012 = vmul.f32 %v3884, %v3948
          %v4013 = vmul.f32 %v3885, %v3949
          %v4014 = vmul.f32 %v3886, %v3950
          %v4015 = vmul.f32 %v3887, %v3951
          %v4016 = vmul.f32 %v3888, %v3952
          %v4017 = vmul.f32 %v3889, %v3953
          %v4018 = vmul.f32 %v3890, %v3954
          %4019 = vst [vmem:[%s286] sm:$0xff] %v3955
          %4020 = vst [vmem:[%s286 + $0x8] sm:$0xff] %v3956
          %4021 = vst [vmem:[%s286 + $0x10] sm:$0xff] %v3957
          %4022 = vst [vmem:[%s286 + $0x18] sm:$0xff] %v3958
          %4023 = vst [vmem:[%s286 + $0x20] sm:$0xff] %v3959
          %4024 = vst [vmem:[%s286 + $0x28] sm:$0xff] %v3960
          %4025 = vst [vmem:[%s286 + $0x30] sm:$0xff] %v3961
          %4026 = vst [vmem:[%s286 + $0x38] sm:$0xff] %v3962
          %4027 = vst [vmem:[%s286 + $0x40] sm:$0xff] %v3963
          %4028 = vst [vmem:[%s286 + $0x48] sm:$0xff] %v3964
          %4029 = vst [vmem:[%s286 + $0x50] sm:$0xff] %v3965
          %4030 = vst [vmem:[%s286 + $0x58] sm:$0xff] %v3966
          %4031 = vst [vmem:[%s286 + $0x60] sm:$0xff] %v3967
          %4032 = vst [vmem:[%s286 + $0x68] sm:$0xff] %v3968
          %4033 = vst [vmem:[%s286 + $0x70] sm:$0xff] %v3969
          %4034 = vst [vmem:[%s286 + $0x78] sm:$0xff] %v3970
          %4035 = vst [vmem:[%s286 + $0x80] sm:$0xff] %v3971
          %4036 = vst [vmem:[%s286 + $0x88] sm:$0xff] %v3972
          %4037 = vst [vmem:[%s286 + $0x90] sm:$0xff] %v3973
          %4038 = vst [vmem:[%s286 + $0x98] sm:$0xff] %v3974
          %4039 = vst [vmem:[%s286 + $0xa0] sm:$0xff] %v3975
          %4040 = vst [vmem:[%s286 + $0xa8] sm:$0xff] %v3976
          %4041 = vst [vmem:[%s286 + $0xb0] sm:$0xff] %v3977
          %4042 = vst [vmem:[%s286 + $0xb8] sm:$0xff] %v3978
          %4043 = vst [vmem:[%s286 + $0xc0] sm:$0xff] %v3979
          %4044 = vst [vmem:[%s286 + $0xc8] sm:$0xff] %v3980
          %4045 = vst [vmem:[%s286 + $0xd0] sm:$0xff] %v3981
          %4046 = vst [vmem:[%s286 + $0xd8] sm:$0xff] %v3982
          %4047 = vst [vmem:[%s286 + $0xe0] sm:$0xff] %v3983
          %4048 = vst [vmem:[%s286 + $0xe8] sm:$0xff] %v3984
          %4049 = vst [vmem:[%s286 + $0xf0] sm:$0xff] %v3985
          %4050 = vst [vmem:[%s286 + $0xf8] sm:$0xff] %v3986
          %4051 = vst [vmem:[%s286 + $0x100] sm:$0xff] %v3987
          %4052 = vst [vmem:[%s286 + $0x108] sm:$0xff] %v3988
          %4053 = vst [vmem:[%s286 + $0x110] sm:$0xff] %v3989
          %4054 = vst [vmem:[%s286 + $0x118] sm:$0xff] %v3990
          %4055 = vst [vmem:[%s286 + $0x120] sm:$0xff] %v3991
          %4056 = vst [vmem:[%s286 + $0x128] sm:$0xff] %v3992
          %4057 = vst [vmem:[%s286 + $0x130] sm:$0xff] %v3993
          %4058 = vst [vmem:[%s286 + $0x138] sm:$0xff] %v3994
          %4059 = vst [vmem:[%s286 + $0x140] sm:$0xff] %v3995
          %4060 = vst [vmem:[%s286 + $0x148] sm:$0xff] %v3996
          %4061 = vst [vmem:[%s286 + $0x150] sm:$0xff] %v3997
          %4062 = vst [vmem:[%s286 + $0x158] sm:$0xff] %v3998
          %4063 = vst [vmem:[%s286 + $0x160] sm:$0xff] %v3999
          %4064 = vst [vmem:[%s286 + $0x168] sm:$0xff] %v4000
          %4065 = vst [vmem:[%s286 + $0x170] sm:$0xff] %v4001
          %4066 = vst [vmem:[%s286 + $0x178] sm:$0xff] %v4002
          %4067 = vst [vmem:[%s286 + $0x180] sm:$0xff] %v4003
          %4068 = vst [vmem:[%s286 + $0x188] sm:$0xff] %v4004
          %4069 = vst [vmem:[%s286 + $0x190] sm:$0xff] %v4005
          %4070 = vst [vmem:[%s286 + $0x198] sm:$0xff] %v4006
          %4071 = vst [vmem:[%s286 + $0x1a0] sm:$0xff] %v4007
          %4072 = vst [vmem:[%s286 + $0x1a8] sm:$0xff] %v4008
          %4073 = vst [vmem:[%s286 + $0x1b0] sm:$0xff] %v4009
          %4074 = vst [vmem:[%s286 + $0x1b8] sm:$0xff] %v4010
          %4075 = vst [vmem:[%s286 + $0x1c0] sm:$0xff] %v4011
          %4076 = vst [vmem:[%s286 + $0x1c8] sm:$0xff] %v4012
          %4077 = vst [vmem:[%s286 + $0x1d0] sm:$0xff] %v4013
          %4078 = vst [vmem:[%s286 + $0x1d8] sm:$0xff] %v4014
          %4079 = vst [vmem:[%s286 + $0x1e0] sm:$0xff] %v4015
          %4080 = vst [vmem:[%s286 + $0x1e8] sm:$0xff] %v4016
          %4081 = vst [vmem:[%s286 + $0x1f0] sm:$0xff] %v4017
          %4082 = vst [vmem:[%s286 + $0x1f8] sm:$0xff] %v4018
        $region52: #{tpu_custom_call.1} parent=31 // pred_fallthru
          _
        %s4083 = sand.u32 %s134, 1
        %s4084 = scalar_lea.sflag [#allocation4], %s4083
        %s4085 = sand.u32 %s134, 1
        %s4086 = smul.addr %s4085, 512
        %s4087 = scalar_lea.vmem [#allocation8], %s4086
        // Predicated region
        $region53: #{tpu_custom_call.1} parent=31 // pred_check
          %p4088 = pneg %p144
        $region54: #{tpu_custom_call.1} parent=31 // pred_check_branch
          %4090 = sbr.rel (%p4088) target = $region56
        $region55: #{tpu_custom_call.1} parent=31 // pred_region
          %s4091 = smul.u32 64, %s26
          %4093 = vsyncadd %s4084, 0
          %s4094 = sadd.s32 %s27, %s4091
          %s4095 = smul.addr %s4094, 8
          %s4096 = scalar_lea.hbm %s3, %s4095
          %s4097 = sshll.u32 %s4087, 4
          %s4098 = int_to_ptr.vmem [resolvable:$true] %s4097
          %s4099 = sshll.u32 %s4096, 4
          %s4100 = int_to_ptr.hbm [resolvable:$true] %s4099
          %4105 = dma.vmem_to_hbm [thread:$0]  %s4098, 8192, %s4100, %s4084, 128, 128, 8
        $region56: #{tpu_custom_call.1} parent=31 // pred_fallthru
          _
      $region32: #{tpu_custom_call.1} parent=5 // pred_fallthru
        _
      %p4106 = scmp.le.s32.totalorder 2, %s16
      // Predicated region
      $region57: #{tpu_custom_call.1} parent=5 // pred_check
        %p4107 = pneg %p4106
      $region58: #{tpu_custom_call.1} parent=5 // pred_check_branch
        %4109 = sbr.rel (%p4107) target = $region60
      $region59: #{tpu_custom_call.1} parent=5 // pred_region
        %s4110 = ssub.s32 %s16, 2
        // Predicated region
        $region61: #{tpu_custom_call.1} parent=59 // pred_check
          %p4111 = pneg %p150
        $region62: #{tpu_custom_call.1} parent=59 // pred_check_branch
          %4113 = sbr.rel (%p4111) target = $region64
        $region63: #{tpu_custom_call.1} parent=59 // pred_region
          %s4114 = sand.u32 %s135, 1
          %s4115 = scalar_lea.sflag [#allocation4], %s4114
          %s4116 = sand.u32 %s135, 1
          %s4117 = smul.addr %s4116, 512
          %s4118 = scalar_lea.vmem [#allocation8], %s4117
          %4120 = dma.done %s4115, 8192
        $region64: #{tpu_custom_call.1} parent=59 // pred_fallthru
          _
      $region60: #{tpu_custom_call.1} parent=5 // pred_fallthru
        _
    $region6: #{tpu_custom_call.1} parent=1 // loop_footer
      %s20 = sadd.s32 1, %s16
    $region7: #{tpu_custom_call.1} parent=1 // loop_footer_branch
      %15 = sbr.rel target = $region3
    $region8: #{tpu_custom_call.1} parent=1 // loop_exit
      _
    %4121 = vsyncpa [#allocation3], 1
    %s4122 = scalar_lea.sflag [#allocation3], 1
    %4123 = vsyncpa %s4122, 1
    %4124 = vsyncpa [#allocation6], 1
    %4125 = vsyncpa [#allocation4], 1
    %s4126 = scalar_lea.sflag [#allocation4], 1
    %4127 = vsyncpa %s4126, 1

</llo_original>
